<compile_context>
chip_gen: v6e
topology: v6e:2x2x1
jax: 0.10.0
libtpu: 0.0.40
codegen_flags: <defaults>
</compile_context>

<pallas_src>
import math
from functools import partial

import jax
import jax.numpy as jnp
from jax.experimental import pallas as pl
from jax.experimental.pallas import tpu as pltpu


# ---------------------------------------------------------------------------
# helpers (traced inside the kernel)
# ---------------------------------------------------------------------------
def _layernorm(x, gamma, beta, eps):
    mu = jnp.mean(x, axis=-1, keepdims=True)
    xc = x - mu
    var = jnp.mean(xc * xc, axis=-1, keepdims=True)
    return xc * jax.lax.rsqrt(var + eps) * gamma + beta


def _gelu_tanh(x):
    # TODO(synk): PyTorch nn.GELU() default is the exact erf GELU; the tanh
    # approximation is used here for a guaranteed Mosaic (EUP tanh) lowering.
    c = 0.7978845608028654  # sqrt(2/pi)
    return 0.5 * x * (1.0 + jnp.tanh(c * (x + 0.044715 * x * x * x)))


# ---------------------------------------------------------------------------
# fused encoder-layer kernel: one grid step per batch tile (Bt*N rows)
# ---------------------------------------------------------------------------
def _encoder_layer_kernel(src_ref, wqkv_ref, wout_ref, w1_ref, w2_ref, vec_ref,
                          out_ref, *, num_heads, seq_len, batch_tile, ln_eps):
    C = src_ref.shape[1]
    CM = w1_ref.shape[1]
    H, N, Bt = num_heads, seq_len, batch_tile
    D = C // H
    scale = 1.0 / math.sqrt(D)
    bf16 = jnp.bfloat16

    # ---- unpack the packed bias / LayerNorm vector (static offsets) ----
    off = 0

    def take(width):
        nonlocal off
        v = vec_ref[:, off:off + width]
        off += width
        return v

    b_qkv = take(3 * C)
    b_out = take(C)
    g1, bt1 = take(C), take(C)
    b_fc1 = take(CM)
    b_fc2 = take(C)
    g2, bt2 = take(C), take(C)

    x = src_ref[...].astype(jnp.float32)                      # (Bt*N, C)

    # ---- fused QKV projection over folded rows (bf16 MXU, f32 accumulate) --
    qkv = jnp.dot(x.astype(bf16), wqkv_ref[...],
                  preferred_element_type=jnp.float32) + b_qkv  # (Bt*N, 3C)

    # ---- multi-head attention: heads split along sublanes (no lane slices) --
    attn_rows = []
    for b in range(Bt):                                        # static unroll
        qkv_b = qkv[b * N:(b + 1) * N, :]                      # (N, 3C) row slice
        qkvT = qkv_b.T                                         # (3C, N) 2-D transpose
        heads_T = []
        for h in range(H):                                     # static unroll
            lo = h * D
            qT = qkvT[lo:lo + D, :]                            # (D, N) sublane slice
            kT = qkvT[C + lo:C + lo + D, :]
            vT = qkvT[2 * C + lo:2 * C + lo + D, :]
            qh = qT.T.astype(bf16)                             # (N, D)
            logits = jnp.dot(qh, kT.astype(bf16),
                             preferred_element_type=jnp.float32) * scale  # (N, N)
            logits = logits - jnp.max(logits, axis=-1, keepdims=True)
            e = jnp.exp(logits)
            p = e / jnp.sum(e, axis=-1, keepdims=True)         # exact softmax
            # o^T[d, i] = sum_j v^T[d, j] * p[i, j]  (contract last dims)
            ohT = jax.lax.dot_general(vT.astype(bf16), p.astype(bf16),
                                      (((1,), (1,)), ((), ())),
                                      preferred_element_type=jnp.float32)  # (D, N)
            heads_T.append(ohT)
        oT = jnp.concatenate(heads_T, axis=0)                  # (C, N) sublane concat
        attn_rows.append(oT.T)                                 # (N, C)
    attn = jnp.concatenate(attn_rows, axis=0)                  # (Bt*N, C)

    # ---- output projection (full width) + residual + LayerNorm1 ----
    y = jnp.dot(attn.astype(bf16), wout_ref[...],
                preferred_element_type=jnp.float32) + b_out
    x1 = _layernorm(x + y, g1, bt1, ln_eps)

    # ---- MLP: fc1 -> GELU -> fc2, residual + LayerNorm2 ----
    h1 = jnp.dot(x1.astype(bf16), w1_ref[...],
                 preferred_element_type=jnp.float32) + b_fc1
    h1 = _gelu_tanh(h1)
    y2 = jnp.dot(h1.astype(bf16), w2_ref[...],
                 preferred_element_type=jnp.float32) + b_fc2
    out = _layernorm(x1 + y2, g2, bt2, ln_eps)

    out_ref[...] = out.astype(out_ref.dtype)


# ---------------------------------------------------------------------------
# wrapper
# ---------------------------------------------------------------------------
def transformer_encoder_layer(src, params, *, num_heads=8, ln_eps=1e-5,
                              max_rows_per_step=512):
    B, N, C = src.shape
    CM = params["w_fc1"].shape[0]
    assert C % num_heads == 0

    # Fold as many batch elements per grid step as fits the row target
    # (amortises per-step overhead / fills MXU rows).  For B=1 at production
    # sequence lengths, grid=(1,); add a row-tile axis there if v7x megacore
    # sharding is needed.
    bt = 1
    for cand in range(B, 0, -1):
        if B % cand == 0 and cand * N <= max_rows_per_step:
            bt = cand
            break
    rows = bt * N
    grid = (B // bt,)

    bf16 = jnp.bfloat16
    # Static weight prep: pre-transpose + cast to bf16 once, outside the kernel.
    wqkv_t = params["w_qkv"].T.astype(bf16)          # (C, 3C)
    wout_t = params["w_out"].T.astype(bf16)          # (C, C)
    w1_t = params["w_fc1"].T.astype(bf16)            # (C, CM)
    w2_t = params["w_fc2"].T.astype(bf16)            # (CM, C)
    # Pack all bias / LayerNorm vectors into one operand (one DMA, one tile).
    vec = jnp.concatenate([
        params["b_qkv"], params["b_out"],
        params["ln1_g"], params["ln1_b"],
        params["b_fc1"], params["b_fc2"],
        params["ln2_g"], params["ln2_b"],
    ]).astype(jnp.float32).reshape(1, -1)            # (1, 9C + CM)

    src2d = src.reshape(B * N, C)                    # lane-dense 2-D I/O slab

    kernel = partial(_encoder_layer_kernel, num_heads=num_heads, seq_len=N,
                     batch_tile=bt, ln_eps=ln_eps)

    def resident(shape):
        return pl.BlockSpec(shape, lambda i, _n=len(shape): (0,) * _n)

    out2d = pl.pallas_call(
        kernel,
        grid=grid,
        in_specs=(
            pl.BlockSpec((rows, C), lambda i: (i, 0)),   # src rows (per batch tile)
            resident((C, 3 * C)),                        # wqkv_t   (resident)
            resident((C, C)),                            # wout_t
            resident((C, CM)),                           # w_fc1_t
            resident((CM, C)),                           # w_fc2_t
            resident((1, 9 * C + CM)),                   # packed biases / LN params
        ),
        out_specs=pl.BlockSpec((rows, C), lambda i: (i, 0)),
        out_shape=jax.ShapeDtypeStruct((B * N, C), src.dtype),
        compiler_params=pltpu.CompilerParams(
            dimension_semantics=("parallel",),           # megacore on v7x
            vmem_limit_bytes=32 * 1024 * 1024),
    )(src2d, wqkv_t, wout_t, w1_t, w2_t, vec)
    return out2d.reshape(B, N, C)


# ---------------------------------------------------------------------------
# pure-JAX reference (correctness check)
# ---------------------------------------------------------------------------
def _ln_ref(x, g, b, eps):
    mu = jnp.mean(x, axis=-1, keepdims=True)
    var = jnp.mean((x - mu) ** 2, axis=-1, keepdims=True)
    return (x - mu) * jax.lax.rsqrt(var + eps) * g + b


def _reference(src, params, num_heads, ln_eps=1e-5):
    B, N, C = src.shape
    D = C // num_heads
    qkv = src @ params["w_qkv"].T + params["b_qkv"]            # (B, N, 3C)
    q, k, v = jnp.split(qkv, 3, axis=-1)
    to_h = lambda t: t.reshape(B, N, num_heads, D).transpose(0, 2, 1, 3)
    q, k, v = to_h(q), to_h(k), to_h(v)
    attn = jax.nn.softmax((q @ jnp.swapaxes(k, -2, -1)) / math.sqrt(D), axis=-1)
    o = (attn @ v).transpose(0, 2, 1, 3).reshape(B, N, C)
    o = o @ params["w_out"].T + params["b_out"]
    x = _ln_ref(src + o, params["ln1_g"], params["ln1_b"], ln_eps)
    h = jax.nn.gelu(x @ params["w_fc1"].T + params["b_fc1"], approximate=True)
    y = h @ params["w_fc2"].T + params["b_fc2"]
    return _ln_ref(x + y, params["ln2_g"], params["ln2_b"], ln_eps)


if __name__ == "__main__":
    # Small, lane-friendly shapes consistent with the module:
    # c1=C=128, num_heads=8 (module default), cm=CM=256, seq N=16, batch B=2.
    B, N, C, H, CM = 2, 16, 128, 8, 256
    keys = jax.random.split(jax.random.PRNGKey(0), 14)
    rnd = lambda k, shape, s=0.05: jax.random.normal(k, shape, jnp.float32) * s
    params = {
        "w_qkv": rnd(keys[0], (3 * C, C)),
        "b_qkv": rnd(keys[1], (3 * C,)),
        "w_out": rnd(keys[2], (C, C)),
        "b_out": rnd(keys[3], (C,)),
        "ln1_g": 1.0 + rnd(keys[4], (C,)),
        "ln1_b": rnd(keys[5], (C,)),
        "w_fc1": rnd(keys[6], (CM, C)),
        "b_fc1": rnd(keys[7], (CM,)),
        "w_fc2": rnd(keys[8], (C, CM)),
        "b_fc2": rnd(keys[9], (C,)),
        "ln2_g": 1.0 + rnd(keys[10], (C,)),
        "ln2_b": rnd(keys[11], (C,)),
    }
    src = jax.random.normal(keys[12], (B, N, C), dtype=jnp.float32)

    out = transformer_encoder_layer(src, params, num_heads=H)
    jax.block_until_ready(out)

    ref = _reference(src, params, H)
    assert out.shape == (B, N, C)
    # bf16 MXU operands (f32 accumulation) => relax tolerance vs f32 reference.
    assert jnp.allclose(out, ref, atol=2e-2, rtol=2e-2), \
        float(jnp.max(jnp.abs(out - ref)))

    print("KERNEL_OK")
</pallas_src>

<mosaic_0001>
module attributes {stable_mosaic.version = 11 : i64} {
  func.func @_encoder_layer_kernel(%arg0: i32, %arg1: memref<32x128xf32, #tpu.memory_space<vmem>>, %arg2: memref<128x384xbf16, #tpu.memory_space<vmem>>, %arg3: memref<128x128xbf16, #tpu.memory_space<vmem>>, %arg4: memref<128x256xbf16, #tpu.memory_space<vmem>>, %arg5: memref<256x128xbf16, #tpu.memory_space<vmem>>, %arg6: memref<1x1408xf32, #tpu.memory_space<vmem>>, %arg7: memref<32x128xf32, #tpu.memory_space<vmem>>) attributes {dimension_semantics = [#tpu.dimension_semantics<parallel>], iteration_bounds = array<i64: 1>, scalar_prefetch = 0 : i64, scratch_operands = 0 : i64, tpu.core_type = #tpu.core_type<tc>, window_params = [{transform_indices = @transform_0, window_bounds = array<i64: 32, 128>}, {pipeline_mode = #tpu.pipeline_mode<synchronous>, transform_indices = @transform_1, window_bounds = array<i64: 128, 384>}, {pipeline_mode = #tpu.pipeline_mode<synchronous>, transform_indices = @transform_2, window_bounds = array<i64: 128, 128>}, {pipeline_mode = #tpu.pipeline_mode<synchronous>, transform_indices = @transform_3, window_bounds = array<i64: 128, 256>}, {pipeline_mode = #tpu.pipeline_mode<synchronous>, transform_indices = @transform_4, window_bounds = array<i64: 256, 128>}, {pipeline_mode = #tpu.pipeline_mode<synchronous>, transform_indices = @transform_5, window_bounds = array<i64: 1, 1408>}, {transform_indices = @transform_6, window_bounds = array<i64: 32, 128>}]} {
    %c0 = arith.constant 0 : index
    %c0_0 = arith.constant 0 : index
    %0 = vector.load %arg6[%c0, %c0_0] : memref<1x1408xf32, #tpu.memory_space<vmem>>, vector<1x384xf32>
    %c0_1 = arith.constant 0 : index
    %c384 = arith.constant 384 : index
    %1 = vector.load %arg6[%c0_1, %c384] : memref<1x1408xf32, #tpu.memory_space<vmem>>, vector<1x128xf32>
    %c0_2 = arith.constant 0 : index
    %c512 = arith.constant 512 : index
    %2 = vector.load %arg6[%c0_2, %c512] : memref<1x1408xf32, #tpu.memory_space<vmem>>, vector<1x128xf32>
    %c0_3 = arith.constant 0 : index
    %c640 = arith.constant 640 : index
    %3 = vector.load %arg6[%c0_3, %c640] : memref<1x1408xf32, #tpu.memory_space<vmem>>, vector<1x128xf32>
    %c0_4 = arith.constant 0 : index
    %c768 = arith.constant 768 : index
    %4 = vector.load %arg6[%c0_4, %c768] : memref<1x1408xf32, #tpu.memory_space<vmem>>, vector<1x256xf32>
    %c0_5 = arith.constant 0 : index
    %c1024 = arith.constant 1024 : index
    %5 = vector.load %arg6[%c0_5, %c1024] : memref<1x1408xf32, #tpu.memory_space<vmem>>, vector<1x128xf32>
    %c0_6 = arith.constant 0 : index
    %c1152 = arith.constant 1152 : index
    %6 = vector.load %arg6[%c0_6, %c1152] : memref<1x1408xf32, #tpu.memory_space<vmem>>, vector<1x128xf32>
    %c0_7 = arith.constant 0 : index
    %c1280 = arith.constant 1280 : index
    %7 = vector.load %arg6[%c0_7, %c1280] : memref<1x1408xf32, #tpu.memory_space<vmem>>, vector<1x128xf32>
    %c0_8 = arith.constant 0 : index
    %c0_9 = arith.constant 0 : index
    %8 = vector.load %arg1[%c0_8, %c0_9] : memref<32x128xf32, #tpu.memory_space<vmem>>, vector<32x128xf32>
    %9 = arith.truncf %8 : vector<32x128xf32> to vector<32x128xbf16>
    %c0_10 = arith.constant 0 : index
    %c0_11 = arith.constant 0 : index
    %10 = vector.load %arg2[%c0_10, %c0_11] : memref<128x384xbf16, #tpu.memory_space<vmem>>, vector<128x384xbf16>
    %cst = arith.constant dense<0.000000e+00> : vector<32x384xf32>
    %11 = tpu.matmul %9, %10, %cst {dimension_numbers = #tpu.dot_dimension_numbers<[1], [0], [0], [1], [0, 0, 1, 1], [], []>} : vector<32x128xbf16>, vector<128x384xbf16>, vector<32x384xf32> -> vector<32x384xf32>
    %12 = vector.broadcast %0 : vector<1x384xf32> to vector<32x384xf32>
    %13 = arith.addf %11, %12 : vector<32x384xf32>
    %14 = vector.extract_strided_slice %13 {offsets = [0, 0], sizes = [16, 384], strides = [1, 1]} : vector<32x384xf32> to vector<16x384xf32>
    %15 = tpu.transpose %14, [1, 0] : vector<16x384xf32> -> vector<384x16xf32>
    %16 = vector.extract_strided_slice %15 {offsets = [0, 0], sizes = [16, 16], strides = [1, 1]} : vector<384x16xf32> to vector<16x16xf32>
    %17 = vector.extract_strided_slice %15 {offsets = [128, 0], sizes = [16, 16], strides = [1, 1]} : vector<384x16xf32> to vector<16x16xf32>
    %18 = vector.extract_strided_slice %15 {offsets = [256, 0], sizes = [16, 16], strides = [1, 1]} : vector<384x16xf32> to vector<16x16xf32>
    %19 = tpu.transpose %16, [1, 0] : vector<16x16xf32> -> vector<16x16xf32>
    %20 = arith.truncf %19 : vector<16x16xf32> to vector<16x16xbf16>
    %21 = arith.truncf %17 : vector<16x16xf32> to vector<16x16xbf16>
    %cst_12 = arith.constant dense<0.000000e+00> : vector<16x16xf32>
    %22 = tpu.matmul %20, %21, %cst_12 {dimension_numbers = #tpu.dot_dimension_numbers<[1], [0], [0], [1], [0, 0, 1, 1], [], []>} : vector<16x16xbf16>, vector<16x16xbf16>, vector<16x16xf32> -> vector<16x16xf32>
    %cst_13 = arith.constant 2.500000e-01 : f32
    %23 = vector.broadcast %cst_13 : f32 to vector<16x16xf32>
    %24 = arith.mulf %22, %23 : vector<16x16xf32>
    %cst_14 = arith.constant dense<0xFF800000> : vector<16xf32>
    %25 = vector.multi_reduction <maximumf>, %24, %cst_14 [1] : vector<16x16xf32> to vector<16xf32>
    %26 = vector.shape_cast %25 : vector<16xf32> to vector<16x1xf32>
    %27 = vector.broadcast %26 : vector<16x1xf32> to vector<16x16xf32>
    %28 = arith.subf %24, %27 : vector<16x16xf32>
    %29 = math.exp %28 : vector<16x16xf32>
    %cst_15 = arith.constant dense<0.000000e+00> : vector<16xf32>
    %30 = vector.multi_reduction <add>, %29, %cst_15 [1] : vector<16x16xf32> to vector<16xf32>
    %31 = vector.shape_cast %30 : vector<16xf32> to vector<16x1xf32>
    %32 = vector.broadcast %31 : vector<16x1xf32> to vector<16x16xf32>
    %33 = arith.divf %29, %32 : vector<16x16xf32>
    %34 = arith.truncf %18 : vector<16x16xf32> to vector<16x16xbf16>
    %35 = arith.truncf %33 : vector<16x16xf32> to vector<16x16xbf16>
    %cst_16 = arith.constant dense<0.000000e+00> : vector<16x16xf32>
    %36 = tpu.matmul %34, %35, %cst_16 {dimension_numbers = #tpu.dot_dimension_numbers<[1], [1], [0], [0], [0, 0, 1, 0], [], []>} : vector<16x16xbf16>, vector<16x16xbf16>, vector<16x16xf32> -> vector<16x16xf32>
    %37 = vector.extract_strided_slice %15 {offsets = [16, 0], sizes = [16, 16], strides = [1, 1]} : vector<384x16xf32> to vector<16x16xf32>
    %38 = vector.extract_strided_slice %15 {offsets = [144, 0], sizes = [16, 16], strides = [1, 1]} : vector<384x16xf32> to vector<16x16xf32>
    %39 = vector.extract_strided_slice %15 {offsets = [272, 0], sizes = [16, 16], strides = [1, 1]} : vector<384x16xf32> to vector<16x16xf32>
    %40 = tpu.transpose %37, [1, 0] : vector<16x16xf32> -> vector<16x16xf32>
    %41 = arith.truncf %40 : vector<16x16xf32> to vector<16x16xbf16>
    %42 = arith.truncf %38 : vector<16x16xf32> to vector<16x16xbf16>
    %cst_17 = arith.constant dense<0.000000e+00> : vector<16x16xf32>
    %43 = tpu.matmul %41, %42, %cst_17 {dimension_numbers = #tpu.dot_dimension_numbers<[1], [0], [0], [1], [0, 0, 1, 1], [], []>} : vector<16x16xbf16>, vector<16x16xbf16>, vector<16x16xf32> -> vector<16x16xf32>
    %cst_18 = arith.constant 2.500000e-01 : f32
    %44 = vector.broadcast %cst_18 : f32 to vector<16x16xf32>
    %45 = arith.mulf %43, %44 : vector<16x16xf32>
    %cst_19 = arith.constant dense<0xFF800000> : vector<16xf32>
    %46 = vector.multi_reduction <maximumf>, %45, %cst_19 [1] : vector<16x16xf32> to vector<16xf32>
    %47 = vector.shape_cast %46 : vector<16xf32> to vector<16x1xf32>
    %48 = vector.broadcast %47 : vector<16x1xf32> to vector<16x16xf32>
    %49 = arith.subf %45, %48 : vector<16x16xf32>
    %50 = math.exp %49 : vector<16x16xf32>
    %cst_20 = arith.constant dense<0.000000e+00> : vector<16xf32>
    %51 = vector.multi_reduction <add>, %50, %cst_20 [1] : vector<16x16xf32> to vector<16xf32>
    %52 = vector.shape_cast %51 : vector<16xf32> to vector<16x1xf32>
    %53 = vector.broadcast %52 : vector<16x1xf32> to vector<16x16xf32>
    %54 = arith.divf %50, %53 : vector<16x16xf32>
    %55 = arith.truncf %39 : vector<16x16xf32> to vector<16x16xbf16>
    %56 = arith.truncf %54 : vector<16x16xf32> to vector<16x16xbf16>
    %cst_21 = arith.constant dense<0.000000e+00> : vector<16x16xf32>
    %57 = tpu.matmul %55, %56, %cst_21 {dimension_numbers = #tpu.dot_dimension_numbers<[1], [1], [0], [0], [0, 0, 1, 0], [], []>} : vector<16x16xbf16>, vector<16x16xbf16>, vector<16x16xf32> -> vector<16x16xf32>
    %58 = vector.extract_strided_slice %15 {offsets = [32, 0], sizes = [16, 16], strides = [1, 1]} : vector<384x16xf32> to vector<16x16xf32>
    %59 = vector.extract_strided_slice %15 {offsets = [160, 0], sizes = [16, 16], strides = [1, 1]} : vector<384x16xf32> to vector<16x16xf32>
    %60 = vector.extract_strided_slice %15 {offsets = [288, 0], sizes = [16, 16], strides = [1, 1]} : vector<384x16xf32> to vector<16x16xf32>
    %61 = tpu.transpose %58, [1, 0] : vector<16x16xf32> -> vector<16x16xf32>
    %62 = arith.truncf %61 : vector<16x16xf32> to vector<16x16xbf16>
    %63 = arith.truncf %59 : vector<16x16xf32> to vector<16x16xbf16>
    %cst_22 = arith.constant dense<0.000000e+00> : vector<16x16xf32>
    %64 = tpu.matmul %62, %63, %cst_22 {dimension_numbers = #tpu.dot_dimension_numbers<[1], [0], [0], [1], [0, 0, 1, 1], [], []>} : vector<16x16xbf16>, vector<16x16xbf16>, vector<16x16xf32> -> vector<16x16xf32>
    %cst_23 = arith.constant 2.500000e-01 : f32
    %65 = vector.broadcast %cst_23 : f32 to vector<16x16xf32>
    %66 = arith.mulf %64, %65 : vector<16x16xf32>
    %cst_24 = arith.constant dense<0xFF800000> : vector<16xf32>
    %67 = vector.multi_reduction <maximumf>, %66, %cst_24 [1] : vector<16x16xf32> to vector<16xf32>
    %68 = vector.shape_cast %67 : vector<16xf32> to vector<16x1xf32>
    %69 = vector.broadcast %68 : vector<16x1xf32> to vector<16x16xf32>
    %70 = arith.subf %66, %69 : vector<16x16xf32>
    %71 = math.exp %70 : vector<16x16xf32>
    %cst_25 = arith.constant dense<0.000000e+00> : vector<16xf32>
    %72 = vector.multi_reduction <add>, %71, %cst_25 [1] : vector<16x16xf32> to vector<16xf32>
    %73 = vector.shape_cast %72 : vector<16xf32> to vector<16x1xf32>
    %74 = vector.broadcast %73 : vector<16x1xf32> to vector<16x16xf32>
    %75 = arith.divf %71, %74 : vector<16x16xf32>
    %76 = arith.truncf %60 : vector<16x16xf32> to vector<16x16xbf16>
    %77 = arith.truncf %75 : vector<16x16xf32> to vector<16x16xbf16>
    %cst_26 = arith.constant dense<0.000000e+00> : vector<16x16xf32>
    %78 = tpu.matmul %76, %77, %cst_26 {dimension_numbers = #tpu.dot_dimension_numbers<[1], [1], [0], [0], [0, 0, 1, 0], [], []>} : vector<16x16xbf16>, vector<16x16xbf16>, vector<16x16xf32> -> vector<16x16xf32>
    %79 = vector.extract_strided_slice %15 {offsets = [48, 0], sizes = [16, 16], strides = [1, 1]} : vector<384x16xf32> to vector<16x16xf32>
    %80 = vector.extract_strided_slice %15 {offsets = [176, 0], sizes = [16, 16], strides = [1, 1]} : vector<384x16xf32> to vector<16x16xf32>
    %81 = vector.extract_strided_slice %15 {offsets = [304, 0], sizes = [16, 16], strides = [1, 1]} : vector<384x16xf32> to vector<16x16xf32>
    %82 = tpu.transpose %79, [1, 0] : vector<16x16xf32> -> vector<16x16xf32>
    %83 = arith.truncf %82 : vector<16x16xf32> to vector<16x16xbf16>
    %84 = arith.truncf %80 : vector<16x16xf32> to vector<16x16xbf16>
    %cst_27 = arith.constant dense<0.000000e+00> : vector<16x16xf32>
    %85 = tpu.matmul %83, %84, %cst_27 {dimension_numbers = #tpu.dot_dimension_numbers<[1], [0], [0], [1], [0, 0, 1, 1], [], []>} : vector<16x16xbf16>, vector<16x16xbf16>, vector<16x16xf32> -> vector<16x16xf32>
    %cst_28 = arith.constant 2.500000e-01 : f32
    %86 = vector.broadcast %cst_28 : f32 to vector<16x16xf32>
    %87 = arith.mulf %85, %86 : vector<16x16xf32>
    %cst_29 = arith.constant dense<0xFF800000> : vector<16xf32>
    %88 = vector.multi_reduction <maximumf>, %87, %cst_29 [1] : vector<16x16xf32> to vector<16xf32>
    %89 = vector.shape_cast %88 : vector<16xf32> to vector<16x1xf32>
    %90 = vector.broadcast %89 : vector<16x1xf32> to vector<16x16xf32>
    %91 = arith.subf %87, %90 : vector<16x16xf32>
    %92 = math.exp %91 : vector<16x16xf32>
    %cst_30 = arith.constant dense<0.000000e+00> : vector<16xf32>
    %93 = vector.multi_reduction <add>, %92, %cst_30 [1] : vector<16x16xf32> to vector<16xf32>
    %94 = vector.shape_cast %93 : vector<16xf32> to vector<16x1xf32>
    %95 = vector.broadcast %94 : vector<16x1xf32> to vector<16x16xf32>
    %96 = arith.divf %92, %95 : vector<16x16xf32>
    %97 = arith.truncf %81 : vector<16x16xf32> to vector<16x16xbf16>
    %98 = arith.truncf %96 : vector<16x16xf32> to vector<16x16xbf16>
    %cst_31 = arith.constant dense<0.000000e+00> : vector<16x16xf32>
    %99 = tpu.matmul %97, %98, %cst_31 {dimension_numbers = #tpu.dot_dimension_numbers<[1], [1], [0], [0], [0, 0, 1, 0], [], []>} : vector<16x16xbf16>, vector<16x16xbf16>, vector<16x16xf32> -> vector<16x16xf32>
    %100 = vector.extract_strided_slice %15 {offsets = [64, 0], sizes = [16, 16], strides = [1, 1]} : vector<384x16xf32> to vector<16x16xf32>
    %101 = vector.extract_strided_slice %15 {offsets = [192, 0], sizes = [16, 16], strides = [1, 1]} : vector<384x16xf32> to vector<16x16xf32>
    %102 = vector.extract_strided_slice %15 {offsets = [320, 0], sizes = [16, 16], strides = [1, 1]} : vector<384x16xf32> to vector<16x16xf32>
    %103 = tpu.transpose %100, [1, 0] : vector<16x16xf32> -> vector<16x16xf32>
    %104 = arith.truncf %103 : vector<16x16xf32> to vector<16x16xbf16>
    %105 = arith.truncf %101 : vector<16x16xf32> to vector<16x16xbf16>
    %cst_32 = arith.constant dense<0.000000e+00> : vector<16x16xf32>
    %106 = tpu.matmul %104, %105, %cst_32 {dimension_numbers = #tpu.dot_dimension_numbers<[1], [0], [0], [1], [0, 0, 1, 1], [], []>} : vector<16x16xbf16>, vector<16x16xbf16>, vector<16x16xf32> -> vector<16x16xf32>
    %cst_33 = arith.constant 2.500000e-01 : f32
    %107 = vector.broadcast %cst_33 : f32 to vector<16x16xf32>
    %108 = arith.mulf %106, %107 : vector<16x16xf32>
    %cst_34 = arith.constant dense<0xFF800000> : vector<16xf32>
    %109 = vector.multi_reduction <maximumf>, %108, %cst_34 [1] : vector<16x16xf32> to vector<16xf32>
    %110 = vector.shape_cast %109 : vector<16xf32> to vector<16x1xf32>
    %111 = vector.broadcast %110 : vector<16x1xf32> to vector<16x16xf32>
    %112 = arith.subf %108, %111 : vector<16x16xf32>
    %113 = math.exp %112 : vector<16x16xf32>
    %cst_35 = arith.constant dense<0.000000e+00> : vector<16xf32>
    %114 = vector.multi_reduction <add>, %113, %cst_35 [1] : vector<16x16xf32> to vector<16xf32>
    %115 = vector.shape_cast %114 : vector<16xf32> to vector<16x1xf32>
    %116 = vector.broadcast %115 : vector<16x1xf32> to vector<16x16xf32>
    %117 = arith.divf %113, %116 : vector<16x16xf32>
    %118 = arith.truncf %102 : vector<16x16xf32> to vector<16x16xbf16>
    %119 = arith.truncf %117 : vector<16x16xf32> to vector<16x16xbf16>
    %cst_36 = arith.constant dense<0.000000e+00> : vector<16x16xf32>
    %120 = tpu.matmul %118, %119, %cst_36 {dimension_numbers = #tpu.dot_dimension_numbers<[1], [1], [0], [0], [0, 0, 1, 0], [], []>} : vector<16x16xbf16>, vector<16x16xbf16>, vector<16x16xf32> -> vector<16x16xf32>
    %121 = vector.extract_strided_slice %15 {offsets = [80, 0], sizes = [16, 16], strides = [1, 1]} : vector<384x16xf32> to vector<16x16xf32>
    %122 = vector.extract_strided_slice %15 {offsets = [208, 0], sizes = [16, 16], strides = [1, 1]} : vector<384x16xf32> to vector<16x16xf32>
    %123 = vector.extract_strided_slice %15 {offsets = [336, 0], sizes = [16, 16], strides = [1, 1]} : vector<384x16xf32> to vector<16x16xf32>
    %124 = tpu.transpose %121, [1, 0] : vector<16x16xf32> -> vector<16x16xf32>
    %125 = arith.truncf %124 : vector<16x16xf32> to vector<16x16xbf16>
    %126 = arith.truncf %122 : vector<16x16xf32> to vector<16x16xbf16>
    %cst_37 = arith.constant dense<0.000000e+00> : vector<16x16xf32>
    %127 = tpu.matmul %125, %126, %cst_37 {dimension_numbers = #tpu.dot_dimension_numbers<[1], [0], [0], [1], [0, 0, 1, 1], [], []>} : vector<16x16xbf16>, vector<16x16xbf16>, vector<16x16xf32> -> vector<16x16xf32>
    %cst_38 = arith.constant 2.500000e-01 : f32
    %128 = vector.broadcast %cst_38 : f32 to vector<16x16xf32>
    %129 = arith.mulf %127, %128 : vector<16x16xf32>
    %cst_39 = arith.constant dense<0xFF800000> : vector<16xf32>
    %130 = vector.multi_reduction <maximumf>, %129, %cst_39 [1] : vector<16x16xf32> to vector<16xf32>
    %131 = vector.shape_cast %130 : vector<16xf32> to vector<16x1xf32>
    %132 = vector.broadcast %131 : vector<16x1xf32> to vector<16x16xf32>
    %133 = arith.subf %129, %132 : vector<16x16xf32>
    %134 = math.exp %133 : vector<16x16xf32>
    %cst_40 = arith.constant dense<0.000000e+00> : vector<16xf32>
    %135 = vector.multi_reduction <add>, %134, %cst_40 [1] : vector<16x16xf32> to vector<16xf32>
    %136 = vector.shape_cast %135 : vector<16xf32> to vector<16x1xf32>
    %137 = vector.broadcast %136 : vector<16x1xf32> to vector<16x16xf32>
    %138 = arith.divf %134, %137 : vector<16x16xf32>
    %139 = arith.truncf %123 : vector<16x16xf32> to vector<16x16xbf16>
    %140 = arith.truncf %138 : vector<16x16xf32> to vector<16x16xbf16>
    %cst_41 = arith.constant dense<0.000000e+00> : vector<16x16xf32>
    %141 = tpu.matmul %139, %140, %cst_41 {dimension_numbers = #tpu.dot_dimension_numbers<[1], [1], [0], [0], [0, 0, 1, 0], [], []>} : vector<16x16xbf16>, vector<16x16xbf16>, vector<16x16xf32> -> vector<16x16xf32>
    %142 = vector.extract_strided_slice %15 {offsets = [96, 0], sizes = [16, 16], strides = [1, 1]} : vector<384x16xf32> to vector<16x16xf32>
    %143 = vector.extract_strided_slice %15 {offsets = [224, 0], sizes = [16, 16], strides = [1, 1]} : vector<384x16xf32> to vector<16x16xf32>
    %144 = vector.extract_strided_slice %15 {offsets = [352, 0], sizes = [16, 16], strides = [1, 1]} : vector<384x16xf32> to vector<16x16xf32>
    %145 = tpu.transpose %142, [1, 0] : vector<16x16xf32> -> vector<16x16xf32>
    %146 = arith.truncf %145 : vector<16x16xf32> to vector<16x16xbf16>
    %147 = arith.truncf %143 : vector<16x16xf32> to vector<16x16xbf16>
    %cst_42 = arith.constant dense<0.000000e+00> : vector<16x16xf32>
    %148 = tpu.matmul %146, %147, %cst_42 {dimension_numbers = #tpu.dot_dimension_numbers<[1], [0], [0], [1], [0, 0, 1, 1], [], []>} : vector<16x16xbf16>, vector<16x16xbf16>, vector<16x16xf32> -> vector<16x16xf32>
    %cst_43 = arith.constant 2.500000e-01 : f32
    %149 = vector.broadcast %cst_43 : f32 to vector<16x16xf32>
    %150 = arith.mulf %148, %149 : vector<16x16xf32>
    %cst_44 = arith.constant dense<0xFF800000> : vector<16xf32>
    %151 = vector.multi_reduction <maximumf>, %150, %cst_44 [1] : vector<16x16xf32> to vector<16xf32>
    %152 = vector.shape_cast %151 : vector<16xf32> to vector<16x1xf32>
    %153 = vector.broadcast %152 : vector<16x1xf32> to vector<16x16xf32>
    %154 = arith.subf %150, %153 : vector<16x16xf32>
    %155 = math.exp %154 : vector<16x16xf32>
    %cst_45 = arith.constant dense<0.000000e+00> : vector<16xf32>
    %156 = vector.multi_reduction <add>, %155, %cst_45 [1] : vector<16x16xf32> to vector<16xf32>
    %157 = vector.shape_cast %156 : vector<16xf32> to vector<16x1xf32>
    %158 = vector.broadcast %157 : vector<16x1xf32> to vector<16x16xf32>
    %159 = arith.divf %155, %158 : vector<16x16xf32>
    %160 = arith.truncf %144 : vector<16x16xf32> to vector<16x16xbf16>
    %161 = arith.truncf %159 : vector<16x16xf32> to vector<16x16xbf16>
    %cst_46 = arith.constant dense<0.000000e+00> : vector<16x16xf32>
    %162 = tpu.matmul %160, %161, %cst_46 {dimension_numbers = #tpu.dot_dimension_numbers<[1], [1], [0], [0], [0, 0, 1, 0], [], []>} : vector<16x16xbf16>, vector<16x16xbf16>, vector<16x16xf32> -> vector<16x16xf32>
    %163 = vector.extract_strided_slice %15 {offsets = [112, 0], sizes = [16, 16], strides = [1, 1]} : vector<384x16xf32> to vector<16x16xf32>
    %164 = vector.extract_strided_slice %15 {offsets = [240, 0], sizes = [16, 16], strides = [1, 1]} : vector<384x16xf32> to vector<16x16xf32>
    %165 = vector.extract_strided_slice %15 {offsets = [368, 0], sizes = [16, 16], strides = [1, 1]} : vector<384x16xf32> to vector<16x16xf32>
    %166 = tpu.transpose %163, [1, 0] : vector<16x16xf32> -> vector<16x16xf32>
    %167 = arith.truncf %166 : vector<16x16xf32> to vector<16x16xbf16>
    %168 = arith.truncf %164 : vector<16x16xf32> to vector<16x16xbf16>
    %cst_47 = arith.constant dense<0.000000e+00> : vector<16x16xf32>
    %169 = tpu.matmul %167, %168, %cst_47 {dimension_numbers = #tpu.dot_dimension_numbers<[1], [0], [0], [1], [0, 0, 1, 1], [], []>} : vector<16x16xbf16>, vector<16x16xbf16>, vector<16x16xf32> -> vector<16x16xf32>
    %cst_48 = arith.constant 2.500000e-01 : f32
    %170 = vector.broadcast %cst_48 : f32 to vector<16x16xf32>
    %171 = arith.mulf %169, %170 : vector<16x16xf32>
    %cst_49 = arith.constant dense<0xFF800000> : vector<16xf32>
    %172 = vector.multi_reduction <maximumf>, %171, %cst_49 [1] : vector<16x16xf32> to vector<16xf32>
    %173 = vector.shape_cast %172 : vector<16xf32> to vector<16x1xf32>
    %174 = vector.broadcast %173 : vector<16x1xf32> to vector<16x16xf32>
    %175 = arith.subf %171, %174 : vector<16x16xf32>
    %176 = math.exp %175 : vector<16x16xf32>
    %cst_50 = arith.constant dense<0.000000e+00> : vector<16xf32>
    %177 = vector.multi_reduction <add>, %176, %cst_50 [1] : vector<16x16xf32> to vector<16xf32>
    %178 = vector.shape_cast %177 : vector<16xf32> to vector<16x1xf32>
    %179 = vector.broadcast %178 : vector<16x1xf32> to vector<16x16xf32>
    %180 = arith.divf %176, %179 : vector<16x16xf32>
    %181 = arith.truncf %165 : vector<16x16xf32> to vector<16x16xbf16>
    %182 = arith.truncf %180 : vector<16x16xf32> to vector<16x16xbf16>
    %cst_51 = arith.constant dense<0.000000e+00> : vector<16x16xf32>
    %183 = tpu.matmul %181, %182, %cst_51 {dimension_numbers = #tpu.dot_dimension_numbers<[1], [1], [0], [0], [0, 0, 1, 0], [], []>} : vector<16x16xbf16>, vector<16x16xbf16>, vector<16x16xf32> -> vector<16x16xf32>
    %184 = tpu.concatenate %36, %57, %78, %99, %120, %141, %162, %183 in 0 : vector<16x16xf32>, vector<16x16xf32>, vector<16x16xf32>, vector<16x16xf32>, vector<16x16xf32>, vector<16x16xf32>, vector<16x16xf32>, vector<16x16xf32> -> vector<128x16xf32>
    %185 = tpu.transpose %184, [1, 0] : vector<128x16xf32> -> vector<16x128xf32>
    %186 = vector.extract_strided_slice %13 {offsets = [16, 0], sizes = [16, 384], strides = [1, 1]} : vector<32x384xf32> to vector<16x384xf32>
    %187 = tpu.transpose %186, [1, 0] : vector<16x384xf32> -> vector<384x16xf32>
    %188 = vector.extract_strided_slice %187 {offsets = [0, 0], sizes = [16, 16], strides = [1, 1]} : vector<384x16xf32> to vector<16x16xf32>
    %189 = vector.extract_strided_slice %187 {offsets = [128, 0], sizes = [16, 16], strides = [1, 1]} : vector<384x16xf32> to vector<16x16xf32>
    %190 = vector.extract_strided_slice %187 {offsets = [256, 0], sizes = [16, 16], strides = [1, 1]} : vector<384x16xf32> to vector<16x16xf32>
    %191 = tpu.transpose %188, [1, 0] : vector<16x16xf32> -> vector<16x16xf32>
    %192 = arith.truncf %191 : vector<16x16xf32> to vector<16x16xbf16>
    %193 = arith.truncf %189 : vector<16x16xf32> to vector<16x16xbf16>
    %cst_52 = arith.constant dense<0.000000e+00> : vector<16x16xf32>
    %194 = tpu.matmul %192, %193, %cst_52 {dimension_numbers = #tpu.dot_dimension_numbers<[1], [0], [0], [1], [0, 0, 1, 1], [], []>} : vector<16x16xbf16>, vector<16x16xbf16>, vector<16x16xf32> -> vector<16x16xf32>
    %cst_53 = arith.constant 2.500000e-01 : f32
    %195 = vector.broadcast %cst_53 : f32 to vector<16x16xf32>
    %196 = arith.mulf %194, %195 : vector<16x16xf32>
    %cst_54 = arith.constant dense<0xFF800000> : vector<16xf32>
    %197 = vector.multi_reduction <maximumf>, %196, %cst_54 [1] : vector<16x16xf32> to vector<16xf32>
    %198 = vector.shape_cast %197 : vector<16xf32> to vector<16x1xf32>
    %199 = vector.broadcast %198 : vector<16x1xf32> to vector<16x16xf32>
    %200 = arith.subf %196, %199 : vector<16x16xf32>
    %201 = math.exp %200 : vector<16x16xf32>
    %cst_55 = arith.constant dense<0.000000e+00> : vector<16xf32>
    %202 = vector.multi_reduction <add>, %201, %cst_55 [1] : vector<16x16xf32> to vector<16xf32>
    %203 = vector.shape_cast %202 : vector<16xf32> to vector<16x1xf32>
    %204 = vector.broadcast %203 : vector<16x1xf32> to vector<16x16xf32>
    %205 = arith.divf %201, %204 : vector<16x16xf32>
    %206 = arith.truncf %190 : vector<16x16xf32> to vector<16x16xbf16>
    %207 = arith.truncf %205 : vector<16x16xf32> to vector<16x16xbf16>
    %cst_56 = arith.constant dense<0.000000e+00> : vector<16x16xf32>
    %208 = tpu.matmul %206, %207, %cst_56 {dimension_numbers = #tpu.dot_dimension_numbers<[1], [1], [0], [0], [0, 0, 1, 0], [], []>} : vector<16x16xbf16>, vector<16x16xbf16>, vector<16x16xf32> -> vector<16x16xf32>
    %209 = vector.extract_strided_slice %187 {offsets = [16, 0], sizes = [16, 16], strides = [1, 1]} : vector<384x16xf32> to vector<16x16xf32>
    %210 = vector.extract_strided_slice %187 {offsets = [144, 0], sizes = [16, 16], strides = [1, 1]} : vector<384x16xf32> to vector<16x16xf32>
    %211 = vector.extract_strided_slice %187 {offsets = [272, 0], sizes = [16, 16], strides = [1, 1]} : vector<384x16xf32> to vector<16x16xf32>
    %212 = tpu.transpose %209, [1, 0] : vector<16x16xf32> -> vector<16x16xf32>
    %213 = arith.truncf %212 : vector<16x16xf32> to vector<16x16xbf16>
    %214 = arith.truncf %210 : vector<16x16xf32> to vector<16x16xbf16>
    %cst_57 = arith.constant dense<0.000000e+00> : vector<16x16xf32>
    %215 = tpu.matmul %213, %214, %cst_57 {dimension_numbers = #tpu.dot_dimension_numbers<[1], [0], [0], [1], [0, 0, 1, 1], [], []>} : vector<16x16xbf16>, vector<16x16xbf16>, vector<16x16xf32> -> vector<16x16xf32>
    %cst_58 = arith.constant 2.500000e-01 : f32
    %216 = vector.broadcast %cst_58 : f32 to vector<16x16xf32>
    %217 = arith.mulf %215, %216 : vector<16x16xf32>
    %cst_59 = arith.constant dense<0xFF800000> : vector<16xf32>
    %218 = vector.multi_reduction <maximumf>, %217, %cst_59 [1] : vector<16x16xf32> to vector<16xf32>
    %219 = vector.shape_cast %218 : vector<16xf32> to vector<16x1xf32>
    %220 = vector.broadcast %219 : vector<16x1xf32> to vector<16x16xf32>
    %221 = arith.subf %217, %220 : vector<16x16xf32>
    %222 = math.exp %221 : vector<16x16xf32>
    %cst_60 = arith.constant dense<0.000000e+00> : vector<16xf32>
    %223 = vector.multi_reduction <add>, %222, %cst_60 [1] : vector<16x16xf32> to vector<16xf32>
    %224 = vector.shape_cast %223 : vector<16xf32> to vector<16x1xf32>
    %225 = vector.broadcast %224 : vector<16x1xf32> to vector<16x16xf32>
    %226 = arith.divf %222, %225 : vector<16x16xf32>
    %227 = arith.truncf %211 : vector<16x16xf32> to vector<16x16xbf16>
    %228 = arith.truncf %226 : vector<16x16xf32> to vector<16x16xbf16>
    %cst_61 = arith.constant dense<0.000000e+00> : vector<16x16xf32>
    %229 = tpu.matmul %227, %228, %cst_61 {dimension_numbers = #tpu.dot_dimension_numbers<[1], [1], [0], [0], [0, 0, 1, 0], [], []>} : vector<16x16xbf16>, vector<16x16xbf16>, vector<16x16xf32> -> vector<16x16xf32>
    %230 = vector.extract_strided_slice %187 {offsets = [32, 0], sizes = [16, 16], strides = [1, 1]} : vector<384x16xf32> to vector<16x16xf32>
    %231 = vector.extract_strided_slice %187 {offsets = [160, 0], sizes = [16, 16], strides = [1, 1]} : vector<384x16xf32> to vector<16x16xf32>
    %232 = vector.extract_strided_slice %187 {offsets = [288, 0], sizes = [16, 16], strides = [1, 1]} : vector<384x16xf32> to vector<16x16xf32>
    %233 = tpu.transpose %230, [1, 0] : vector<16x16xf32> -> vector<16x16xf32>
    %234 = arith.truncf %233 : vector<16x16xf32> to vector<16x16xbf16>
    %235 = arith.truncf %231 : vector<16x16xf32> to vector<16x16xbf16>
    %cst_62 = arith.constant dense<0.000000e+00> : vector<16x16xf32>
    %236 = tpu.matmul %234, %235, %cst_62 {dimension_numbers = #tpu.dot_dimension_numbers<[1], [0], [0], [1], [0, 0, 1, 1], [], []>} : vector<16x16xbf16>, vector<16x16xbf16>, vector<16x16xf32> -> vector<16x16xf32>
    %cst_63 = arith.constant 2.500000e-01 : f32
    %237 = vector.broadcast %cst_63 : f32 to vector<16x16xf32>
    %238 = arith.mulf %236, %237 : vector<16x16xf32>
    %cst_64 = arith.constant dense<0xFF800000> : vector<16xf32>
    %239 = vector.multi_reduction <maximumf>, %238, %cst_64 [1] : vector<16x16xf32> to vector<16xf32>
    %240 = vector.shape_cast %239 : vector<16xf32> to vector<16x1xf32>
    %241 = vector.broadcast %240 : vector<16x1xf32> to vector<16x16xf32>
    %242 = arith.subf %238, %241 : vector<16x16xf32>
    %243 = math.exp %242 : vector<16x16xf32>
    %cst_65 = arith.constant dense<0.000000e+00> : vector<16xf32>
    %244 = vector.multi_reduction <add>, %243, %cst_65 [1] : vector<16x16xf32> to vector<16xf32>
    %245 = vector.shape_cast %244 : vector<16xf32> to vector<16x1xf32>
    %246 = vector.broadcast %245 : vector<16x1xf32> to vector<16x16xf32>
    %247 = arith.divf %243, %246 : vector<16x16xf32>
    %248 = arith.truncf %232 : vector<16x16xf32> to vector<16x16xbf16>
    %249 = arith.truncf %247 : vector<16x16xf32> to vector<16x16xbf16>
    %cst_66 = arith.constant dense<0.000000e+00> : vector<16x16xf32>
    %250 = tpu.matmul %248, %249, %cst_66 {dimension_numbers = #tpu.dot_dimension_numbers<[1], [1], [0], [0], [0, 0, 1, 0], [], []>} : vector<16x16xbf16>, vector<16x16xbf16>, vector<16x16xf32> -> vector<16x16xf32>
    %251 = vector.extract_strided_slice %187 {offsets = [48, 0], sizes = [16, 16], strides = [1, 1]} : vector<384x16xf32> to vector<16x16xf32>
    %252 = vector.extract_strided_slice %187 {offsets = [176, 0], sizes = [16, 16], strides = [1, 1]} : vector<384x16xf32> to vector<16x16xf32>
    %253 = vector.extract_strided_slice %187 {offsets = [304, 0], sizes = [16, 16], strides = [1, 1]} : vector<384x16xf32> to vector<16x16xf32>
    %254 = tpu.transpose %251, [1, 0] : vector<16x16xf32> -> vector<16x16xf32>
    %255 = arith.truncf %254 : vector<16x16xf32> to vector<16x16xbf16>
    %256 = arith.truncf %252 : vector<16x16xf32> to vector<16x16xbf16>
    %cst_67 = arith.constant dense<0.000000e+00> : vector<16x16xf32>
    %257 = tpu.matmul %255, %256, %cst_67 {dimension_numbers = #tpu.dot_dimension_numbers<[1], [0], [0], [1], [0, 0, 1, 1], [], []>} : vector<16x16xbf16>, vector<16x16xbf16>, vector<16x16xf32> -> vector<16x16xf32>
    %cst_68 = arith.constant 2.500000e-01 : f32
    %258 = vector.broadcast %cst_68 : f32 to vector<16x16xf32>
    %259 = arith.mulf %257, %258 : vector<16x16xf32>
    %cst_69 = arith.constant dense<0xFF800000> : vector<16xf32>
    %260 = vector.multi_reduction <maximumf>, %259, %cst_69 [1] : vector<16x16xf32> to vector<16xf32>
    %261 = vector.shape_cast %260 : vector<16xf32> to vector<16x1xf32>
    %262 = vector.broadcast %261 : vector<16x1xf32> to vector<16x16xf32>
    %263 = arith.subf %259, %262 : vector<16x16xf32>
    %264 = math.exp %263 : vector<16x16xf32>
    %cst_70 = arith.constant dense<0.000000e+00> : vector<16xf32>
    %265 = vector.multi_reduction <add>, %264, %cst_70 [1] : vector<16x16xf32> to vector<16xf32>
    %266 = vector.shape_cast %265 : vector<16xf32> to vector<16x1xf32>
    %267 = vector.broadcast %266 : vector<16x1xf32> to vector<16x16xf32>
    %268 = arith.divf %264, %267 : vector<16x16xf32>
    %269 = arith.truncf %253 : vector<16x16xf32> to vector<16x16xbf16>
    %270 = arith.truncf %268 : vector<16x16xf32> to vector<16x16xbf16>
    %cst_71 = arith.constant dense<0.000000e+00> : vector<16x16xf32>
    %271 = tpu.matmul %269, %270, %cst_71 {dimension_numbers = #tpu.dot_dimension_numbers<[1], [1], [0], [0], [0, 0, 1, 0], [], []>} : vector<16x16xbf16>, vector<16x16xbf16>, vector<16x16xf32> -> vector<16x16xf32>
    %272 = vector.extract_strided_slice %187 {offsets = [64, 0], sizes = [16, 16], strides = [1, 1]} : vector<384x16xf32> to vector<16x16xf32>
    %273 = vector.extract_strided_slice %187 {offsets = [192, 0], sizes = [16, 16], strides = [1, 1]} : vector<384x16xf32> to vector<16x16xf32>
    %274 = vector.extract_strided_slice %187 {offsets = [320, 0], sizes = [16, 16], strides = [1, 1]} : vector<384x16xf32> to vector<16x16xf32>
    %275 = tpu.transpose %272, [1, 0] : vector<16x16xf32> -> vector<16x16xf32>
    %276 = arith.truncf %275 : vector<16x16xf32> to vector<16x16xbf16>
    %277 = arith.truncf %273 : vector<16x16xf32> to vector<16x16xbf16>
    %cst_72 = arith.constant dense<0.000000e+00> : vector<16x16xf32>
    %278 = tpu.matmul %276, %277, %cst_72 {dimension_numbers = #tpu.dot_dimension_numbers<[1], [0], [0], [1], [0, 0, 1, 1], [], []>} : vector<16x16xbf16>, vector<16x16xbf16>, vector<16x16xf32> -> vector<16x16xf32>
    %cst_73 = arith.constant 2.500000e-01 : f32
    %279 = vector.broadcast %cst_73 : f32 to vector<16x16xf32>
    %280 = arith.mulf %278, %279 : vector<16x16xf32>
    %cst_74 = arith.constant dense<0xFF800000> : vector<16xf32>
    %281 = vector.multi_reduction <maximumf>, %280, %cst_74 [1] : vector<16x16xf32> to vector<16xf32>
    %282 = vector.shape_cast %281 : vector<16xf32> to vector<16x1xf32>
    %283 = vector.broadcast %282 : vector<16x1xf32> to vector<16x16xf32>
    %284 = arith.subf %280, %283 : vector<16x16xf32>
    %285 = math.exp %284 : vector<16x16xf32>
    %cst_75 = arith.constant dense<0.000000e+00> : vector<16xf32>
    %286 = vector.multi_reduction <add>, %285, %cst_75 [1] : vector<16x16xf32> to vector<16xf32>
    %287 = vector.shape_cast %286 : vector<16xf32> to vector<16x1xf32>
    %288 = vector.broadcast %287 : vector<16x1xf32> to vector<16x16xf32>
    %289 = arith.divf %285, %288 : vector<16x16xf32>
    %290 = arith.truncf %274 : vector<16x16xf32> to vector<16x16xbf16>
    %291 = arith.truncf %289 : vector<16x16xf32> to vector<16x16xbf16>
    %cst_76 = arith.constant dense<0.000000e+00> : vector<16x16xf32>
    %292 = tpu.matmul %290, %291, %cst_76 {dimension_numbers = #tpu.dot_dimension_numbers<[1], [1], [0], [0], [0, 0, 1, 0], [], []>} : vector<16x16xbf16>, vector<16x16xbf16>, vector<16x16xf32> -> vector<16x16xf32>
    %293 = vector.extract_strided_slice %187 {offsets = [80, 0], sizes = [16, 16], strides = [1, 1]} : vector<384x16xf32> to vector<16x16xf32>
    %294 = vector.extract_strided_slice %187 {offsets = [208, 0], sizes = [16, 16], strides = [1, 1]} : vector<384x16xf32> to vector<16x16xf32>
    %295 = vector.extract_strided_slice %187 {offsets = [336, 0], sizes = [16, 16], strides = [1, 1]} : vector<384x16xf32> to vector<16x16xf32>
    %296 = tpu.transpose %293, [1, 0] : vector<16x16xf32> -> vector<16x16xf32>
    %297 = arith.truncf %296 : vector<16x16xf32> to vector<16x16xbf16>
    %298 = arith.truncf %294 : vector<16x16xf32> to vector<16x16xbf16>
    %cst_77 = arith.constant dense<0.000000e+00> : vector<16x16xf32>
    %299 = tpu.matmul %297, %298, %cst_77 {dimension_numbers = #tpu.dot_dimension_numbers<[1], [0], [0], [1], [0, 0, 1, 1], [], []>} : vector<16x16xbf16>, vector<16x16xbf16>, vector<16x16xf32> -> vector<16x16xf32>
    %cst_78 = arith.constant 2.500000e-01 : f32
    %300 = vector.broadcast %cst_78 : f32 to vector<16x16xf32>
    %301 = arith.mulf %299, %300 : vector<16x16xf32>
    %cst_79 = arith.constant dense<0xFF800000> : vector<16xf32>
    %302 = vector.multi_reduction <maximumf>, %301, %cst_79 [1] : vector<16x16xf32> to vector<16xf32>
    %303 = vector.shape_cast %302 : vector<16xf32> to vector<16x1xf32>
    %304 = vector.broadcast %303 : vector<16x1xf32> to vector<16x16xf32>
    %305 = arith.subf %301, %304 : vector<16x16xf32>
    %306 = math.exp %305 : vector<16x16xf32>
    %cst_80 = arith.constant dense<0.000000e+00> : vector<16xf32>
    %307 = vector.multi_reduction <add>, %306, %cst_80 [1] : vector<16x16xf32> to vector<16xf32>
    %308 = vector.shape_cast %307 : vector<16xf32> to vector<16x1xf32>
    %309 = vector.broadcast %308 : vector<16x1xf32> to vector<16x16xf32>
    %310 = arith.divf %306, %309 : vector<16x16xf32>
    %311 = arith.truncf %295 : vector<16x16xf32> to vector<16x16xbf16>
    %312 = arith.truncf %310 : vector<16x16xf32> to vector<16x16xbf16>
    %cst_81 = arith.constant dense<0.000000e+00> : vector<16x16xf32>
    %313 = tpu.matmul %311, %312, %cst_81 {dimension_numbers = #tpu.dot_dimension_numbers<[1], [1], [0], [0], [0, 0, 1, 0], [], []>} : vector<16x16xbf16>, vector<16x16xbf16>, vector<16x16xf32> -> vector<16x16xf32>
    %314 = vector.extract_strided_slice %187 {offsets = [96, 0], sizes = [16, 16], strides = [1, 1]} : vector<384x16xf32> to vector<16x16xf32>
    %315 = vector.extract_strided_slice %187 {offsets = [224, 0], sizes = [16, 16], strides = [1, 1]} : vector<384x16xf32> to vector<16x16xf32>
    %316 = vector.extract_strided_slice %187 {offsets = [352, 0], sizes = [16, 16], strides = [1, 1]} : vector<384x16xf32> to vector<16x16xf32>
    %317 = tpu.transpose %314, [1, 0] : vector<16x16xf32> -> vector<16x16xf32>
    %318 = arith.truncf %317 : vector<16x16xf32> to vector<16x16xbf16>
    %319 = arith.truncf %315 : vector<16x16xf32> to vector<16x16xbf16>
    %cst_82 = arith.constant dense<0.000000e+00> : vector<16x16xf32>
    %320 = tpu.matmul %318, %319, %cst_82 {dimension_numbers = #tpu.dot_dimension_numbers<[1], [0], [0], [1], [0, 0, 1, 1], [], []>} : vector<16x16xbf16>, vector<16x16xbf16>, vector<16x16xf32> -> vector<16x16xf32>
    %cst_83 = arith.constant 2.500000e-01 : f32
    %321 = vector.broadcast %cst_83 : f32 to vector<16x16xf32>
    %322 = arith.mulf %320, %321 : vector<16x16xf32>
    %cst_84 = arith.constant dense<0xFF800000> : vector<16xf32>
    %323 = vector.multi_reduction <maximumf>, %322, %cst_84 [1] : vector<16x16xf32> to vector<16xf32>
    %324 = vector.shape_cast %323 : vector<16xf32> to vector<16x1xf32>
    %325 = vector.broadcast %324 : vector<16x1xf32> to vector<16x16xf32>
    %326 = arith.subf %322, %325 : vector<16x16xf32>
    %327 = math.exp %326 : vector<16x16xf32>
    %cst_85 = arith.constant dense<0.000000e+00> : vector<16xf32>
    %328 = vector.multi_reduction <add>, %327, %cst_85 [1] : vector<16x16xf32> to vector<16xf32>
    %329 = vector.shape_cast %328 : vector<16xf32> to vector<16x1xf32>
    %330 = vector.broadcast %329 : vector<16x1xf32> to vector<16x16xf32>
    %331 = arith.divf %327, %330 : vector<16x16xf32>
    %332 = arith.truncf %316 : vector<16x16xf32> to vector<16x16xbf16>
    %333 = arith.truncf %331 : vector<16x16xf32> to vector<16x16xbf16>
    %cst_86 = arith.constant dense<0.000000e+00> : vector<16x16xf32>
    %334 = tpu.matmul %332, %333, %cst_86 {dimension_numbers = #tpu.dot_dimension_numbers<[1], [1], [0], [0], [0, 0, 1, 0], [], []>} : vector<16x16xbf16>, vector<16x16xbf16>, vector<16x16xf32> -> vector<16x16xf32>
    %335 = vector.extract_strided_slice %187 {offsets = [112, 0], sizes = [16, 16], strides = [1, 1]} : vector<384x16xf32> to vector<16x16xf32>
    %336 = vector.extract_strided_slice %187 {offsets = [240, 0], sizes = [16, 16], strides = [1, 1]} : vector<384x16xf32> to vector<16x16xf32>
    %337 = vector.extract_strided_slice %187 {offsets = [368, 0], sizes = [16, 16], strides = [1, 1]} : vector<384x16xf32> to vector<16x16xf32>
    %338 = tpu.transpose %335, [1, 0] : vector<16x16xf32> -> vector<16x16xf32>
    %339 = arith.truncf %338 : vector<16x16xf32> to vector<16x16xbf16>
    %340 = arith.truncf %336 : vector<16x16xf32> to vector<16x16xbf16>
    %cst_87 = arith.constant dense<0.000000e+00> : vector<16x16xf32>
    %341 = tpu.matmul %339, %340, %cst_87 {dimension_numbers = #tpu.dot_dimension_numbers<[1], [0], [0], [1], [0, 0, 1, 1], [], []>} : vector<16x16xbf16>, vector<16x16xbf16>, vector<16x16xf32> -> vector<16x16xf32>
    %cst_88 = arith.constant 2.500000e-01 : f32
    %342 = vector.broadcast %cst_88 : f32 to vector<16x16xf32>
    %343 = arith.mulf %341, %342 : vector<16x16xf32>
    %cst_89 = arith.constant dense<0xFF800000> : vector<16xf32>
    %344 = vector.multi_reduction <maximumf>, %343, %cst_89 [1] : vector<16x16xf32> to vector<16xf32>
    %345 = vector.shape_cast %344 : vector<16xf32> to vector<16x1xf32>
    %346 = vector.broadcast %345 : vector<16x1xf32> to vector<16x16xf32>
    %347 = arith.subf %343, %346 : vector<16x16xf32>
    %348 = math.exp %347 : vector<16x16xf32>
    %cst_90 = arith.constant dense<0.000000e+00> : vector<16xf32>
    %349 = vector.multi_reduction <add>, %348, %cst_90 [1] : vector<16x16xf32> to vector<16xf32>
    %350 = vector.shape_cast %349 : vector<16xf32> to vector<16x1xf32>
    %351 = vector.broadcast %350 : vector<16x1xf32> to vector<16x16xf32>
    %352 = arith.divf %348, %351 : vector<16x16xf32>
    %353 = arith.truncf %337 : vector<16x16xf32> to vector<16x16xbf16>
    %354 = arith.truncf %352 : vector<16x16xf32> to vector<16x16xbf16>
    %cst_91 = arith.constant dense<0.000000e+00> : vector<16x16xf32>
    %355 = tpu.matmul %353, %354, %cst_91 {dimension_numbers = #tpu.dot_dimension_numbers<[1], [1], [0], [0], [0, 0, 1, 0], [], []>} : vector<16x16xbf16>, vector<16x16xbf16>, vector<16x16xf32> -> vector<16x16xf32>
    %356 = tpu.concatenate %208, %229, %250, %271, %292, %313, %334, %355 in 0 : vector<16x16xf32>, vector<16x16xf32>, vector<16x16xf32>, vector<16x16xf32>, vector<16x16xf32>, vector<16x16xf32>, vector<16x16xf32>, vector<16x16xf32> -> vector<128x16xf32>
    %357 = tpu.transpose %356, [1, 0] : vector<128x16xf32> -> vector<16x128xf32>
    %358 = tpu.concatenate %185, %357 in 0 : vector<16x128xf32>, vector<16x128xf32> -> vector<32x128xf32>
    %359 = arith.truncf %358 : vector<32x128xf32> to vector<32x128xbf16>
    %c0_92 = arith.constant 0 : index
    %c0_93 = arith.constant 0 : index
    %360 = vector.load %arg3[%c0_92, %c0_93] : memref<128x128xbf16, #tpu.memory_space<vmem>>, vector<128x128xbf16>
    %cst_94 = arith.constant dense<0.000000e+00> : vector<32x128xf32>
    %361 = tpu.matmul %359, %360, %cst_94 {dimension_numbers = #tpu.dot_dimension_numbers<[1], [0], [0], [1], [0, 0, 1, 1], [], []>} : vector<32x128xbf16>, vector<128x128xbf16>, vector<32x128xf32> -> vector<32x128xf32>
    %362 = vector.broadcast %1 : vector<1x128xf32> to vector<32x128xf32>
    %363 = arith.addf %361, %362 : vector<32x128xf32>
    %364 = arith.addf %8, %363 : vector<32x128xf32>
    %cst_95 = arith.constant dense<0.000000e+00> : vector<32xf32>
    %365 = vector.multi_reduction <add>, %364, %cst_95 [1] : vector<32x128xf32> to vector<32xf32>
    %366 = vector.shape_cast %365 : vector<32xf32> to vector<32x1xf32>
    %cst_96 = arith.constant 1.280000e+02 : f32
    %367 = vector.broadcast %cst_96 : f32 to vector<32x1xf32>
    %368 = arith.divf %366, %367 : vector<32x1xf32>
    %369 = vector.broadcast %368 : vector<32x1xf32> to vector<32x128xf32>
    %370 = arith.subf %364, %369 : vector<32x128xf32>
    %371 = arith.mulf %370, %370 : vector<32x128xf32>
    %cst_97 = arith.constant dense<0.000000e+00> : vector<32xf32>
    %372 = vector.multi_reduction <add>, %371, %cst_97 [1] : vector<32x128xf32> to vector<32xf32>
    %373 = vector.shape_cast %372 : vector<32xf32> to vector<32x1xf32>
    %cst_98 = arith.constant 1.280000e+02 : f32
    %374 = vector.broadcast %cst_98 : f32 to vector<32x1xf32>
    %375 = arith.divf %373, %374 : vector<32x1xf32>
    %cst_99 = arith.constant 9.99999974E-6 : f32
    %376 = vector.broadcast %cst_99 : f32 to vector<32x1xf32>
    %377 = arith.addf %375, %376 : vector<32x1xf32>
    %378 = math.rsqrt %377 : vector<32x1xf32>
    %379 = vector.broadcast %378 : vector<32x1xf32> to vector<32x128xf32>
    %380 = arith.mulf %370, %379 : vector<32x128xf32>
    %381 = vector.broadcast %2 : vector<1x128xf32> to vector<32x128xf32>
    %382 = arith.mulf %380, %381 : vector<32x128xf32>
    %383 = vector.broadcast %3 : vector<1x128xf32> to vector<32x128xf32>
    %384 = arith.addf %382, %383 : vector<32x128xf32>
    %385 = arith.truncf %384 : vector<32x128xf32> to vector<32x128xbf16>
    %c0_100 = arith.constant 0 : index
    %c0_101 = arith.constant 0 : index
    %386 = vector.load %arg4[%c0_100, %c0_101] : memref<128x256xbf16, #tpu.memory_space<vmem>>, vector<128x256xbf16>
    %cst_102 = arith.constant dense<0.000000e+00> : vector<32x256xf32>
    %387 = tpu.matmul %385, %386, %cst_102 {dimension_numbers = #tpu.dot_dimension_numbers<[1], [0], [0], [1], [0, 0, 1, 1], [], []>} : vector<32x128xbf16>, vector<128x256xbf16>, vector<32x256xf32> -> vector<32x256xf32>
    %388 = vector.broadcast %4 : vector<1x256xf32> to vector<32x256xf32>
    %389 = arith.addf %387, %388 : vector<32x256xf32>
    %cst_103 = arith.constant 5.000000e-01 : f32
    %390 = vector.broadcast %cst_103 : f32 to vector<32x256xf32>
    %391 = arith.mulf %390, %389 : vector<32x256xf32>
    %cst_104 = arith.constant 4.471500e-02 : f32
    %392 = vector.broadcast %cst_104 : f32 to vector<32x256xf32>
    %393 = arith.mulf %392, %389 : vector<32x256xf32>
    %394 = arith.mulf %393, %389 : vector<32x256xf32>
    %395 = arith.mulf %394, %389 : vector<32x256xf32>
    %396 = arith.addf %389, %395 : vector<32x256xf32>
    %cst_105 = arith.constant 0.797884583 : f32
    %397 = vector.broadcast %cst_105 : f32 to vector<32x256xf32>
    %398 = arith.mulf %397, %396 : vector<32x256xf32>
    %399 = math.tanh %398 : vector<32x256xf32>
    %cst_106 = arith.constant 1.000000e+00 : f32
    %400 = vector.broadcast %cst_106 : f32 to vector<32x256xf32>
    %401 = arith.addf %400, %399 : vector<32x256xf32>
    %402 = arith.mulf %391, %401 : vector<32x256xf32>
    %403 = arith.truncf %402 : vector<32x256xf32> to vector<32x256xbf16>
    %c0_107 = arith.constant 0 : index
    %c0_108 = arith.constant 0 : index
    %404 = vector.load %arg5[%c0_107, %c0_108] : memref<256x128xbf16, #tpu.memory_space<vmem>>, vector<256x128xbf16>
    %cst_109 = arith.constant dense<0.000000e+00> : vector<32x128xf32>
    %405 = tpu.matmul %403, %404, %cst_109 {dimension_numbers = #tpu.dot_dimension_numbers<[1], [0], [0], [1], [0, 0, 1, 1], [], []>} : vector<32x256xbf16>, vector<256x128xbf16>, vector<32x128xf32> -> vector<32x128xf32>
    %406 = vector.broadcast %5 : vector<1x128xf32> to vector<32x128xf32>
    %407 = arith.addf %405, %406 : vector<32x128xf32>
    %408 = arith.addf %384, %407 : vector<32x128xf32>
    %cst_110 = arith.constant dense<0.000000e+00> : vector<32xf32>
    %409 = vector.multi_reduction <add>, %408, %cst_110 [1] : vector<32x128xf32> to vector<32xf32>
    %410 = vector.shape_cast %409 : vector<32xf32> to vector<32x1xf32>
    %cst_111 = arith.constant 1.280000e+02 : f32
    %411 = vector.broadcast %cst_111 : f32 to vector<32x1xf32>
    %412 = arith.divf %410, %411 : vector<32x1xf32>
    %413 = vector.broadcast %412 : vector<32x1xf32> to vector<32x128xf32>
    %414 = arith.subf %408, %413 : vector<32x128xf32>
    %415 = arith.mulf %414, %414 : vector<32x128xf32>
    %cst_112 = arith.constant dense<0.000000e+00> : vector<32xf32>
    %416 = vector.multi_reduction <add>, %415, %cst_112 [1] : vector<32x128xf32> to vector<32xf32>
    %417 = vector.shape_cast %416 : vector<32xf32> to vector<32x1xf32>
    %cst_113 = arith.constant 1.280000e+02 : f32
    %418 = vector.broadcast %cst_113 : f32 to vector<32x1xf32>
    %419 = arith.divf %417, %418 : vector<32x1xf32>
    %cst_114 = arith.constant 9.99999974E-6 : f32
    %420 = vector.broadcast %cst_114 : f32 to vector<32x1xf32>
    %421 = arith.addf %419, %420 : vector<32x1xf32>
    %422 = math.rsqrt %421 : vector<32x1xf32>
    %423 = vector.broadcast %422 : vector<32x1xf32> to vector<32x128xf32>
    %424 = arith.mulf %414, %423 : vector<32x128xf32>
    %425 = vector.broadcast %6 : vector<1x128xf32> to vector<32x128xf32>
    %426 = arith.mulf %424, %425 : vector<32x128xf32>
    %427 = vector.broadcast %7 : vector<1x128xf32> to vector<32x128xf32>
    %428 = arith.addf %426, %427 : vector<32x128xf32>
    %c0_115 = arith.constant 0 : index
    %c0_116 = arith.constant 0 : index
    %429 = vector.load %arg7[%c0_115, %c0_116] : memref<32x128xf32, #tpu.memory_space<vmem>>, vector<32x128xf32>
    tpu.vector_store %arg7[%c0_115, %c0_116], %428 {strides = array<i32>} : memref<32x128xf32, #tpu.memory_space<vmem>>, vector<32x128xf32>,
    return
  }
  func.func @transform_0(%arg0: i32) -> (i32, i32) {
    %c0_i32 = arith.constant 0 : i32
    %c0_i32_0 = arith.constant 0 : i32
    return %arg0, %c0_i32 : i32, i32
  }
  func.func @transform_1(%arg0: i32) -> (i32, i32) {
    %c0_i32 = arith.constant 0 : i32
    %c0_i32_0 = arith.constant 0 : i32
    %c0_i32_1 = arith.constant 0 : i32
    return %c0_i32, %c0_i32_0 : i32, i32
  }
  func.func @transform_2(%arg0: i32) -> (i32, i32) {
    %c0_i32 = arith.constant 0 : i32
    %c0_i32_0 = arith.constant 0 : i32
    %c0_i32_1 = arith.constant 0 : i32
    return %c0_i32, %c0_i32_0 : i32, i32
  }
  func.func @transform_3(%arg0: i32) -> (i32, i32) {
    %c0_i32 = arith.constant 0 : i32
    %c0_i32_0 = arith.constant 0 : i32
    %c0_i32_1 = arith.constant 0 : i32
    return %c0_i32, %c0_i32_0 : i32, i32
  }
  func.func @transform_4(%arg0: i32) -> (i32, i32) {
    %c0_i32 = arith.constant 0 : i32
    %c0_i32_0 = arith.constant 0 : i32
    %c0_i32_1 = arith.constant 0 : i32
    return %c0_i32, %c0_i32_0 : i32, i32
  }
  func.func @transform_5(%arg0: i32) -> (i32, i32) {
    %c0_i32 = arith.constant 0 : i32
    %c0_i32_0 = arith.constant 0 : i32
    %c0_i32_1 = arith.constant 0 : i32
    return %c0_i32, %c0_i32_0 : i32, i32
  }
  func.func @transform_6(%arg0: i32) -> (i32, i32) {
    %c0_i32 = arith.constant 0 : i32
    %c0_i32_0 = arith.constant 0 : i32
    return %arg0, %c0_i32 : i32, i32
  }
}

</mosaic_0001>

<llo_original>
// kernel: tpu_custom_call.1
$region0: #{tpu_custom_call.1}
  #allocation0 [shape = 'u32[]', space=smem, size = 0x4, offset = 0x4, fixed_abs, tag = 'smem constant byte address 0x4 - core index']
  #allocation1 [shape = 'u32[144,128]{1,0:T(1,128)}', space=vmem, size = 0x12000, scoped, tag = 'internal scratch']
  %s0 = inlined_call_operand.hbm [shape: f32[32,128], index: 0, kind: input, shape index: {}]
  %s1 = inlined_call_operand.hbm [shape: bf16[128,384], index: 1, kind: input, shape index: {}]
  %s2 = inlined_call_operand.hbm [shape: bf16[128,128], index: 2, kind: input, shape index: {}]
  %s3 = inlined_call_operand.hbm [shape: bf16[128,256], index: 3, kind: input, shape index: {}]
  %s4 = inlined_call_operand.hbm [shape: bf16[256,128], index: 4, kind: input, shape index: {}]
  %s5 = inlined_call_operand.hbm [shape: f32[1,1408], index: 5, kind: input, shape index: {}]
  %s6 = inlined_call_operand.hbm [shape: f32[32,128], index: 6, kind: output, shape index: {}]
  %s7 = sld [smem:[#allocation0]]
  $region58: #{tpu_custom_call.1} parent=0
    _
  %s9 = ssub.s32 1, %s7
  %s10 = scalar_select 0, %s9, %s7
  $region1: #{tpu_custom_call.1} parent=0
    #allocation2 [shape = 'u8[16384]{0}', space=vmem, size = 0x4000, scoped, tag = 'input window, operand 0, single buffered']
    #allocation3 [shape = 's32[1]{0}', space=sflag, size = 0x4, scoped, tag = 'scoped memory for tpu_custom_call.1']
    #allocation4 [shape = 's32[1]{0}', space=sflag, size = 0x4, scoped, tag = 'scoped memory for tpu_custom_call.1']
    #allocation5 [shape = 'u8[98304]{0}', space=vmem, size = 0x18000, scoped, tag = 'input window, operand 1, single buffered']
    #allocation6 [shape = 's32[1]{0}', space=sflag, size = 0x4, scoped, tag = 'scoped memory for tpu_custom_call.1']
    #allocation7 [shape = 'u8[32768]{0}', space=vmem, size = 0x8000, scoped, tag = 'input window, operand 2, single buffered']
    #allocation8 [shape = 'u8[65536]{0}', space=vmem, size = 0x10000, scoped, tag = 'input window, operand 3, single buffered']
    #allocation9 [shape = 's32[1]{0}', space=sflag, size = 0x4, scoped, tag = 'scoped memory for tpu_custom_call.1']
    #allocation10 [shape = 'u8[65536]{0}', space=vmem, size = 0x10000, scoped, tag = 'input window, operand 4, single buffered']
    #allocation11 [shape = 'u8[5632]{0}', space=vmem, size = 0x1800, scoped, tag = 'input window, operand 5, single buffered']
    #allocation12 [shape = 's32[1]{0}', space=sflag, size = 0x4, scoped, tag = 'scoped memory for tpu_custom_call.1']
    #allocation13 [shape = 'u8[16384]{0}', space=vmem, size = 0x4000, scoped, tag = 'output window, operand 0, single buffered']
    %11 = vsyncpa [#allocation3], 0
    %12 = vsyncpa [#allocation6], 0
    %13 = vsyncpa [#allocation9], 0
    %14 = vsyncpa [#allocation12], 0
    %15 = vsyncpa [#allocation4], 0
    // Predicated region
    $region2: #{tpu_custom_call.1} parent=1 // pred_check
      _
    $region3: #{tpu_custom_call.1} parent=1 // pred_check_branch
      %17 = sbr.rel (0) target = $region5
    $region4: #{tpu_custom_call.1} parent=1 // pred_region
      %s19 = ssub.s32 512, 512
      %20 = vsyncadd [#allocation3], %s19
      %s21 = sshll.u32 [#allocation2], 4
      %s22 = int_to_ptr.vmem [resolvable:$true] %s21
      %27 = dma.hbm_to_vmem [thread:$0]  %s0, 512, %s22, [#allocation3], 128, 128, 8
    $region5: #{tpu_custom_call.1} parent=1 // pred_fallthru
      _
    // Predicated region
    $region6: #{tpu_custom_call.1} parent=1 // pred_check
      _
    $region7: #{tpu_custom_call.1} parent=1 // pred_check_branch
      %29 = sbr.rel (0) target = $region9
    $region8: #{tpu_custom_call.1} parent=1 // pred_region
      %s31 = ssub.s32 3072, 3072
      %32 = vsyncadd [#allocation6], %s31
      %s33 = sshll.u32 [#allocation5], 4
      %s34 = int_to_ptr.vmem [resolvable:$true] %s33
      %39 = dma.hbm_to_vmem [thread:$0]  %s1, 3072, %s34, [#allocation6], 192, 192, 12
    $region9: #{tpu_custom_call.1} parent=1 // pred_fallthru
      _
    // Predicated region
    $region10: #{tpu_custom_call.1} parent=1 // pred_check
      _
    $region11: #{tpu_custom_call.1} parent=1 // pred_check_branch
      %41 = sbr.rel (0) target = $region13
    $region12: #{tpu_custom_call.1} parent=1 // pred_region
      %s43 = ssub.s32 1024, 1024
      %44 = vsyncadd [#allocation6], %s43
      %s45 = sshll.u32 [#allocation7], 4
      %s46 = int_to_ptr.vmem [resolvable:$true] %s45
      %51 = dma.hbm_to_vmem [thread:$0]  %s2, 1024, %s46, [#allocation6], 64, 64, 4
    $region13: #{tpu_custom_call.1} parent=1 // pred_fallthru
      _
    // Predicated region
    $region14: #{tpu_custom_call.1} parent=1 // pred_check
      _
    $region15: #{tpu_custom_call.1} parent=1 // pred_check_branch
      %53 = sbr.rel (0) target = $region17
    $region16: #{tpu_custom_call.1} parent=1 // pred_region
      %s55 = ssub.s32 2048, 2048
      %56 = vsyncadd [#allocation9], %s55
      %s57 = sshll.u32 [#allocation8], 4
      %s58 = int_to_ptr.vmem [resolvable:$true] %s57
      %63 = dma.hbm_to_vmem [thread:$0]  %s3, 2048, %s58, [#allocation9], 128, 128, 8
    $region17: #{tpu_custom_call.1} parent=1 // pred_fallthru
      _
    // Predicated region
    $region18: #{tpu_custom_call.1} parent=1 // pred_check
      _
    $region19: #{tpu_custom_call.1} parent=1 // pred_check_branch
      %65 = sbr.rel (0) target = $region21
    $region20: #{tpu_custom_call.1} parent=1 // pred_region
      %s67 = ssub.s32 2048, 2048
      %68 = vsyncadd [#allocation9], %s67
      %s69 = sshll.u32 [#allocation10], 4
      %s70 = int_to_ptr.vmem [resolvable:$true] %s69
      %75 = dma.hbm_to_vmem [thread:$0]  %s4, 2048, %s70, [#allocation9], 64, 64, 4
    $region21: #{tpu_custom_call.1} parent=1 // pred_fallthru
      _
    // Predicated region
    $region22: #{tpu_custom_call.1} parent=1 // pred_check
      _
    $region23: #{tpu_custom_call.1} parent=1 // pred_check_branch
      %77 = sbr.rel (0) target = $region25
    $region24: #{tpu_custom_call.1} parent=1 // pred_region
      %s79 = ssub.s32 176, 176
      %80 = vsyncadd [#allocation12], %s79
      %s82 = sshll.u32 [#allocation11], 4
      %s83 = int_to_ptr.vmem [resolvable:$true] %s82
      %85 = dma.hbm_to_vmem [thread:$0]  %s5, 176, %s83, [#allocation12]
    $region25: #{tpu_custom_call.1} parent=1 // pred_fallthru
      _
    // Predicated region
    $region26: #{tpu_custom_call.1} parent=1 // pred_check
      _
    $region27: #{tpu_custom_call.1} parent=1 // pred_check_branch
      %87 = sbr.rel (0) target = $region29
    $region28: #{tpu_custom_call.1} parent=1 // pred_region
      %88 = dma.done [#allocation3], 512
    $region29: #{tpu_custom_call.1} parent=1 // pred_fallthru
      _
    // Predicated region
    $region30: #{tpu_custom_call.1} parent=1 // pred_check
      _
    $region31: #{tpu_custom_call.1} parent=1 // pred_check_branch
      %90 = sbr.rel (0) target = $region33
    $region32: #{tpu_custom_call.1} parent=1 // pred_region
      %91 = dma.done [#allocation6], 3072
    $region33: #{tpu_custom_call.1} parent=1 // pred_fallthru
      _
    // Predicated region
    $region34: #{tpu_custom_call.1} parent=1 // pred_check
      _
    $region35: #{tpu_custom_call.1} parent=1 // pred_check_branch
      %93 = sbr.rel (0) target = $region37
    $region36: #{tpu_custom_call.1} parent=1 // pred_region
      %94 = dma.done [#allocation6], 1024
    $region37: #{tpu_custom_call.1} parent=1 // pred_fallthru
      _
    // Predicated region
    $region38: #{tpu_custom_call.1} parent=1 // pred_check
      _
    $region39: #{tpu_custom_call.1} parent=1 // pred_check_branch
      %96 = sbr.rel (0) target = $region41
    $region40: #{tpu_custom_call.1} parent=1 // pred_region
      %97 = dma.done [#allocation9], 2048
    $region41: #{tpu_custom_call.1} parent=1 // pred_fallthru
      _
    // Predicated region
    $region42: #{tpu_custom_call.1} parent=1 // pred_check
      _
    $region43: #{tpu_custom_call.1} parent=1 // pred_check_branch
      %99 = sbr.rel (0) target = $region45
    $region44: #{tpu_custom_call.1} parent=1 // pred_region
      %100 = dma.done [#allocation9], 2048
    $region45: #{tpu_custom_call.1} parent=1 // pred_fallthru
      _
    // Predicated region
    $region46: #{tpu_custom_call.1} parent=1 // pred_check
      _
    $region47: #{tpu_custom_call.1} parent=1 // pred_check_branch
      %102 = sbr.rel (0) target = $region49
    $region48: #{tpu_custom_call.1} parent=1 // pred_region
      %103 = dma.done [#allocation12], 176
    $region49: #{tpu_custom_call.1} parent=1 // pred_fallthru
      _
    %v105 = vld [vmem:[#allocation11] sm:$0x7]
    %v106 = vld [vmem:[#allocation11 + $0x3] sm:$0x1]
    %v107 = vld [vmem:[#allocation11 + $0x4] sm:$0x1]
    %v108 = vld [vmem:[#allocation11 + $0x5] sm:$0x1]
    %v109 = vld [vmem:[#allocation11 + $0x6] sm:$0x3]
    %v110 = vld [vmem:[#allocation11 + $0x8] sm:$0x1]
    %v111 = vld [vmem:[#allocation11 + $0x9] sm:$0x1]
    %v112 = vld [vmem:[#allocation11 + $0xa] sm:$0x1]
    %v113 = vld [vmem:[#allocation2] sm:$0xff]
    %v114 = vld [vmem:[#allocation2 + $0x8] sm:$0xff]
    %v115 = vld [vmem:[#allocation2 + $0x10] sm:$0xff]
    %v116 = vld [vmem:[#allocation2 + $0x18] sm:$0xff]
    %v117 = vpack.c.bf16 %v114, %v113
    %v118 = vpack.c.bf16 %v116, %v115
    %v119 = vld [vmem:[#allocation5] sm:$0xff]
    %v120 = vld [vmem:[#allocation5 + $0x8] sm:$0xf]
    %v121 = vld [vmem:[#allocation5 + $0xc] sm:$0xff]
    %v122 = vld [vmem:[#allocation5 + $0x14] sm:$0xf]
    %v123 = vld [vmem:[#allocation5 + $0x18] sm:$0xff]
    %v124 = vld [vmem:[#allocation5 + $0x20] sm:$0xf]
    %v125 = vld [vmem:[#allocation5 + $0x24] sm:$0xff]
    %v126 = vld [vmem:[#allocation5 + $0x2c] sm:$0xf]
    %v127 = vld [vmem:[#allocation5 + $0x30] sm:$0xff]
    %v128 = vld [vmem:[#allocation5 + $0x38] sm:$0xf]
    %v129 = vld [vmem:[#allocation5 + $0x3c] sm:$0xff]
    %v130 = vld [vmem:[#allocation5 + $0x44] sm:$0xf]
    %v131 = vld [vmem:[#allocation5 + $0x48] sm:$0xff]
    %v132 = vld [vmem:[#allocation5 + $0x50] sm:$0xf]
    %v133 = vld [vmem:[#allocation5 + $0x54] sm:$0xff]
    %v134 = vld [vmem:[#allocation5 + $0x5c] sm:$0xf]
    %v135 = vld [vmem:[#allocation5 + $0x60] sm:$0xff]
    %v136 = vld [vmem:[#allocation5 + $0x68] sm:$0xf]
    %v137 = vld [vmem:[#allocation5 + $0x6c] sm:$0xff]
    %v138 = vld [vmem:[#allocation5 + $0x74] sm:$0xf]
    %v139 = vld [vmem:[#allocation5 + $0x78] sm:$0xff]
    %v140 = vld [vmem:[#allocation5 + $0x80] sm:$0xf]
    %v141 = vld [vmem:[#allocation5 + $0x84] sm:$0xff]
    %v142 = vld [vmem:[#allocation5 + $0x8c] sm:$0xf]
    %v143 = vld [vmem:[#allocation5 + $0x90] sm:$0xff]
    %v144 = vld [vmem:[#allocation5 + $0x98] sm:$0xf]
    %v145 = vld [vmem:[#allocation5 + $0x9c] sm:$0xff]
    %v146 = vld [vmem:[#allocation5 + $0xa4] sm:$0xf]
    %v147 = vld [vmem:[#allocation5 + $0xa8] sm:$0xff]
    %v148 = vld [vmem:[#allocation5 + $0xb0] sm:$0xf]
    %v149 = vld [vmem:[#allocation5 + $0xb4] sm:$0xff]
    %v150 = vld [vmem:[#allocation5 + $0xbc] sm:$0xf]
    %v152 = vlaneseq
    %v153 = vshrl.u32 %v152, 7
    %v154 = vsub.s32 0, %v153
    %v155 = vrot.slane %v105, %v154
    %v156 = vlaneseq
    %v157 = vshrl.u32 %v156, 7
    %v158 = vsub.s32 1, %v157
    %v159 = vrot.slane %v105, %v158
    %v160 = vlaneseq
    %v161 = vshrl.u32 %v160, 7
    %v162 = vsub.s32 2, %v161
    %v163 = vrot.slane %v105, %v162
    %v199 = vunpack.c.l.b16 %v119
    %v200 = vunpack.c.h.b16 %v119
    %v201 = vunpack.c.l.b16 %v120
    %v202 = vunpack.c.l.b16 %v121
    %v203 = vunpack.c.h.b16 %v121
    %v204 = vunpack.c.l.b16 %v122
    %v205 = vunpack.c.l.b16 %v123
    %v206 = vunpack.c.h.b16 %v123
    %v207 = vunpack.c.l.b16 %v124
    %v208 = vunpack.c.l.b16 %v125
    %v209 = vunpack.c.h.b16 %v125
    %v210 = vunpack.c.l.b16 %v126
    %v211 = vunpack.c.l.b16 %v127
    %v212 = vunpack.c.h.b16 %v127
    %v213 = vunpack.c.l.b16 %v128
    %v214 = vunpack.c.l.b16 %v129
    %v215 = vunpack.c.h.b16 %v129
    %v216 = vunpack.c.l.b16 %v130
    %v217 = vunpack.c.l.b16 %v131
    %v218 = vunpack.c.h.b16 %v131
    %v219 = vunpack.c.l.b16 %v132
    %v220 = vunpack.c.l.b16 %v133
    %v221 = vunpack.c.h.b16 %v133
    %v222 = vunpack.c.l.b16 %v134
    %v223 = vunpack.c.l.b16 %v135
    %v224 = vunpack.c.h.b16 %v135
    %v225 = vunpack.c.l.b16 %v136
    %v226 = vunpack.c.l.b16 %v137
    %v227 = vunpack.c.h.b16 %v137
    %v228 = vunpack.c.l.b16 %v138
    %v229 = vunpack.c.l.b16 %v139
    %v230 = vunpack.c.h.b16 %v139
    %v231 = vunpack.c.l.b16 %v140
    %v232 = vunpack.c.l.b16 %v141
    %v233 = vunpack.c.h.b16 %v141
    %v234 = vunpack.c.l.b16 %v142
    %v235 = vunpack.c.l.b16 %v143
    %v236 = vunpack.c.h.b16 %v143
    %v237 = vunpack.c.l.b16 %v144
    %v238 = vunpack.c.l.b16 %v145
    %v239 = vunpack.c.h.b16 %v145
    %v240 = vunpack.c.l.b16 %v146
    %v241 = vunpack.c.l.b16 %v147
    %v242 = vunpack.c.h.b16 %v147
    %v243 = vunpack.c.l.b16 %v148
    %v244 = vunpack.c.l.b16 %v149
    %v245 = vunpack.c.h.b16 %v149
    %v246 = vunpack.c.l.b16 %v150
    %v247 = vpack.c.b16 %v202, %v199
    %v248 = vpack.c.b16 %v203, %v200
    %v249 = vpack.c.b16 %v204, %v201
    %v250 = vpack.c.b16 %v208, %v205
    %v251 = vpack.c.b16 %v209, %v206
    %v252 = vpack.c.b16 %v210, %v207
    %v253 = vpack.c.b16 %v214, %v211
    %v254 = vpack.c.b16 %v215, %v212
    %v255 = vpack.c.b16 %v216, %v213
    %v256 = vpack.c.b16 %v220, %v217
    %v257 = vpack.c.b16 %v221, %v218
    %v258 = vpack.c.b16 %v222, %v219
    %v259 = vpack.c.b16 %v226, %v223
    %v260 = vpack.c.b16 %v227, %v224
    %v261 = vpack.c.b16 %v228, %v225
    %v262 = vpack.c.b16 %v232, %v229
    %v263 = vpack.c.b16 %v233, %v230
    %v264 = vpack.c.b16 %v234, %v231
    %v265 = vpack.c.b16 %v238, %v235
    %v266 = vpack.c.b16 %v239, %v236
    %v267 = vpack.c.b16 %v240, %v237
    %v268 = vpack.c.b16 %v244, %v241
    %v269 = vpack.c.b16 %v245, %v242
    %v270 = vpack.c.b16 %v246, %v243
    %295 = vmatprep.subr.bf16.mxu0 %v269
    %296 = vmatpush1.bf16.msra.mxu0 %v268
    %297 = vmatprep.subr.bf16.mxu0 %v266
    %298 = vmatpush1.bf16.msra.mxu0 %v265
    %299 = vmatprep.subr.bf16.mxu0 %v263
    %300 = vmatpush1.bf16.msra.mxu0 %v262
    %301 = vmatprep.subr.bf16.mxu0 %v260
    %302 = vmatpush1.bf16.msra.mxu0 %v259
    %303 = vmatprep.subr.bf16.mxu0 %v257
    %304 = vmatpush1.bf16.msra.mxu0 %v256
    %305 = vmatprep.subr.bf16.mxu0 %v254
    %306 = vmatpush1.bf16.msra.mxu0 %v253
    %307 = vmatprep.subr.bf16.mxu0 %v251
    %308 = vmatpush1.bf16.msra.mxu0 %v250
    %309 = vmatprep.subr.bf16.mxu0 %v248
    %310 = vmatpush1.bf16.msra.mxu0 %v247
    %311 = vmatprep.subr.bf16.mxu0 0
    %312 = vmatpush2.bf16.msra.mxu0 0
    %313 = vmatprep.subr.bf16.mxu0 0
    %314 = vmatpush2.bf16.msra.mxu0 0
    %315 = vmatprep.subr.bf16.mxu0 0
    %316 = vmatpush2.bf16.msra.mxu0 0
    %317 = vmatprep.subr.bf16.mxu0 0
    %318 = vmatpush2.bf16.msra.mxu0 0
    %319 = vmatprep.subr.bf16.mxu0 0
    %320 = vmatpush2.bf16.msra.mxu0 0
    %321 = vmatprep.subr.bf16.mxu0 0
    %322 = vmatpush2.bf16.msra.mxu0 0
    %323 = vmatprep.subr.bf16.mxu0 0
    %324 = vmatpush2.bf16.msra.mxu0 0
    %325 = vmatprep.subr.bf16.mxu0 0
    %326 = vmatpush2.bf16.msra.mxu0 0
    %327 = vmatprep.mubr.bf16.mxu0 0
    %328 = vmatmul.mubr.bf16.gmra.mxu0 %v117
    %v329 = vpop.f32.mrf.mxu0
    %v330 = vadd.f32 %v155, %v329
    %v331 = vpop.f32.mrf.mxu0
    %v332 = vadd.f32 %v159, %v331
    %v333 = vpop.f32.mrf.mxu0
    %v334 = vadd.f32 %v155, %v333
    %v335 = vpop.f32.mrf.mxu0
    %v336 = vadd.f32 %v159, %v335
    %337 = vmatprep.mubr.bf16.mxu0 0
    %338 = vmatmul.mubr.bf16.gmra.mxu0 %v118
    %v339 = vpop.f32.mrf.mxu0
    %v340 = vadd.f32 %v155, %v339
    %v341 = vpop.f32.mrf.mxu0
    %v342 = vadd.f32 %v159, %v341
    %v343 = vpop.f32.mrf.mxu0
    %v344 = vadd.f32 %v155, %v343
    %v345 = vpop.f32.mrf.mxu0
    %v346 = vadd.f32 %v159, %v345
    %347 = vdwg.mxu0
    %348 = vmatprep.subr.bf16.mxu0 0
    %349 = vmatpush1.bf16.msra.mxu0 %v270
    %350 = vmatprep.subr.bf16.mxu0 0
    %351 = vmatpush1.bf16.msra.mxu0 %v267
    %352 = vmatprep.subr.bf16.mxu0 0
    %353 = vmatpush1.bf16.msra.mxu0 %v264
    %354 = vmatprep.subr.bf16.mxu0 0
    %355 = vmatpush1.bf16.msra.mxu0 %v261
    %356 = vmatprep.subr.bf16.mxu0 0
    %357 = vmatpush1.bf16.msra.mxu0 %v258
    %358 = vmatprep.subr.bf16.mxu0 0
    %359 = vmatpush1.bf16.msra.mxu0 %v255
    %360 = vmatprep.subr.bf16.mxu0 0
    %361 = vmatpush1.bf16.msra.mxu0 %v252
    %362 = vmatprep.subr.bf16.mxu0 0
    %363 = vmatpush1.bf16.msra.mxu0 %v249
    %364 = vmatprep.subr.bf16.mxu0 0
    %365 = vmatpush2.bf16.msra.mxu0 0
    %366 = vmatprep.subr.bf16.mxu0 0
    %367 = vmatpush2.bf16.msra.mxu0 0
    %368 = vmatprep.subr.bf16.mxu0 0
    %369 = vmatpush2.bf16.msra.mxu0 0
    %370 = vmatprep.subr.bf16.mxu0 0
    %371 = vmatpush2.bf16.msra.mxu0 0
    %372 = vmatprep.subr.bf16.mxu0 0
    %373 = vmatpush2.bf16.msra.mxu0 0
    %374 = vmatprep.subr.bf16.mxu0 0
    %375 = vmatpush2.bf16.msra.mxu0 0
    %376 = vmatprep.subr.bf16.mxu0 0
    %377 = vmatpush2.bf16.msra.mxu0 0
    %378 = vmatprep.subr.bf16.mxu0 0
    %379 = vmatpush2.bf16.msra.mxu0 0
    %380 = vmatprep.mubr.bf16.mxu0 0
    %381 = vmatmul.mubr.bf16.gmra.mxu0 %v117
    %v382 = vpop.f32.mrf.mxu0
    %v383 = vadd.f32 %v163, %v382
    %v384 = vpop.f32.mrf.mxu0
    %v385 = vpop.f32.mrf.mxu0
    %v386 = vadd.f32 %v163, %v385
    %v387 = vpop.f32.mrf.mxu0
    %388 = vmatprep.mubr.bf16.mxu0 0
    %389 = vmatmul.mubr.bf16.gmra.mxu0 %v118
    %v390 = vpop.f32.mrf.mxu0
    %v391 = vadd.f32 %v163, %v390
    %v392 = vpop.f32.mrf.mxu0
    %v393 = vpop.f32.mrf.mxu0
    %v394 = vadd.f32 %v163, %v393
    %v395 = vpop.f32.mrf.mxu0
    %396 = vdwg.mxu0
    %397 = vxpose.xlu0.b32.start [1/16] %v330, 128
    %398 = vxpose.xlu0.b32.cont [2/16] %v334, 128
    %399 = vxpose.xlu0.b32.cont [3/16] 0.0, 128
    %400 = vxpose.xlu0.b32.cont [4/16] 0.0, 128
    %401 = vxpose.xlu0.b32.cont [5/16] 0.0, 128
    %402 = vxpose.xlu0.b32.cont [6/16] 0.0, 128
    %403 = vxpose.xlu0.b32.cont [7/16] 0.0, 128
    %404 = vxpose.xlu0.b32.cont [8/16] 0.0, 128
    %405 = vxpose.xlu0.b32.cont [9/16] 0.0, 128
    %406 = vxpose.xlu0.b32.cont [10/16] 0.0, 128
    %407 = vxpose.xlu0.b32.cont [11/16] 0.0, 128
    %408 = vxpose.xlu0.b32.cont [12/16] 0.0, 128
    %409 = vxpose.xlu0.b32.cont [13/16] 0.0, 128
    %410 = vxpose.xlu0.b32.cont [14/16] 0.0, 128
    %411 = vxpose.xlu0.b32.cont [15/16] 0.0, 128
    %412 = vxpose.xlu0.b32.end [16/16] 0.0, 128
    %v413 = vpop.trf.xlu0
    %v414 = vpop.trf.xlu0
    %v415 = vpop.trf.xlu0
    %v416 = vpop.trf.xlu0
    %v417 = vpop.trf.xlu0
    %v418 = vpop.trf.xlu0
    %v419 = vpop.trf.xlu0
    %v420 = vpop.trf.xlu0
    %v421 = vpop.trf.xlu0
    %v422 = vpop.trf.xlu0
    %v423 = vpop.trf.xlu0
    %v424 = vpop.trf.xlu0
    %v425 = vpop.trf.xlu0
    %v426 = vpop.trf.xlu0
    %v427 = vpop.trf.xlu0
    %v428 = vpop.trf.xlu0
    %429 = vxpose.xlu0.b32.start [1/16] %v332, 128
    %430 = vxpose.xlu0.b32.cont [2/16] %v336, 128
    %431 = vxpose.xlu0.b32.cont [3/16] 0.0, 128
    %432 = vxpose.xlu0.b32.cont [4/16] 0.0, 128
    %433 = vxpose.xlu0.b32.cont [5/16] 0.0, 128
    %434 = vxpose.xlu0.b32.cont [6/16] 0.0, 128
    %435 = vxpose.xlu0.b32.cont [7/16] 0.0, 128
    %436 = vxpose.xlu0.b32.cont [8/16] 0.0, 128
    %437 = vxpose.xlu0.b32.cont [9/16] 0.0, 128
    %438 = vxpose.xlu0.b32.cont [10/16] 0.0, 128
    %439 = vxpose.xlu0.b32.cont [11/16] 0.0, 128
    %440 = vxpose.xlu0.b32.cont [12/16] 0.0, 128
    %441 = vxpose.xlu0.b32.cont [13/16] 0.0, 128
    %442 = vxpose.xlu0.b32.cont [14/16] 0.0, 128
    %443 = vxpose.xlu0.b32.cont [15/16] 0.0, 128
    %444 = vxpose.xlu0.b32.end [16/16] 0.0, 128
    %v445 = vpop.trf.xlu0
    %v446 = vpop.trf.xlu0
    %v447 = vpop.trf.xlu0
    %v448 = vpop.trf.xlu0
    %v449 = vpop.trf.xlu0
    %v450 = vpop.trf.xlu0
    %v451 = vpop.trf.xlu0
    %v452 = vpop.trf.xlu0
    %v453 = vpop.trf.xlu0
    %v454 = vpop.trf.xlu0
    %v455 = vpop.trf.xlu0
    %v456 = vpop.trf.xlu0
    %v457 = vpop.trf.xlu0
    %v458 = vpop.trf.xlu0
    %v459 = vpop.trf.xlu0
    %v460 = vpop.trf.xlu0
    %461 = vxpose.xlu0.b32.start [1/16] %v383, 128
    %462 = vxpose.xlu0.b32.cont [2/16] %v386, 128
    %463 = vxpose.xlu0.b32.cont [3/16] 0.0, 128
    %464 = vxpose.xlu0.b32.cont [4/16] 0.0, 128
    %465 = vxpose.xlu0.b32.cont [5/16] 0.0, 128
    %466 = vxpose.xlu0.b32.cont [6/16] 0.0, 128
    %467 = vxpose.xlu0.b32.cont [7/16] 0.0, 128
    %468 = vxpose.xlu0.b32.cont [8/16] 0.0, 128
    %469 = vxpose.xlu0.b32.cont [9/16] 0.0, 128
    %470 = vxpose.xlu0.b32.cont [10/16] 0.0, 128
    %471 = vxpose.xlu0.b32.cont [11/16] 0.0, 128
    %472 = vxpose.xlu0.b32.cont [12/16] 0.0, 128
    %473 = vxpose.xlu0.b32.cont [13/16] 0.0, 128
    %474 = vxpose.xlu0.b32.cont [14/16] 0.0, 128
    %475 = vxpose.xlu0.b32.cont [15/16] 0.0, 128
    %476 = vxpose.xlu0.b32.end [16/16] 0.0, 128
    %v477 = vpop.trf.xlu0
    %v478 = vpop.trf.xlu0
    %v479 = vpop.trf.xlu0
    %v480 = vpop.trf.xlu0
    %v481 = vpop.trf.xlu0
    %v482 = vpop.trf.xlu0
    %v483 = vpop.trf.xlu0
    %v484 = vpop.trf.xlu0
    %v485 = vpop.trf.xlu0
    %v486 = vpop.trf.xlu0
    %v487 = vpop.trf.xlu0
    %v488 = vpop.trf.xlu0
    %v489 = vpop.trf.xlu0
    %v490 = vpop.trf.xlu0
    %v491 = vpop.trf.xlu0
    %v492 = vpop.trf.xlu0
    %493 = vxpose.xlu0.b32.start [1/16] %v413, 128
    %494 = vxpose.xlu0.b32.cont [2/16] %v414, 128
    %495 = vxpose.xlu0.b32.cont [3/16] 0.0, 128
    %496 = vxpose.xlu0.b32.cont [4/16] 0.0, 128
    %497 = vxpose.xlu0.b32.cont [5/16] 0.0, 128
    %498 = vxpose.xlu0.b32.cont [6/16] 0.0, 128
    %499 = vxpose.xlu0.b32.cont [7/16] 0.0, 128
    %500 = vxpose.xlu0.b32.cont [8/16] 0.0, 128
    %501 = vxpose.xlu0.b32.cont [9/16] 0.0, 128
    %502 = vxpose.xlu0.b32.cont [10/16] 0.0, 128
    %503 = vxpose.xlu0.b32.cont [11/16] 0.0, 128
    %504 = vxpose.xlu0.b32.cont [12/16] 0.0, 128
    %505 = vxpose.xlu0.b32.cont [13/16] 0.0, 128
    %506 = vxpose.xlu0.b32.cont [14/16] 0.0, 128
    %507 = vxpose.xlu0.b32.cont [15/16] 0.0, 128
    %508 = vxpose.xlu0.b32.end [16/16] 0.0, 128
    %v509 = vpop.trf.xlu0
    %v510 = vpop.trf.xlu0
    %v511 = vpop.trf.xlu0
    %v512 = vpop.trf.xlu0
    %v513 = vpop.trf.xlu0
    %v514 = vpop.trf.xlu0
    %v515 = vpop.trf.xlu0
    %v516 = vpop.trf.xlu0
    %v517 = vpop.trf.xlu0
    %v518 = vpop.trf.xlu0
    %v519 = vpop.trf.xlu0
    %v520 = vpop.trf.xlu0
    %v521 = vpop.trf.xlu0
    %v522 = vpop.trf.xlu0
    %v523 = vpop.trf.xlu0
    %v524 = vpop.trf.xlu0
    %v525 = vpack.c.bf16 %v510, %v509
    %v526 = vpack.c.bf16 %v446, %v445
    %vm527 = vcmask 130048
    %v529 = vsel %vm527, %v525, 0
    %531 = vmatprep.subr.bf16.mxu0 0
    %532 = vmatpush1.bf16.msra.mxu0 0
    %533 = vmatprep.subr.bf16.mxu0 0
    %534 = vmatpush1.bf16.msra.mxu0 0
    %535 = vmatprep.subr.bf16.mxu0 0
    %536 = vmatpush1.bf16.msra.mxu0 0
    %537 = vmatprep.subr.bf16.mxu0 0
    %538 = vmatpush1.bf16.msra.mxu0 0
    %539 = vmatprep.subr.bf16.mxu0 0
    %540 = vmatpush1.bf16.msra.mxu0 0
    %541 = vmatprep.subr.bf16.mxu0 0
    %542 = vmatpush1.bf16.msra.mxu0 0
    %543 = vmatprep.subr.bf16.mxu0 0
    %544 = vmatpush1.bf16.msra.mxu0 0
    %545 = vmatprep.subr.bf16.mxu0 0
    %546 = vmatpush1.bf16.msra.mxu0 %v526
    %547 = vmatprep.subr.bf16.mxu0 0
    %548 = vmatpush2.bf16.msra.mxu0 0
    %549 = vmatprep.subr.bf16.mxu0 0
    %550 = vmatpush2.bf16.msra.mxu0 0
    %551 = vmatprep.subr.bf16.mxu0 0
    %552 = vmatpush2.bf16.msra.mxu0 0
    %553 = vmatprep.subr.bf16.mxu0 0
    %554 = vmatpush2.bf16.msra.mxu0 0
    %555 = vmatprep.subr.bf16.mxu0 0
    %556 = vmatpush2.bf16.msra.mxu0 0
    %557 = vmatprep.subr.bf16.mxu0 0
    %558 = vmatpush2.bf16.msra.mxu0 0
    %559 = vmatprep.subr.bf16.mxu0 0
    %560 = vmatpush2.bf16.msra.mxu0 0
    %561 = vmatprep.subr.bf16.mxu0 0
    %562 = vmatpush2.bf16.msra.mxu0 0
    %563 = vmatprep.mubr.bf16.mxu0 0
    %564 = vmatmul.mubr.bf16.gmra.mxu0 %v529
    %v565 = vpop.f32.mrf.mxu0
    %v566 = vadd.f32 0.0, %v565
    %v567 = vpop.f32.mrf.mxu0
    %v568 = vpop.f32.mrf.mxu0
    %v569 = vadd.f32 0.0, %v568
    %v570 = vpop.f32.mrf.mxu0
    %571 = vdwg.mxu0
    %v572 = vmul.f32 %v566, 0.25
    %v573 = vmul.f32 %v569, 0.25
    %v574 = vsel %vm527, %v572, -inf
    %575 = vmax.xlane.f32.xlu0 %v574
    %v576 = vpop.xlane.xlu0 %575
    %v577 = vsel %vm527, %v573, -inf
    %578 = vmax.xlane.f32.xlu0 %v577
    %v579 = vpop.xlane.xlu0 %578
    %v580 = vsub.f32 %v572, %v576
    %v581 = vsub.f32 %v573, %v579
    %v582 = vmul.f32 %v580, 1.442695
    %v583 = vpow.pop %v582
    %v584 = vmul.f32 %v581, 1.442695
    %v585 = vpow.pop %v584
    %v586 = vsel %vm527, %v583, 0.0
    %587 = vadd.xlane.f32.xlu0 %v586
    %v588 = vpop.xlane.xlu0 %587
    %v589 = vsel %vm527, %v585, 0.0
    %590 = vadd.xlane.f32.xlu0 %v589
    %v591 = vpop.xlane.xlu0 %590
    %v592 = vrcp.pop %v588
    %v593 = vmul.f32 %v583, %v592
    %v594 = vrcp.pop %v591
    %v595 = vmul.f32 %v585, %v594
    %v596 = vpack.c.bf16 %v478, %v477
    %v597 = vpack.c.bf16 %v595, %v593
    %v599 = vsel %vm527, %v596, 0
    %v602 = vsel %vm527, %v597, 0
    %604 = vmatprep.subr.bf16.mxu0 0
    %605 = vmatpush1.bf16.xpose.msra.mxu0 0
    %606 = vmatprep.subr.bf16.mxu0 0
    %607 = vmatpush1.bf16.xpose.msra.mxu0 0
    %608 = vmatprep.subr.bf16.mxu0 0
    %609 = vmatpush1.bf16.xpose.msra.mxu0 0
    %610 = vmatprep.subr.bf16.mxu0 0
    %611 = vmatpush1.bf16.xpose.msra.mxu0 0
    %612 = vmatprep.subr.bf16.mxu0 0
    %613 = vmatpush1.bf16.xpose.msra.mxu0 0
    %614 = vmatprep.subr.bf16.mxu0 0
    %615 = vmatpush1.bf16.xpose.msra.mxu0 0
    %616 = vmatprep.subr.bf16.mxu0 0
    %617 = vmatpush1.bf16.xpose.msra.mxu0 0
    %618 = vmatprep.subr.bf16.mxu0 0
    %619 = vmatpush1.bf16.xpose.msra.mxu0 %v602
    %620 = vmatprep.subr.bf16.mxu0 0
    %621 = vmatpush2.bf16.xpose.msra.mxu0 0
    %622 = vmatprep.subr.bf16.mxu0 0
    %623 = vmatpush2.bf16.xpose.msra.mxu0 0
    %624 = vmatprep.subr.bf16.mxu0 0
    %625 = vmatpush2.bf16.xpose.msra.mxu0 0
    %626 = vmatprep.subr.bf16.mxu0 0
    %627 = vmatpush2.bf16.xpose.msra.mxu0 0
    %628 = vmatprep.subr.bf16.mxu0 0
    %629 = vmatpush2.bf16.xpose.msra.mxu0 0
    %630 = vmatprep.subr.bf16.mxu0 0
    %631 = vmatpush2.bf16.xpose.msra.mxu0 0
    %632 = vmatprep.subr.bf16.mxu0 0
    %633 = vmatpush2.bf16.xpose.msra.mxu0 0
    %634 = vmatprep.subr.bf16.mxu0 0
    %635 = vmatpush2.bf16.xpose.msra.mxu0 0
    %636 = vmatprep.mubr.bf16.mxu0 0
    %637 = vmatmul.mubr.bf16.gmra.mxu0 %v599
    %v638 = vpop.f32.mrf.mxu0
    %v639 = vadd.f32 0.0, %v638
    %v640 = vpop.f32.mrf.mxu0
    %v641 = vpop.f32.mrf.mxu0
    %v642 = vadd.f32 0.0, %v641
    %v643 = vpop.f32.mrf.mxu0
    %644 = vdwg.mxu0
    %645 = vxpose.xlu0.b32.start [1/16] %v415, 128
    %646 = vxpose.xlu0.b32.cont [2/16] %v416, 128
    %647 = vxpose.xlu0.b32.cont [3/16] 0.0, 128
    %648 = vxpose.xlu0.b32.cont [4/16] 0.0, 128
    %649 = vxpose.xlu0.b32.cont [5/16] 0.0, 128
    %650 = vxpose.xlu0.b32.cont [6/16] 0.0, 128
    %651 = vxpose.xlu0.b32.cont [7/16] 0.0, 128
    %652 = vxpose.xlu0.b32.cont [8/16] 0.0, 128
    %653 = vxpose.xlu0.b32.cont [9/16] 0.0, 128
    %654 = vxpose.xlu0.b32.cont [10/16] 0.0, 128
    %655 = vxpose.xlu0.b32.cont [11/16] 0.0, 128
    %656 = vxpose.xlu0.b32.cont [12/16] 0.0, 128
    %657 = vxpose.xlu0.b32.cont [13/16] 0.0, 128
    %658 = vxpose.xlu0.b32.cont [14/16] 0.0, 128
    %659 = vxpose.xlu0.b32.cont [15/16] 0.0, 128
    %660 = vxpose.xlu0.b32.end [16/16] 0.0, 128
    %v661 = vpop.trf.xlu0
    %v662 = vpop.trf.xlu0
    %v663 = vpop.trf.xlu0
    %v664 = vpop.trf.xlu0
    %v665 = vpop.trf.xlu0
    %v666 = vpop.trf.xlu0
    %v667 = vpop.trf.xlu0
    %v668 = vpop.trf.xlu0
    %v669 = vpop.trf.xlu0
    %v670 = vpop.trf.xlu0
    %v671 = vpop.trf.xlu0
    %v672 = vpop.trf.xlu0
    %v673 = vpop.trf.xlu0
    %v674 = vpop.trf.xlu0
    %v675 = vpop.trf.xlu0
    %v676 = vpop.trf.xlu0
    %v677 = vpack.c.bf16 %v662, %v661
    %v678 = vpack.c.bf16 %v448, %v447
    %v680 = vsel %vm527, %v677, 0
    %682 = vmatprep.subr.bf16.mxu0 0
    %683 = vmatpush1.bf16.msra.mxu0 0
    %684 = vmatprep.subr.bf16.mxu0 0
    %685 = vmatpush1.bf16.msra.mxu0 0
    %686 = vmatprep.subr.bf16.mxu0 0
    %687 = vmatpush1.bf16.msra.mxu0 0
    %688 = vmatprep.subr.bf16.mxu0 0
    %689 = vmatpush1.bf16.msra.mxu0 0
    %690 = vmatprep.subr.bf16.mxu0 0
    %691 = vmatpush1.bf16.msra.mxu0 0
    %692 = vmatprep.subr.bf16.mxu0 0
    %693 = vmatpush1.bf16.msra.mxu0 0
    %694 = vmatprep.subr.bf16.mxu0 0
    %695 = vmatpush1.bf16.msra.mxu0 0
    %696 = vmatprep.subr.bf16.mxu0 0
    %697 = vmatpush1.bf16.msra.mxu0 %v678
    %698 = vmatprep.subr.bf16.mxu0 0
    %699 = vmatpush2.bf16.msra.mxu0 0
    %700 = vmatprep.subr.bf16.mxu0 0
    %701 = vmatpush2.bf16.msra.mxu0 0
    %702 = vmatprep.subr.bf16.mxu0 0
    %703 = vmatpush2.bf16.msra.mxu0 0
    %704 = vmatprep.subr.bf16.mxu0 0
    %705 = vmatpush2.bf16.msra.mxu0 0
    %706 = vmatprep.subr.bf16.mxu0 0
    %707 = vmatpush2.bf16.msra.mxu0 0
    %708 = vmatprep.subr.bf16.mxu0 0
    %709 = vmatpush2.bf16.msra.mxu0 0
    %710 = vmatprep.subr.bf16.mxu0 0
    %711 = vmatpush2.bf16.msra.mxu0 0
    %712 = vmatprep.subr.bf16.mxu0 0
    %713 = vmatpush2.bf16.msra.mxu0 0
    %714 = vmatprep.mubr.bf16.mxu0 0
    %715 = vmatmul.mubr.bf16.gmra.mxu0 %v680
    %v716 = vpop.f32.mrf.mxu0
    %v717 = vadd.f32 0.0, %v716
    %v718 = vpop.f32.mrf.mxu0
    %v719 = vpop.f32.mrf.mxu0
    %v720 = vadd.f32 0.0, %v719
    %v721 = vpop.f32.mrf.mxu0
    %722 = vdwg.mxu0
    %v723 = vmul.f32 %v717, 0.25
    %v724 = vmul.f32 %v720, 0.25
    %v725 = vsel %vm527, %v723, -inf
    %726 = vmax.xlane.f32.xlu0 %v725
    %v727 = vpop.xlane.xlu0 %726
    %v728 = vsel %vm527, %v724, -inf
    %729 = vmax.xlane.f32.xlu0 %v728
    %v730 = vpop.xlane.xlu0 %729
    %v731 = vsub.f32 %v723, %v727
    %v732 = vsub.f32 %v724, %v730
    %v733 = vmul.f32 %v731, 1.442695
    %v734 = vpow.pop %v733
    %v735 = vmul.f32 %v732, 1.442695
    %v736 = vpow.pop %v735
    %v737 = vsel %vm527, %v734, 0.0
    %738 = vadd.xlane.f32.xlu0 %v737
    %v739 = vpop.xlane.xlu0 %738
    %v740 = vsel %vm527, %v736, 0.0
    %741 = vadd.xlane.f32.xlu0 %v740
    %v742 = vpop.xlane.xlu0 %741
    %v743 = vrcp.pop %v739
    %v744 = vmul.f32 %v734, %v743
    %v745 = vrcp.pop %v742
    %v746 = vmul.f32 %v736, %v745
    %v747 = vpack.c.bf16 %v480, %v479
    %v748 = vpack.c.bf16 %v746, %v744
    %v750 = vsel %vm527, %v747, 0
    %v753 = vsel %vm527, %v748, 0
    %755 = vmatprep.subr.bf16.mxu0 0
    %756 = vmatpush1.bf16.xpose.msra.mxu0 0
    %757 = vmatprep.subr.bf16.mxu0 0
    %758 = vmatpush1.bf16.xpose.msra.mxu0 0
    %759 = vmatprep.subr.bf16.mxu0 0
    %760 = vmatpush1.bf16.xpose.msra.mxu0 0
    %761 = vmatprep.subr.bf16.mxu0 0
    %762 = vmatpush1.bf16.xpose.msra.mxu0 0
    %763 = vmatprep.subr.bf16.mxu0 0
    %764 = vmatpush1.bf16.xpose.msra.mxu0 0
    %765 = vmatprep.subr.bf16.mxu0 0
    %766 = vmatpush1.bf16.xpose.msra.mxu0 0
    %767 = vmatprep.subr.bf16.mxu0 0
    %768 = vmatpush1.bf16.xpose.msra.mxu0 0
    %769 = vmatprep.subr.bf16.mxu0 0
    %770 = vmatpush1.bf16.xpose.msra.mxu0 %v753
    %771 = vmatprep.subr.bf16.mxu0 0
    %772 = vmatpush2.bf16.xpose.msra.mxu0 0
    %773 = vmatprep.subr.bf16.mxu0 0
    %774 = vmatpush2.bf16.xpose.msra.mxu0 0
    %775 = vmatprep.subr.bf16.mxu0 0
    %776 = vmatpush2.bf16.xpose.msra.mxu0 0
    %777 = vmatprep.subr.bf16.mxu0 0
    %778 = vmatpush2.bf16.xpose.msra.mxu0 0
    %779 = vmatprep.subr.bf16.mxu0 0
    %780 = vmatpush2.bf16.xpose.msra.mxu0 0
    %781 = vmatprep.subr.bf16.mxu0 0
    %782 = vmatpush2.bf16.xpose.msra.mxu0 0
    %783 = vmatprep.subr.bf16.mxu0 0
    %784 = vmatpush2.bf16.xpose.msra.mxu0 0
    %785 = vmatprep.subr.bf16.mxu0 0
    %786 = vmatpush2.bf16.xpose.msra.mxu0 0
    %787 = vmatprep.mubr.bf16.mxu0 0
    %788 = vmatmul.mubr.bf16.gmra.mxu0 %v750
    %v789 = vpop.f32.mrf.mxu0
    %v790 = vadd.f32 0.0, %v789
    %v791 = vpop.f32.mrf.mxu0
    %v792 = vpop.f32.mrf.mxu0
    %v793 = vadd.f32 0.0, %v792
    %v794 = vpop.f32.mrf.mxu0
    %795 = vdwg.mxu0
    %796 = vxpose.xlu0.b32.start [1/16] %v417, 128
    %797 = vxpose.xlu0.b32.cont [2/16] %v418, 128
    %798 = vxpose.xlu0.b32.cont [3/16] 0.0, 128
    %799 = vxpose.xlu0.b32.cont [4/16] 0.0, 128
    %800 = vxpose.xlu0.b32.cont [5/16] 0.0, 128
    %801 = vxpose.xlu0.b32.cont [6/16] 0.0, 128
    %802 = vxpose.xlu0.b32.cont [7/16] 0.0, 128
    %803 = vxpose.xlu0.b32.cont [8/16] 0.0, 128
    %804 = vxpose.xlu0.b32.cont [9/16] 0.0, 128
    %805 = vxpose.xlu0.b32.cont [10/16] 0.0, 128
    %806 = vxpose.xlu0.b32.cont [11/16] 0.0, 128
    %807 = vxpose.xlu0.b32.cont [12/16] 0.0, 128
    %808 = vxpose.xlu0.b32.cont [13/16] 0.0, 128
    %809 = vxpose.xlu0.b32.cont [14/16] 0.0, 128
    %810 = vxpose.xlu0.b32.cont [15/16] 0.0, 128
    %811 = vxpose.xlu0.b32.end [16/16] 0.0, 128
    %v812 = vpop.trf.xlu0
    %v813 = vpop.trf.xlu0
    %v814 = vpop.trf.xlu0
    %v815 = vpop.trf.xlu0
    %v816 = vpop.trf.xlu0
    %v817 = vpop.trf.xlu0
    %v818 = vpop.trf.xlu0
    %v819 = vpop.trf.xlu0
    %v820 = vpop.trf.xlu0
    %v821 = vpop.trf.xlu0
    %v822 = vpop.trf.xlu0
    %v823 = vpop.trf.xlu0
    %v824 = vpop.trf.xlu0
    %v825 = vpop.trf.xlu0
    %v826 = vpop.trf.xlu0
    %v827 = vpop.trf.xlu0
    %v828 = vpack.c.bf16 %v813, %v812
    %v829 = vpack.c.bf16 %v450, %v449
    %v831 = vsel %vm527, %v828, 0
    %833 = vmatprep.subr.bf16.mxu0 0
    %834 = vmatpush1.bf16.msra.mxu0 0
    %835 = vmatprep.subr.bf16.mxu0 0
    %836 = vmatpush1.bf16.msra.mxu0 0
    %837 = vmatprep.subr.bf16.mxu0 0
    %838 = vmatpush1.bf16.msra.mxu0 0
    %839 = vmatprep.subr.bf16.mxu0 0
    %840 = vmatpush1.bf16.msra.mxu0 0
    %841 = vmatprep.subr.bf16.mxu0 0
    %842 = vmatpush1.bf16.msra.mxu0 0
    %843 = vmatprep.subr.bf16.mxu0 0
    %844 = vmatpush1.bf16.msra.mxu0 0
    %845 = vmatprep.subr.bf16.mxu0 0
    %846 = vmatpush1.bf16.msra.mxu0 0
    %847 = vmatprep.subr.bf16.mxu0 0
    %848 = vmatpush1.bf16.msra.mxu0 %v829
    %849 = vmatprep.subr.bf16.mxu0 0
    %850 = vmatpush2.bf16.msra.mxu0 0
    %851 = vmatprep.subr.bf16.mxu0 0
    %852 = vmatpush2.bf16.msra.mxu0 0
    %853 = vmatprep.subr.bf16.mxu0 0
    %854 = vmatpush2.bf16.msra.mxu0 0
    %855 = vmatprep.subr.bf16.mxu0 0
    %856 = vmatpush2.bf16.msra.mxu0 0
    %857 = vmatprep.subr.bf16.mxu0 0
    %858 = vmatpush2.bf16.msra.mxu0 0
    %859 = vmatprep.subr.bf16.mxu0 0
    %860 = vmatpush2.bf16.msra.mxu0 0
    %861 = vmatprep.subr.bf16.mxu0 0
    %862 = vmatpush2.bf16.msra.mxu0 0
    %863 = vmatprep.subr.bf16.mxu0 0
    %864 = vmatpush2.bf16.msra.mxu0 0
    %865 = vmatprep.mubr.bf16.mxu0 0
    %866 = vmatmul.mubr.bf16.gmra.mxu0 %v831
    %v867 = vpop.f32.mrf.mxu0
    %v868 = vadd.f32 0.0, %v867
    %v869 = vpop.f32.mrf.mxu0
    %v870 = vpop.f32.mrf.mxu0
    %v871 = vadd.f32 0.0, %v870
    %v872 = vpop.f32.mrf.mxu0
    %873 = vdwg.mxu0
    %v874 = vmul.f32 %v868, 0.25
    %v875 = vmul.f32 %v871, 0.25
    %v876 = vsel %vm527, %v874, -inf
    %877 = vmax.xlane.f32.xlu0 %v876
    %v878 = vpop.xlane.xlu0 %877
    %v879 = vsel %vm527, %v875, -inf
    %880 = vmax.xlane.f32.xlu0 %v879
    %v881 = vpop.xlane.xlu0 %880
    %v882 = vsub.f32 %v874, %v878
    %v883 = vsub.f32 %v875, %v881
    %v884 = vmul.f32 %v882, 1.442695
    %v885 = vpow.pop %v884
    %v886 = vmul.f32 %v883, 1.442695
    %v887 = vpow.pop %v886
    %v888 = vsel %vm527, %v885, 0.0
    %889 = vadd.xlane.f32.xlu0 %v888
    %v890 = vpop.xlane.xlu0 %889
    %v891 = vsel %vm527, %v887, 0.0
    %892 = vadd.xlane.f32.xlu0 %v891
    %v893 = vpop.xlane.xlu0 %892
    %v894 = vrcp.pop %v890
    %v895 = vmul.f32 %v885, %v894
    %v896 = vrcp.pop %v893
    %v897 = vmul.f32 %v887, %v896
    %v898 = vpack.c.bf16 %v482, %v481
    %v899 = vpack.c.bf16 %v897, %v895
    %v901 = vsel %vm527, %v898, 0
    %v904 = vsel %vm527, %v899, 0
    %906 = vmatprep.subr.bf16.mxu0 0
    %907 = vmatpush1.bf16.xpose.msra.mxu0 0
    %908 = vmatprep.subr.bf16.mxu0 0
    %909 = vmatpush1.bf16.xpose.msra.mxu0 0
    %910 = vmatprep.subr.bf16.mxu0 0
    %911 = vmatpush1.bf16.xpose.msra.mxu0 0
    %912 = vmatprep.subr.bf16.mxu0 0
    %913 = vmatpush1.bf16.xpose.msra.mxu0 0
    %914 = vmatprep.subr.bf16.mxu0 0
    %915 = vmatpush1.bf16.xpose.msra.mxu0 0
    %916 = vmatprep.subr.bf16.mxu0 0
    %917 = vmatpush1.bf16.xpose.msra.mxu0 0
    %918 = vmatprep.subr.bf16.mxu0 0
    %919 = vmatpush1.bf16.xpose.msra.mxu0 0
    %920 = vmatprep.subr.bf16.mxu0 0
    %921 = vmatpush1.bf16.xpose.msra.mxu0 %v904
    %922 = vmatprep.subr.bf16.mxu0 0
    %923 = vmatpush2.bf16.xpose.msra.mxu0 0
    %924 = vmatprep.subr.bf16.mxu0 0
    %925 = vmatpush2.bf16.xpose.msra.mxu0 0
    %926 = vmatprep.subr.bf16.mxu0 0
    %927 = vmatpush2.bf16.xpose.msra.mxu0 0
    %928 = vmatprep.subr.bf16.mxu0 0
    %929 = vmatpush2.bf16.xpose.msra.mxu0 0
    %930 = vmatprep.subr.bf16.mxu0 0
    %931 = vmatpush2.bf16.xpose.msra.mxu0 0
    %932 = vmatprep.subr.bf16.mxu0 0
    %933 = vmatpush2.bf16.xpose.msra.mxu0 0
    %934 = vmatprep.subr.bf16.mxu0 0
    %935 = vmatpush2.bf16.xpose.msra.mxu0 0
    %936 = vmatprep.subr.bf16.mxu0 0
    %937 = vmatpush2.bf16.xpose.msra.mxu0 0
    %938 = vmatprep.mubr.bf16.mxu0 0
    %939 = vmatmul.mubr.bf16.gmra.mxu0 %v901
    %v940 = vpop.f32.mrf.mxu0
    %v941 = vadd.f32 0.0, %v940
    %v942 = vpop.f32.mrf.mxu0
    %v943 = vpop.f32.mrf.mxu0
    %v944 = vadd.f32 0.0, %v943
    %v945 = vpop.f32.mrf.mxu0
    %946 = vdwg.mxu0
    %947 = vxpose.xlu0.b32.start [1/16] %v419, 128
    %948 = vxpose.xlu0.b32.cont [2/16] %v420, 128
    %949 = vxpose.xlu0.b32.cont [3/16] 0.0, 128
    %950 = vxpose.xlu0.b32.cont [4/16] 0.0, 128
    %951 = vxpose.xlu0.b32.cont [5/16] 0.0, 128
    %952 = vxpose.xlu0.b32.cont [6/16] 0.0, 128
    %953 = vxpose.xlu0.b32.cont [7/16] 0.0, 128
    %954 = vxpose.xlu0.b32.cont [8/16] 0.0, 128
    %955 = vxpose.xlu0.b32.cont [9/16] 0.0, 128
    %956 = vxpose.xlu0.b32.cont [10/16] 0.0, 128
    %957 = vxpose.xlu0.b32.cont [11/16] 0.0, 128
    %958 = vxpose.xlu0.b32.cont [12/16] 0.0, 128
    %959 = vxpose.xlu0.b32.cont [13/16] 0.0, 128
    %960 = vxpose.xlu0.b32.cont [14/16] 0.0, 128
    %961 = vxpose.xlu0.b32.cont [15/16] 0.0, 128
    %962 = vxpose.xlu0.b32.end [16/16] 0.0, 128
    %v963 = vpop.trf.xlu0
    %v964 = vpop.trf.xlu0
    %v965 = vpop.trf.xlu0
    %v966 = vpop.trf.xlu0
    %v967 = vpop.trf.xlu0
    %v968 = vpop.trf.xlu0
    %v969 = vpop.trf.xlu0
    %v970 = vpop.trf.xlu0
    %v971 = vpop.trf.xlu0
    %v972 = vpop.trf.xlu0
    %v973 = vpop.trf.xlu0
    %v974 = vpop.trf.xlu0
    %v975 = vpop.trf.xlu0
    %v976 = vpop.trf.xlu0
    %v977 = vpop.trf.xlu0
    %v978 = vpop.trf.xlu0
    %v979 = vpack.c.bf16 %v964, %v963
    %v980 = vpack.c.bf16 %v452, %v451
    %v982 = vsel %vm527, %v979, 0
    %984 = vmatprep.subr.bf16.mxu0 0
    %985 = vmatpush1.bf16.msra.mxu0 0
    %986 = vmatprep.subr.bf16.mxu0 0
    %987 = vmatpush1.bf16.msra.mxu0 0
    %988 = vmatprep.subr.bf16.mxu0 0
    %989 = vmatpush1.bf16.msra.mxu0 0
    %990 = vmatprep.subr.bf16.mxu0 0
    %991 = vmatpush1.bf16.msra.mxu0 0
    %992 = vmatprep.subr.bf16.mxu0 0
    %993 = vmatpush1.bf16.msra.mxu0 0
    %994 = vmatprep.subr.bf16.mxu0 0
    %995 = vmatpush1.bf16.msra.mxu0 0
    %996 = vmatprep.subr.bf16.mxu0 0
    %997 = vmatpush1.bf16.msra.mxu0 0
    %998 = vmatprep.subr.bf16.mxu0 0
    %999 = vmatpush1.bf16.msra.mxu0 %v980
    %1000 = vmatprep.subr.bf16.mxu0 0
    %1001 = vmatpush2.bf16.msra.mxu0 0
    %1002 = vmatprep.subr.bf16.mxu0 0
    %1003 = vmatpush2.bf16.msra.mxu0 0
    %1004 = vmatprep.subr.bf16.mxu0 0
    %1005 = vmatpush2.bf16.msra.mxu0 0
    %1006 = vmatprep.subr.bf16.mxu0 0
    %1007 = vmatpush2.bf16.msra.mxu0 0
    %1008 = vmatprep.subr.bf16.mxu0 0
    %1009 = vmatpush2.bf16.msra.mxu0 0
    %1010 = vmatprep.subr.bf16.mxu0 0
    %1011 = vmatpush2.bf16.msra.mxu0 0
    %1012 = vmatprep.subr.bf16.mxu0 0
    %1013 = vmatpush2.bf16.msra.mxu0 0
    %1014 = vmatprep.subr.bf16.mxu0 0
    %1015 = vmatpush2.bf16.msra.mxu0 0
    %1016 = vmatprep.mubr.bf16.mxu0 0
    %1017 = vmatmul.mubr.bf16.gmra.mxu0 %v982
    %v1018 = vpop.f32.mrf.mxu0
    %v1019 = vadd.f32 0.0, %v1018
    %v1020 = vpop.f32.mrf.mxu0
    %v1021 = vpop.f32.mrf.mxu0
    %v1022 = vadd.f32 0.0, %v1021
    %v1023 = vpop.f32.mrf.mxu0
    %1024 = vdwg.mxu0
    %v1025 = vmul.f32 %v1019, 0.25
    %v1026 = vmul.f32 %v1022, 0.25
    %v1027 = vsel %vm527, %v1025, -inf
    %1028 = vmax.xlane.f32.xlu0 %v1027
    %v1029 = vpop.xlane.xlu0 %1028
    %v1030 = vsel %vm527, %v1026, -inf
    %1031 = vmax.xlane.f32.xlu0 %v1030
    %v1032 = vpop.xlane.xlu0 %1031
    %v1033 = vsub.f32 %v1025, %v1029
    %v1034 = vsub.f32 %v1026, %v1032
    %v1035 = vmul.f32 %v1033, 1.442695
    %v1036 = vpow.pop %v1035
    %v1037 = vmul.f32 %v1034, 1.442695
    %v1038 = vpow.pop %v1037
    %v1039 = vsel %vm527, %v1036, 0.0
    %1040 = vadd.xlane.f32.xlu0 %v1039
    %v1041 = vpop.xlane.xlu0 %1040
    %v1042 = vsel %vm527, %v1038, 0.0
    %1043 = vadd.xlane.f32.xlu0 %v1042
    %v1044 = vpop.xlane.xlu0 %1043
    %v1045 = vrcp.pop %v1041
    %v1046 = vmul.f32 %v1036, %v1045
    %v1047 = vrcp.pop %v1044
    %v1048 = vmul.f32 %v1038, %v1047
    %v1049 = vpack.c.bf16 %v484, %v483
    %v1050 = vpack.c.bf16 %v1048, %v1046
    %v1052 = vsel %vm527, %v1049, 0
    %v1055 = vsel %vm527, %v1050, 0
    %1057 = vmatprep.subr.bf16.mxu0 0
    %1058 = vmatpush1.bf16.xpose.msra.mxu0 0
    %1059 = vmatprep.subr.bf16.mxu0 0
    %1060 = vmatpush1.bf16.xpose.msra.mxu0 0
    %1061 = vmatprep.subr.bf16.mxu0 0
    %1062 = vmatpush1.bf16.xpose.msra.mxu0 0
    %1063 = vmatprep.subr.bf16.mxu0 0
    %1064 = vmatpush1.bf16.xpose.msra.mxu0 0
    %1065 = vmatprep.subr.bf16.mxu0 0
    %1066 = vmatpush1.bf16.xpose.msra.mxu0 0
    %1067 = vmatprep.subr.bf16.mxu0 0
    %1068 = vmatpush1.bf16.xpose.msra.mxu0 0
    %1069 = vmatprep.subr.bf16.mxu0 0
    %1070 = vmatpush1.bf16.xpose.msra.mxu0 0
    %1071 = vmatprep.subr.bf16.mxu0 0
    %1072 = vmatpush1.bf16.xpose.msra.mxu0 %v1055
    %1073 = vmatprep.subr.bf16.mxu0 0
    %1074 = vmatpush2.bf16.xpose.msra.mxu0 0
    %1075 = vmatprep.subr.bf16.mxu0 0
    %1076 = vmatpush2.bf16.xpose.msra.mxu0 0
    %1077 = vmatprep.subr.bf16.mxu0 0
    %1078 = vmatpush2.bf16.xpose.msra.mxu0 0
    %1079 = vmatprep.subr.bf16.mxu0 0
    %1080 = vmatpush2.bf16.xpose.msra.mxu0 0
    %1081 = vmatprep.subr.bf16.mxu0 0
    %1082 = vmatpush2.bf16.xpose.msra.mxu0 0
    %1083 = vmatprep.subr.bf16.mxu0 0
    %1084 = vmatpush2.bf16.xpose.msra.mxu0 0
    %1085 = vmatprep.subr.bf16.mxu0 0
    %1086 = vmatpush2.bf16.xpose.msra.mxu0 0
    %1087 = vmatprep.subr.bf16.mxu0 0
    %1088 = vmatpush2.bf16.xpose.msra.mxu0 0
    %1089 = vmatprep.mubr.bf16.mxu0 0
    %1090 = vmatmul.mubr.bf16.gmra.mxu0 %v1052
    %v1091 = vpop.f32.mrf.mxu0
    %v1092 = vadd.f32 0.0, %v1091
    %v1093 = vpop.f32.mrf.mxu0
    %v1094 = vpop.f32.mrf.mxu0
    %v1095 = vadd.f32 0.0, %v1094
    %v1096 = vpop.f32.mrf.mxu0
    %1097 = vdwg.mxu0
    %1098 = vxpose.xlu0.b32.start [1/16] %v421, 128
    %1099 = vxpose.xlu0.b32.cont [2/16] %v422, 128
    %1100 = vxpose.xlu0.b32.cont [3/16] 0.0, 128
    %1101 = vxpose.xlu0.b32.cont [4/16] 0.0, 128
    %1102 = vxpose.xlu0.b32.cont [5/16] 0.0, 128
    %1103 = vxpose.xlu0.b32.cont [6/16] 0.0, 128
    %1104 = vxpose.xlu0.b32.cont [7/16] 0.0, 128
    %1105 = vxpose.xlu0.b32.cont [8/16] 0.0, 128
    %1106 = vxpose.xlu0.b32.cont [9/16] 0.0, 128
    %1107 = vxpose.xlu0.b32.cont [10/16] 0.0, 128
    %1108 = vxpose.xlu0.b32.cont [11/16] 0.0, 128
    %1109 = vxpose.xlu0.b32.cont [12/16] 0.0, 128
    %1110 = vxpose.xlu0.b32.cont [13/16] 0.0, 128
    %1111 = vxpose.xlu0.b32.cont [14/16] 0.0, 128
    %1112 = vxpose.xlu0.b32.cont [15/16] 0.0, 128
    %1113 = vxpose.xlu0.b32.end [16/16] 0.0, 128
    %v1114 = vpop.trf.xlu0
    %v1115 = vpop.trf.xlu0
    %v1116 = vpop.trf.xlu0
    %v1117 = vpop.trf.xlu0
    %v1118 = vpop.trf.xlu0
    %v1119 = vpop.trf.xlu0
    %v1120 = vpop.trf.xlu0
    %v1121 = vpop.trf.xlu0
    %v1122 = vpop.trf.xlu0
    %v1123 = vpop.trf.xlu0
    %v1124 = vpop.trf.xlu0
    %v1125 = vpop.trf.xlu0
    %v1126 = vpop.trf.xlu0
    %v1127 = vpop.trf.xlu0
    %v1128 = vpop.trf.xlu0
    %v1129 = vpop.trf.xlu0
    %v1130 = vpack.c.bf16 %v1115, %v1114
    %v1131 = vpack.c.bf16 %v454, %v453
    %v1133 = vsel %vm527, %v1130, 0
    %1135 = vmatprep.subr.bf16.mxu0 0
    %1136 = vmatpush1.bf16.msra.mxu0 0
    %1137 = vmatprep.subr.bf16.mxu0 0
    %1138 = vmatpush1.bf16.msra.mxu0 0
    %1139 = vmatprep.subr.bf16.mxu0 0
    %1140 = vmatpush1.bf16.msra.mxu0 0
    %1141 = vmatprep.subr.bf16.mxu0 0
    %1142 = vmatpush1.bf16.msra.mxu0 0
    %1143 = vmatprep.subr.bf16.mxu0 0
    %1144 = vmatpush1.bf16.msra.mxu0 0
    %1145 = vmatprep.subr.bf16.mxu0 0
    %1146 = vmatpush1.bf16.msra.mxu0 0
    %1147 = vmatprep.subr.bf16.mxu0 0
    %1148 = vmatpush1.bf16.msra.mxu0 0
    %1149 = vmatprep.subr.bf16.mxu0 0
    %1150 = vmatpush1.bf16.msra.mxu0 %v1131
    %1151 = vmatprep.subr.bf16.mxu0 0
    %1152 = vmatpush2.bf16.msra.mxu0 0
    %1153 = vmatprep.subr.bf16.mxu0 0
    %1154 = vmatpush2.bf16.msra.mxu0 0
    %1155 = vmatprep.subr.bf16.mxu0 0
    %1156 = vmatpush2.bf16.msra.mxu0 0
    %1157 = vmatprep.subr.bf16.mxu0 0
    %1158 = vmatpush2.bf16.msra.mxu0 0
    %1159 = vmatprep.subr.bf16.mxu0 0
    %1160 = vmatpush2.bf16.msra.mxu0 0
    %1161 = vmatprep.subr.bf16.mxu0 0
    %1162 = vmatpush2.bf16.msra.mxu0 0
    %1163 = vmatprep.subr.bf16.mxu0 0
    %1164 = vmatpush2.bf16.msra.mxu0 0
    %1165 = vmatprep.subr.bf16.mxu0 0
    %1166 = vmatpush2.bf16.msra.mxu0 0
    %1167 = vmatprep.mubr.bf16.mxu0 0
    %1168 = vmatmul.mubr.bf16.gmra.mxu0 %v1133
    %v1169 = vpop.f32.mrf.mxu0
    %v1170 = vadd.f32 0.0, %v1169
    %v1171 = vpop.f32.mrf.mxu0
    %v1172 = vpop.f32.mrf.mxu0
    %v1173 = vadd.f32 0.0, %v1172
    %v1174 = vpop.f32.mrf.mxu0
    %1175 = vdwg.mxu0
    %v1176 = vmul.f32 %v1170, 0.25
    %v1177 = vmul.f32 %v1173, 0.25
    %v1178 = vsel %vm527, %v1176, -inf
    %1179 = vmax.xlane.f32.xlu0 %v1178
    %v1180 = vpop.xlane.xlu0 %1179
    %v1181 = vsel %vm527, %v1177, -inf
    %1182 = vmax.xlane.f32.xlu0 %v1181
    %v1183 = vpop.xlane.xlu0 %1182
    %v1184 = vsub.f32 %v1176, %v1180
    %v1185 = vsub.f32 %v1177, %v1183
    %v1186 = vmul.f32 %v1184, 1.442695
    %v1187 = vpow.pop %v1186
    %v1188 = vmul.f32 %v1185, 1.442695
    %v1189 = vpow.pop %v1188
    %v1190 = vsel %vm527, %v1187, 0.0
    %1191 = vadd.xlane.f32.xlu0 %v1190
    %v1192 = vpop.xlane.xlu0 %1191
    %v1193 = vsel %vm527, %v1189, 0.0
    %1194 = vadd.xlane.f32.xlu0 %v1193
    %v1195 = vpop.xlane.xlu0 %1194
    %v1196 = vrcp.pop %v1192
    %v1197 = vmul.f32 %v1187, %v1196
    %v1198 = vrcp.pop %v1195
    %v1199 = vmul.f32 %v1189, %v1198
    %v1200 = vpack.c.bf16 %v486, %v485
    %v1201 = vpack.c.bf16 %v1199, %v1197
    %v1203 = vsel %vm527, %v1200, 0
    %v1206 = vsel %vm527, %v1201, 0
    %1208 = vmatprep.subr.bf16.mxu0 0
    %1209 = vmatpush1.bf16.xpose.msra.mxu0 0
    %1210 = vmatprep.subr.bf16.mxu0 0
    %1211 = vmatpush1.bf16.xpose.msra.mxu0 0
    %1212 = vmatprep.subr.bf16.mxu0 0
    %1213 = vmatpush1.bf16.xpose.msra.mxu0 0
    %1214 = vmatprep.subr.bf16.mxu0 0
    %1215 = vmatpush1.bf16.xpose.msra.mxu0 0
    %1216 = vmatprep.subr.bf16.mxu0 0
    %1217 = vmatpush1.bf16.xpose.msra.mxu0 0
    %1218 = vmatprep.subr.bf16.mxu0 0
    %1219 = vmatpush1.bf16.xpose.msra.mxu0 0
    %1220 = vmatprep.subr.bf16.mxu0 0
    %1221 = vmatpush1.bf16.xpose.msra.mxu0 0
    %1222 = vmatprep.subr.bf16.mxu0 0
    %1223 = vmatpush1.bf16.xpose.msra.mxu0 %v1206
    %1224 = vmatprep.subr.bf16.mxu0 0
    %1225 = vmatpush2.bf16.xpose.msra.mxu0 0
    %1226 = vmatprep.subr.bf16.mxu0 0
    %1227 = vmatpush2.bf16.xpose.msra.mxu0 0
    %1228 = vmatprep.subr.bf16.mxu0 0
    %1229 = vmatpush2.bf16.xpose.msra.mxu0 0
    %1230 = vmatprep.subr.bf16.mxu0 0
    %1231 = vmatpush2.bf16.xpose.msra.mxu0 0
    %1232 = vmatprep.subr.bf16.mxu0 0
    %1233 = vmatpush2.bf16.xpose.msra.mxu0 0
    %1234 = vmatprep.subr.bf16.mxu0 0
    %1235 = vmatpush2.bf16.xpose.msra.mxu0 0
    %1236 = vmatprep.subr.bf16.mxu0 0
    %1237 = vmatpush2.bf16.xpose.msra.mxu0 0
    %1238 = vmatprep.subr.bf16.mxu0 0
    %1239 = vmatpush2.bf16.xpose.msra.mxu0 0
    %1240 = vmatprep.mubr.bf16.mxu0 0
    %1241 = vmatmul.mubr.bf16.gmra.mxu0 %v1203
    %v1242 = vpop.f32.mrf.mxu0
    %v1243 = vadd.f32 0.0, %v1242
    %v1244 = vpop.f32.mrf.mxu0
    %v1245 = vpop.f32.mrf.mxu0
    %v1246 = vadd.f32 0.0, %v1245
    %v1247 = vpop.f32.mrf.mxu0
    %1248 = vdwg.mxu0
    %1249 = vxpose.xlu0.b32.start [1/16] %v423, 128
    %1250 = vxpose.xlu0.b32.cont [2/16] %v424, 128
    %1251 = vxpose.xlu0.b32.cont [3/16] 0.0, 128
    %1252 = vxpose.xlu0.b32.cont [4/16] 0.0, 128
    %1253 = vxpose.xlu0.b32.cont [5/16] 0.0, 128
    %1254 = vxpose.xlu0.b32.cont [6/16] 0.0, 128
    %1255 = vxpose.xlu0.b32.cont [7/16] 0.0, 128
    %1256 = vxpose.xlu0.b32.cont [8/16] 0.0, 128
    %1257 = vxpose.xlu0.b32.cont [9/16] 0.0, 128
    %1258 = vxpose.xlu0.b32.cont [10/16] 0.0, 128
    %1259 = vxpose.xlu0.b32.cont [11/16] 0.0, 128
    %1260 = vxpose.xlu0.b32.cont [12/16] 0.0, 128
    %1261 = vxpose.xlu0.b32.cont [13/16] 0.0, 128
    %1262 = vxpose.xlu0.b32.cont [14/16] 0.0, 128
    %1263 = vxpose.xlu0.b32.cont [15/16] 0.0, 128
    %1264 = vxpose.xlu0.b32.end [16/16] 0.0, 128
    %v1265 = vpop.trf.xlu0
    %v1266 = vpop.trf.xlu0
    %v1267 = vpop.trf.xlu0
    %v1268 = vpop.trf.xlu0
    %v1269 = vpop.trf.xlu0
    %v1270 = vpop.trf.xlu0
    %v1271 = vpop.trf.xlu0
    %v1272 = vpop.trf.xlu0
    %v1273 = vpop.trf.xlu0
    %v1274 = vpop.trf.xlu0
    %v1275 = vpop.trf.xlu0
    %v1276 = vpop.trf.xlu0
    %v1277 = vpop.trf.xlu0
    %v1278 = vpop.trf.xlu0
    %v1279 = vpop.trf.xlu0
    %v1280 = vpop.trf.xlu0
    %v1281 = vpack.c.bf16 %v1266, %v1265
    %v1282 = vpack.c.bf16 %v456, %v455
    %v1284 = vsel %vm527, %v1281, 0
    %1286 = vmatprep.subr.bf16.mxu0 0
    %1287 = vmatpush1.bf16.msra.mxu0 0
    %1288 = vmatprep.subr.bf16.mxu0 0
    %1289 = vmatpush1.bf16.msra.mxu0 0
    %1290 = vmatprep.subr.bf16.mxu0 0
    %1291 = vmatpush1.bf16.msra.mxu0 0
    %1292 = vmatprep.subr.bf16.mxu0 0
    %1293 = vmatpush1.bf16.msra.mxu0 0
    %1294 = vmatprep.subr.bf16.mxu0 0
    %1295 = vmatpush1.bf16.msra.mxu0 0
    %1296 = vmatprep.subr.bf16.mxu0 0
    %1297 = vmatpush1.bf16.msra.mxu0 0
    %1298 = vmatprep.subr.bf16.mxu0 0
    %1299 = vmatpush1.bf16.msra.mxu0 0
    %1300 = vmatprep.subr.bf16.mxu0 0
    %1301 = vmatpush1.bf16.msra.mxu0 %v1282
    %1302 = vmatprep.subr.bf16.mxu0 0
    %1303 = vmatpush2.bf16.msra.mxu0 0
    %1304 = vmatprep.subr.bf16.mxu0 0
    %1305 = vmatpush2.bf16.msra.mxu0 0
    %1306 = vmatprep.subr.bf16.mxu0 0
    %1307 = vmatpush2.bf16.msra.mxu0 0
    %1308 = vmatprep.subr.bf16.mxu0 0
    %1309 = vmatpush2.bf16.msra.mxu0 0
    %1310 = vmatprep.subr.bf16.mxu0 0
    %1311 = vmatpush2.bf16.msra.mxu0 0
    %1312 = vmatprep.subr.bf16.mxu0 0
    %1313 = vmatpush2.bf16.msra.mxu0 0
    %1314 = vmatprep.subr.bf16.mxu0 0
    %1315 = vmatpush2.bf16.msra.mxu0 0
    %1316 = vmatprep.subr.bf16.mxu0 0
    %1317 = vmatpush2.bf16.msra.mxu0 0
    %1318 = vmatprep.mubr.bf16.mxu0 0
    %1319 = vmatmul.mubr.bf16.gmra.mxu0 %v1284
    %v1320 = vpop.f32.mrf.mxu0
    %v1321 = vadd.f32 0.0, %v1320
    %v1322 = vpop.f32.mrf.mxu0
    %v1323 = vpop.f32.mrf.mxu0
    %v1324 = vadd.f32 0.0, %v1323
    %v1325 = vpop.f32.mrf.mxu0
    %1326 = vdwg.mxu0
    %v1327 = vmul.f32 %v1321, 0.25
    %v1328 = vmul.f32 %v1324, 0.25
    %v1329 = vsel %vm527, %v1327, -inf
    %1330 = vmax.xlane.f32.xlu0 %v1329
    %v1331 = vpop.xlane.xlu0 %1330
    %v1332 = vsel %vm527, %v1328, -inf
    %1333 = vmax.xlane.f32.xlu0 %v1332
    %v1334 = vpop.xlane.xlu0 %1333
    %v1335 = vsub.f32 %v1327, %v1331
    %v1336 = vsub.f32 %v1328, %v1334
    %v1337 = vmul.f32 %v1335, 1.442695
    %v1338 = vpow.pop %v1337
    %v1339 = vmul.f32 %v1336, 1.442695
    %v1340 = vpow.pop %v1339
    %v1341 = vsel %vm527, %v1338, 0.0
    %1342 = vadd.xlane.f32.xlu0 %v1341
    %v1343 = vpop.xlane.xlu0 %1342
    %v1344 = vsel %vm527, %v1340, 0.0
    %1345 = vadd.xlane.f32.xlu0 %v1344
    %v1346 = vpop.xlane.xlu0 %1345
    %v1347 = vrcp.pop %v1343
    %v1348 = vmul.f32 %v1338, %v1347
    %v1349 = vrcp.pop %v1346
    %v1350 = vmul.f32 %v1340, %v1349
    %v1351 = vpack.c.bf16 %v488, %v487
    %v1352 = vpack.c.bf16 %v1350, %v1348
    %v1354 = vsel %vm527, %v1351, 0
    %v1357 = vsel %vm527, %v1352, 0
    %1359 = vmatprep.subr.bf16.mxu0 0
    %1360 = vmatpush1.bf16.xpose.msra.mxu0 0
    %1361 = vmatprep.subr.bf16.mxu0 0
    %1362 = vmatpush1.bf16.xpose.msra.mxu0 0
    %1363 = vmatprep.subr.bf16.mxu0 0
    %1364 = vmatpush1.bf16.xpose.msra.mxu0 0
    %1365 = vmatprep.subr.bf16.mxu0 0
    %1366 = vmatpush1.bf16.xpose.msra.mxu0 0
    %1367 = vmatprep.subr.bf16.mxu0 0
    %1368 = vmatpush1.bf16.xpose.msra.mxu0 0
    %1369 = vmatprep.subr.bf16.mxu0 0
    %1370 = vmatpush1.bf16.xpose.msra.mxu0 0
    %1371 = vmatprep.subr.bf16.mxu0 0
    %1372 = vmatpush1.bf16.xpose.msra.mxu0 0
    %1373 = vmatprep.subr.bf16.mxu0 0
    %1374 = vmatpush1.bf16.xpose.msra.mxu0 %v1357
    %1375 = vmatprep.subr.bf16.mxu0 0
    %1376 = vmatpush2.bf16.xpose.msra.mxu0 0
    %1377 = vmatprep.subr.bf16.mxu0 0
    %1378 = vmatpush2.bf16.xpose.msra.mxu0 0
    %1379 = vmatprep.subr.bf16.mxu0 0
    %1380 = vmatpush2.bf16.xpose.msra.mxu0 0
    %1381 = vmatprep.subr.bf16.mxu0 0
    %1382 = vmatpush2.bf16.xpose.msra.mxu0 0
    %1383 = vmatprep.subr.bf16.mxu0 0
    %1384 = vmatpush2.bf16.xpose.msra.mxu0 0
    %1385 = vmatprep.subr.bf16.mxu0 0
    %1386 = vmatpush2.bf16.xpose.msra.mxu0 0
    %1387 = vmatprep.subr.bf16.mxu0 0
    %1388 = vmatpush2.bf16.xpose.msra.mxu0 0
    %1389 = vmatprep.subr.bf16.mxu0 0
    %1390 = vmatpush2.bf16.xpose.msra.mxu0 0
    %1391 = vmatprep.mubr.bf16.mxu0 0
    %1392 = vmatmul.mubr.bf16.gmra.mxu0 %v1354
    %v1393 = vpop.f32.mrf.mxu0
    %v1394 = vadd.f32 0.0, %v1393
    %v1395 = vpop.f32.mrf.mxu0
    %v1396 = vpop.f32.mrf.mxu0
    %v1397 = vadd.f32 0.0, %v1396
    %v1398 = vpop.f32.mrf.mxu0
    %1399 = vdwg.mxu0
    %1400 = vxpose.xlu0.b32.start [1/16] %v425, 128
    %1401 = vxpose.xlu0.b32.cont [2/16] %v426, 128
    %1402 = vxpose.xlu0.b32.cont [3/16] 0.0, 128
    %1403 = vxpose.xlu0.b32.cont [4/16] 0.0, 128
    %1404 = vxpose.xlu0.b32.cont [5/16] 0.0, 128
    %1405 = vxpose.xlu0.b32.cont [6/16] 0.0, 128
    %1406 = vxpose.xlu0.b32.cont [7/16] 0.0, 128
    %1407 = vxpose.xlu0.b32.cont [8/16] 0.0, 128
    %1408 = vxpose.xlu0.b32.cont [9/16] 0.0, 128
    %1409 = vxpose.xlu0.b32.cont [10/16] 0.0, 128
    %1410 = vxpose.xlu0.b32.cont [11/16] 0.0, 128
    %1411 = vxpose.xlu0.b32.cont [12/16] 0.0, 128
    %1412 = vxpose.xlu0.b32.cont [13/16] 0.0, 128
    %1413 = vxpose.xlu0.b32.cont [14/16] 0.0, 128
    %1414 = vxpose.xlu0.b32.cont [15/16] 0.0, 128
    %1415 = vxpose.xlu0.b32.end [16/16] 0.0, 128
    %v1416 = vpop.trf.xlu0
    %v1417 = vpop.trf.xlu0
    %v1418 = vpop.trf.xlu0
    %v1419 = vpop.trf.xlu0
    %v1420 = vpop.trf.xlu0
    %v1421 = vpop.trf.xlu0
    %v1422 = vpop.trf.xlu0
    %v1423 = vpop.trf.xlu0
    %v1424 = vpop.trf.xlu0
    %v1425 = vpop.trf.xlu0
    %v1426 = vpop.trf.xlu0
    %v1427 = vpop.trf.xlu0
    %v1428 = vpop.trf.xlu0
    %v1429 = vpop.trf.xlu0
    %v1430 = vpop.trf.xlu0
    %v1431 = vpop.trf.xlu0
    %v1432 = vpack.c.bf16 %v1417, %v1416
    %v1433 = vpack.c.bf16 %v458, %v457
    %v1435 = vsel %vm527, %v1432, 0
    %1437 = vmatprep.subr.bf16.mxu0 0
    %1438 = vmatpush1.bf16.msra.mxu0 0
    %1439 = vmatprep.subr.bf16.mxu0 0
    %1440 = vmatpush1.bf16.msra.mxu0 0
    %1441 = vmatprep.subr.bf16.mxu0 0
    %1442 = vmatpush1.bf16.msra.mxu0 0
    %1443 = vmatprep.subr.bf16.mxu0 0
    %1444 = vmatpush1.bf16.msra.mxu0 0
    %1445 = vmatprep.subr.bf16.mxu0 0
    %1446 = vmatpush1.bf16.msra.mxu0 0
    %1447 = vmatprep.subr.bf16.mxu0 0
    %1448 = vmatpush1.bf16.msra.mxu0 0
    %1449 = vmatprep.subr.bf16.mxu0 0
    %1450 = vmatpush1.bf16.msra.mxu0 0
    %1451 = vmatprep.subr.bf16.mxu0 0
    %1452 = vmatpush1.bf16.msra.mxu0 %v1433
    %1453 = vmatprep.subr.bf16.mxu0 0
    %1454 = vmatpush2.bf16.msra.mxu0 0
    %1455 = vmatprep.subr.bf16.mxu0 0
    %1456 = vmatpush2.bf16.msra.mxu0 0
    %1457 = vmatprep.subr.bf16.mxu0 0
    %1458 = vmatpush2.bf16.msra.mxu0 0
    %1459 = vmatprep.subr.bf16.mxu0 0
    %1460 = vmatpush2.bf16.msra.mxu0 0
    %1461 = vmatprep.subr.bf16.mxu0 0
    %1462 = vmatpush2.bf16.msra.mxu0 0
    %1463 = vmatprep.subr.bf16.mxu0 0
    %1464 = vmatpush2.bf16.msra.mxu0 0
    %1465 = vmatprep.subr.bf16.mxu0 0
    %1466 = vmatpush2.bf16.msra.mxu0 0
    %1467 = vmatprep.subr.bf16.mxu0 0
    %1468 = vmatpush2.bf16.msra.mxu0 0
    %1469 = vmatprep.mubr.bf16.mxu0 0
    %1470 = vmatmul.mubr.bf16.gmra.mxu0 %v1435
    %v1471 = vpop.f32.mrf.mxu0
    %v1472 = vadd.f32 0.0, %v1471
    %v1473 = vpop.f32.mrf.mxu0
    %v1474 = vpop.f32.mrf.mxu0
    %v1475 = vadd.f32 0.0, %v1474
    %v1476 = vpop.f32.mrf.mxu0
    %1477 = vdwg.mxu0
    %v1478 = vmul.f32 %v1472, 0.25
    %v1479 = vmul.f32 %v1475, 0.25
    %v1480 = vsel %vm527, %v1478, -inf
    %1481 = vmax.xlane.f32.xlu0 %v1480
    %v1482 = vpop.xlane.xlu0 %1481
    %v1483 = vsel %vm527, %v1479, -inf
    %1484 = vmax.xlane.f32.xlu0 %v1483
    %v1485 = vpop.xlane.xlu0 %1484
    %v1486 = vsub.f32 %v1478, %v1482
    %v1487 = vsub.f32 %v1479, %v1485
    %v1488 = vmul.f32 %v1486, 1.442695
    %v1489 = vpow.pop %v1488
    %v1490 = vmul.f32 %v1487, 1.442695
    %v1491 = vpow.pop %v1490
    %v1492 = vsel %vm527, %v1489, 0.0
    %1493 = vadd.xlane.f32.xlu0 %v1492
    %v1494 = vpop.xlane.xlu0 %1493
    %v1495 = vsel %vm527, %v1491, 0.0
    %1496 = vadd.xlane.f32.xlu0 %v1495
    %v1497 = vpop.xlane.xlu0 %1496
    %v1498 = vrcp.pop %v1494
    %v1499 = vmul.f32 %v1489, %v1498
    %v1500 = vrcp.pop %v1497
    %v1501 = vmul.f32 %v1491, %v1500
    %v1502 = vpack.c.bf16 %v490, %v489
    %v1503 = vpack.c.bf16 %v1501, %v1499
    %v1505 = vsel %vm527, %v1502, 0
    %v1508 = vsel %vm527, %v1503, 0
    %1510 = vmatprep.subr.bf16.mxu0 0
    %1511 = vmatpush1.bf16.xpose.msra.mxu0 0
    %1512 = vmatprep.subr.bf16.mxu0 0
    %1513 = vmatpush1.bf16.xpose.msra.mxu0 0
    %1514 = vmatprep.subr.bf16.mxu0 0
    %1515 = vmatpush1.bf16.xpose.msra.mxu0 0
    %1516 = vmatprep.subr.bf16.mxu0 0
    %1517 = vmatpush1.bf16.xpose.msra.mxu0 0
    %1518 = vmatprep.subr.bf16.mxu0 0
    %1519 = vmatpush1.bf16.xpose.msra.mxu0 0
    %1520 = vmatprep.subr.bf16.mxu0 0
    %1521 = vmatpush1.bf16.xpose.msra.mxu0 0
    %1522 = vmatprep.subr.bf16.mxu0 0
    %1523 = vmatpush1.bf16.xpose.msra.mxu0 0
    %1524 = vmatprep.subr.bf16.mxu0 0
    %1525 = vmatpush1.bf16.xpose.msra.mxu0 %v1508
    %1526 = vmatprep.subr.bf16.mxu0 0
    %1527 = vmatpush2.bf16.xpose.msra.mxu0 0
    %1528 = vmatprep.subr.bf16.mxu0 0
    %1529 = vmatpush2.bf16.xpose.msra.mxu0 0
    %1530 = vmatprep.subr.bf16.mxu0 0
    %1531 = vmatpush2.bf16.xpose.msra.mxu0 0
    %1532 = vmatprep.subr.bf16.mxu0 0
    %1533 = vmatpush2.bf16.xpose.msra.mxu0 0
    %1534 = vmatprep.subr.bf16.mxu0 0
    %1535 = vmatpush2.bf16.xpose.msra.mxu0 0
    %1536 = vmatprep.subr.bf16.mxu0 0
    %1537 = vmatpush2.bf16.xpose.msra.mxu0 0
    %1538 = vmatprep.subr.bf16.mxu0 0
    %1539 = vmatpush2.bf16.xpose.msra.mxu0 0
    %1540 = vmatprep.subr.bf16.mxu0 0
    %1541 = vmatpush2.bf16.xpose.msra.mxu0 0
    %1542 = vmatprep.mubr.bf16.mxu0 0
    %1543 = vmatmul.mubr.bf16.gmra.mxu0 %v1505
    %v1544 = vpop.f32.mrf.mxu0
    %v1545 = vadd.f32 0.0, %v1544
    %v1546 = vpop.f32.mrf.mxu0
    %v1547 = vpop.f32.mrf.mxu0
    %v1548 = vadd.f32 0.0, %v1547
    %v1549 = vpop.f32.mrf.mxu0
    %1550 = vdwg.mxu0
    %1551 = vxpose.xlu0.b32.start [1/16] %v427, 128
    %1552 = vxpose.xlu0.b32.cont [2/16] %v428, 128
    %1553 = vxpose.xlu0.b32.cont [3/16] 0.0, 128
    %1554 = vxpose.xlu0.b32.cont [4/16] 0.0, 128
    %1555 = vxpose.xlu0.b32.cont [5/16] 0.0, 128
    %1556 = vxpose.xlu0.b32.cont [6/16] 0.0, 128
    %1557 = vxpose.xlu0.b32.cont [7/16] 0.0, 128
    %1558 = vxpose.xlu0.b32.cont [8/16] 0.0, 128
    %1559 = vxpose.xlu0.b32.cont [9/16] 0.0, 128
    %1560 = vxpose.xlu0.b32.cont [10/16] 0.0, 128
    %1561 = vxpose.xlu0.b32.cont [11/16] 0.0, 128
    %1562 = vxpose.xlu0.b32.cont [12/16] 0.0, 128
    %1563 = vxpose.xlu0.b32.cont [13/16] 0.0, 128
    %1564 = vxpose.xlu0.b32.cont [14/16] 0.0, 128
    %1565 = vxpose.xlu0.b32.cont [15/16] 0.0, 128
    %1566 = vxpose.xlu0.b32.end [16/16] 0.0, 128
    %v1567 = vpop.trf.xlu0
    %v1568 = vpop.trf.xlu0
    %v1569 = vpop.trf.xlu0
    %v1570 = vpop.trf.xlu0
    %v1571 = vpop.trf.xlu0
    %v1572 = vpop.trf.xlu0
    %v1573 = vpop.trf.xlu0
    %v1574 = vpop.trf.xlu0
    %v1575 = vpop.trf.xlu0
    %v1576 = vpop.trf.xlu0
    %v1577 = vpop.trf.xlu0
    %v1578 = vpop.trf.xlu0
    %v1579 = vpop.trf.xlu0
    %v1580 = vpop.trf.xlu0
    %v1581 = vpop.trf.xlu0
    %v1582 = vpop.trf.xlu0
    %v1583 = vpack.c.bf16 %v1568, %v1567
    %v1584 = vpack.c.bf16 %v460, %v459
    %v1586 = vsel %vm527, %v1583, 0
    %1588 = vmatprep.subr.bf16.mxu0 0
    %1589 = vmatpush1.bf16.msra.mxu0 0
    %1590 = vmatprep.subr.bf16.mxu0 0
    %1591 = vmatpush1.bf16.msra.mxu0 0
    %1592 = vmatprep.subr.bf16.mxu0 0
    %1593 = vmatpush1.bf16.msra.mxu0 0
    %1594 = vmatprep.subr.bf16.mxu0 0
    %1595 = vmatpush1.bf16.msra.mxu0 0
    %1596 = vmatprep.subr.bf16.mxu0 0
    %1597 = vmatpush1.bf16.msra.mxu0 0
    %1598 = vmatprep.subr.bf16.mxu0 0
    %1599 = vmatpush1.bf16.msra.mxu0 0
    %1600 = vmatprep.subr.bf16.mxu0 0
    %1601 = vmatpush1.bf16.msra.mxu0 0
    %1602 = vmatprep.subr.bf16.mxu0 0
    %1603 = vmatpush1.bf16.msra.mxu0 %v1584
    %1604 = vmatprep.subr.bf16.mxu0 0
    %1605 = vmatpush2.bf16.msra.mxu0 0
    %1606 = vmatprep.subr.bf16.mxu0 0
    %1607 = vmatpush2.bf16.msra.mxu0 0
    %1608 = vmatprep.subr.bf16.mxu0 0
    %1609 = vmatpush2.bf16.msra.mxu0 0
    %1610 = vmatprep.subr.bf16.mxu0 0
    %1611 = vmatpush2.bf16.msra.mxu0 0
    %1612 = vmatprep.subr.bf16.mxu0 0
    %1613 = vmatpush2.bf16.msra.mxu0 0
    %1614 = vmatprep.subr.bf16.mxu0 0
    %1615 = vmatpush2.bf16.msra.mxu0 0
    %1616 = vmatprep.subr.bf16.mxu0 0
    %1617 = vmatpush2.bf16.msra.mxu0 0
    %1618 = vmatprep.subr.bf16.mxu0 0
    %1619 = vmatpush2.bf16.msra.mxu0 0
    %1620 = vmatprep.mubr.bf16.mxu0 0
    %1621 = vmatmul.mubr.bf16.gmra.mxu0 %v1586
    %v1622 = vpop.f32.mrf.mxu0
    %v1623 = vadd.f32 0.0, %v1622
    %v1624 = vpop.f32.mrf.mxu0
    %v1625 = vpop.f32.mrf.mxu0
    %v1626 = vadd.f32 0.0, %v1625
    %v1627 = vpop.f32.mrf.mxu0
    %1628 = vdwg.mxu0
    %v1629 = vmul.f32 %v1623, 0.25
    %v1630 = vmul.f32 %v1626, 0.25
    %v1631 = vsel %vm527, %v1629, -inf
    %1632 = vmax.xlane.f32.xlu0 %v1631
    %v1633 = vpop.xlane.xlu0 %1632
    %v1634 = vsel %vm527, %v1630, -inf
    %1635 = vmax.xlane.f32.xlu0 %v1634
    %v1636 = vpop.xlane.xlu0 %1635
    %v1637 = vsub.f32 %v1629, %v1633
    %v1638 = vsub.f32 %v1630, %v1636
    %v1639 = vmul.f32 %v1637, 1.442695
    %v1640 = vpow.pop %v1639
    %v1641 = vmul.f32 %v1638, 1.442695
    %v1642 = vpow.pop %v1641
    %v1643 = vsel %vm527, %v1640, 0.0
    %1644 = vadd.xlane.f32.xlu0 %v1643
    %v1645 = vpop.xlane.xlu0 %1644
    %v1646 = vsel %vm527, %v1642, 0.0
    %1647 = vadd.xlane.f32.xlu0 %v1646
    %v1648 = vpop.xlane.xlu0 %1647
    %v1649 = vrcp.pop %v1645
    %v1650 = vmul.f32 %v1640, %v1649
    %v1651 = vrcp.pop %v1648
    %v1652 = vmul.f32 %v1642, %v1651
    %v1653 = vpack.c.bf16 %v492, %v491
    %v1654 = vpack.c.bf16 %v1652, %v1650
    %v1656 = vsel %vm527, %v1653, 0
    %v1659 = vsel %vm527, %v1654, 0
    %1661 = vmatprep.subr.bf16.mxu0 0
    %1662 = vmatpush1.bf16.xpose.msra.mxu0 0
    %1663 = vmatprep.subr.bf16.mxu0 0
    %1664 = vmatpush1.bf16.xpose.msra.mxu0 0
    %1665 = vmatprep.subr.bf16.mxu0 0
    %1666 = vmatpush1.bf16.xpose.msra.mxu0 0
    %1667 = vmatprep.subr.bf16.mxu0 0
    %1668 = vmatpush1.bf16.xpose.msra.mxu0 0
    %1669 = vmatprep.subr.bf16.mxu0 0
    %1670 = vmatpush1.bf16.xpose.msra.mxu0 0
    %1671 = vmatprep.subr.bf16.mxu0 0
    %1672 = vmatpush1.bf16.xpose.msra.mxu0 0
    %1673 = vmatprep.subr.bf16.mxu0 0
    %1674 = vmatpush1.bf16.xpose.msra.mxu0 0
    %1675 = vmatprep.subr.bf16.mxu0 0
    %1676 = vmatpush1.bf16.xpose.msra.mxu0 %v1659
    %1677 = vmatprep.subr.bf16.mxu0 0
    %1678 = vmatpush2.bf16.xpose.msra.mxu0 0
    %1679 = vmatprep.subr.bf16.mxu0 0
    %1680 = vmatpush2.bf16.xpose.msra.mxu0 0
    %1681 = vmatprep.subr.bf16.mxu0 0
    %1682 = vmatpush2.bf16.xpose.msra.mxu0 0
    %1683 = vmatprep.subr.bf16.mxu0 0
    %1684 = vmatpush2.bf16.xpose.msra.mxu0 0
    %1685 = vmatprep.subr.bf16.mxu0 0
    %1686 = vmatpush2.bf16.xpose.msra.mxu0 0
    %1687 = vmatprep.subr.bf16.mxu0 0
    %1688 = vmatpush2.bf16.xpose.msra.mxu0 0
    %1689 = vmatprep.subr.bf16.mxu0 0
    %1690 = vmatpush2.bf16.xpose.msra.mxu0 0
    %1691 = vmatprep.subr.bf16.mxu0 0
    %1692 = vmatpush2.bf16.xpose.msra.mxu0 0
    %1693 = vmatprep.mubr.bf16.mxu0 0
    %1694 = vmatmul.mubr.bf16.gmra.mxu0 %v1656
    %v1695 = vpop.f32.mrf.mxu0
    %v1696 = vadd.f32 0.0, %v1695
    %v1697 = vpop.f32.mrf.mxu0
    %v1698 = vpop.f32.mrf.mxu0
    %v1699 = vadd.f32 0.0, %v1698
    %v1700 = vpop.f32.mrf.mxu0
    %1701 = vdwg.mxu0
    %1702 = vxpose.xlu0.b32.start [1/16] %v639, 128
    %1703 = vxpose.xlu0.b32.cont [2/16] %v642, 128
    %1704 = vxpose.xlu0.b32.cont [3/16] %v790, 128
    %1705 = vxpose.xlu0.b32.cont [4/16] %v793, 128
    %1706 = vxpose.xlu0.b32.cont [5/16] %v941, 128
    %1707 = vxpose.xlu0.b32.cont [6/16] %v944, 128
    %1708 = vxpose.xlu0.b32.cont [7/16] %v1092, 128
    %1709 = vxpose.xlu0.b32.cont [8/16] %v1095, 128
    %1710 = vxpose.xlu0.b32.cont [9/16] %v1243, 128
    %1711 = vxpose.xlu0.b32.cont [10/16] %v1246, 128
    %1712 = vxpose.xlu0.b32.cont [11/16] %v1394, 128
    %1713 = vxpose.xlu0.b32.cont [12/16] %v1397, 128
    %1714 = vxpose.xlu0.b32.cont [13/16] %v1545, 128
    %1715 = vxpose.xlu0.b32.cont [14/16] %v1548, 128
    %1716 = vxpose.xlu0.b32.cont [15/16] %v1696, 128
    %1717 = vxpose.xlu0.b32.end [16/16] %v1699, 128
    %v1718 = vpop.trf.xlu0
    %v1719 = vpop.trf.xlu0
    %v1720 = vpop.trf.xlu0
    %v1721 = vpop.trf.xlu0
    %v1722 = vpop.trf.xlu0
    %v1723 = vpop.trf.xlu0
    %v1724 = vpop.trf.xlu0
    %v1725 = vpop.trf.xlu0
    %v1726 = vpop.trf.xlu0
    %v1727 = vpop.trf.xlu0
    %v1728 = vpop.trf.xlu0
    %v1729 = vpop.trf.xlu0
    %v1730 = vpop.trf.xlu0
    %v1731 = vpop.trf.xlu0
    %v1732 = vpop.trf.xlu0
    %v1733 = vpop.trf.xlu0
    %1734 = vxpose.xlu0.b32.start [1/16] %v340, 128
    %1735 = vxpose.xlu0.b32.cont [2/16] %v344, 128
    %1736 = vxpose.xlu0.b32.cont [3/16] 0.0, 128
    %1737 = vxpose.xlu0.b32.cont [4/16] 0.0, 128
    %1738 = vxpose.xlu0.b32.cont [5/16] 0.0, 128
    %1739 = vxpose.xlu0.b32.cont [6/16] 0.0, 128
    %1740 = vxpose.xlu0.b32.cont [7/16] 0.0, 128
    %1741 = vxpose.xlu0.b32.cont [8/16] 0.0, 128
    %1742 = vxpose.xlu0.b32.cont [9/16] 0.0, 128
    %1743 = vxpose.xlu0.b32.cont [10/16] 0.0, 128
    %1744 = vxpose.xlu0.b32.cont [11/16] 0.0, 128
    %1745 = vxpose.xlu0.b32.cont [12/16] 0.0, 128
    %1746 = vxpose.xlu0.b32.cont [13/16] 0.0, 128
    %1747 = vxpose.xlu0.b32.cont [14/16] 0.0, 128
    %1748 = vxpose.xlu0.b32.cont [15/16] 0.0, 128
    %1749 = vxpose.xlu0.b32.end [16/16] 0.0, 128
    %v1750 = vpop.trf.xlu0
    %v1751 = vpop.trf.xlu0
    %v1752 = vpop.trf.xlu0
    %v1753 = vpop.trf.xlu0
    %v1754 = vpop.trf.xlu0
    %v1755 = vpop.trf.xlu0
    %v1756 = vpop.trf.xlu0
    %v1757 = vpop.trf.xlu0
    %v1758 = vpop.trf.xlu0
    %v1759 = vpop.trf.xlu0
    %v1760 = vpop.trf.xlu0
    %v1761 = vpop.trf.xlu0
    %v1762 = vpop.trf.xlu0
    %v1763 = vpop.trf.xlu0
    %v1764 = vpop.trf.xlu0
    %v1765 = vpop.trf.xlu0
    %1766 = vxpose.xlu0.b32.start [1/16] %v342, 128
    %1767 = vxpose.xlu0.b32.cont [2/16] %v346, 128
    %1768 = vxpose.xlu0.b32.cont [3/16] 0.0, 128
    %1769 = vxpose.xlu0.b32.cont [4/16] 0.0, 128
    %1770 = vxpose.xlu0.b32.cont [5/16] 0.0, 128
    %1771 = vxpose.xlu0.b32.cont [6/16] 0.0, 128
    %1772 = vxpose.xlu0.b32.cont [7/16] 0.0, 128
    %1773 = vxpose.xlu0.b32.cont [8/16] 0.0, 128
    %1774 = vxpose.xlu0.b32.cont [9/16] 0.0, 128
    %1775 = vxpose.xlu0.b32.cont [10/16] 0.0, 128
    %1776 = vxpose.xlu0.b32.cont [11/16] 0.0, 128
    %1777 = vxpose.xlu0.b32.cont [12/16] 0.0, 128
    %1778 = vxpose.xlu0.b32.cont [13/16] 0.0, 128
    %1779 = vxpose.xlu0.b32.cont [14/16] 0.0, 128
    %1780 = vxpose.xlu0.b32.cont [15/16] 0.0, 128
    %1781 = vxpose.xlu0.b32.end [16/16] 0.0, 128
    %v1782 = vpop.trf.xlu0
    %v1783 = vpop.trf.xlu0
    %v1784 = vpop.trf.xlu0
    %v1785 = vpop.trf.xlu0
    %v1786 = vpop.trf.xlu0
    %v1787 = vpop.trf.xlu0
    %v1788 = vpop.trf.xlu0
    %v1789 = vpop.trf.xlu0
    %v1790 = vpop.trf.xlu0
    %v1791 = vpop.trf.xlu0
    %v1792 = vpop.trf.xlu0
    %v1793 = vpop.trf.xlu0
    %v1794 = vpop.trf.xlu0
    %v1795 = vpop.trf.xlu0
    %v1796 = vpop.trf.xlu0
    %v1797 = vpop.trf.xlu0
    %1798 = vxpose.xlu0.b32.start [1/16] %v391, 128
    %1799 = vxpose.xlu0.b32.cont [2/16] %v394, 128
    %1800 = vxpose.xlu0.b32.cont [3/16] 0.0, 128
    %1801 = vxpose.xlu0.b32.cont [4/16] 0.0, 128
    %1802 = vxpose.xlu0.b32.cont [5/16] 0.0, 128
    %1803 = vxpose.xlu0.b32.cont [6/16] 0.0, 128
    %1804 = vxpose.xlu0.b32.cont [7/16] 0.0, 128
    %1805 = vxpose.xlu0.b32.cont [8/16] 0.0, 128
    %1806 = vxpose.xlu0.b32.cont [9/16] 0.0, 128
    %1807 = vxpose.xlu0.b32.cont [10/16] 0.0, 128
    %1808 = vxpose.xlu0.b32.cont [11/16] 0.0, 128
    %1809 = vxpose.xlu0.b32.cont [12/16] 0.0, 128
    %1810 = vxpose.xlu0.b32.cont [13/16] 0.0, 128
    %1811 = vxpose.xlu0.b32.cont [14/16] 0.0, 128
    %1812 = vxpose.xlu0.b32.cont [15/16] 0.0, 128
    %1813 = vxpose.xlu0.b32.end [16/16] 0.0, 128
    %v1814 = vpop.trf.xlu0
    %v1815 = vpop.trf.xlu0
    %v1816 = vpop.trf.xlu0
    %v1817 = vpop.trf.xlu0
    %v1818 = vpop.trf.xlu0
    %v1819 = vpop.trf.xlu0
    %v1820 = vpop.trf.xlu0
    %v1821 = vpop.trf.xlu0
    %v1822 = vpop.trf.xlu0
    %v1823 = vpop.trf.xlu0
    %v1824 = vpop.trf.xlu0
    %v1825 = vpop.trf.xlu0
    %v1826 = vpop.trf.xlu0
    %v1827 = vpop.trf.xlu0
    %v1828 = vpop.trf.xlu0
    %v1829 = vpop.trf.xlu0
    %1830 = vxpose.xlu0.b32.start [1/16] %v1750, 128
    %1831 = vxpose.xlu0.b32.cont [2/16] %v1751, 128
    %1832 = vxpose.xlu0.b32.cont [3/16] 0.0, 128
    %1833 = vxpose.xlu0.b32.cont [4/16] 0.0, 128
    %1834 = vxpose.xlu0.b32.cont [5/16] 0.0, 128
    %1835 = vxpose.xlu0.b32.cont [6/16] 0.0, 128
    %1836 = vxpose.xlu0.b32.cont [7/16] 0.0, 128
    %1837 = vxpose.xlu0.b32.cont [8/16] 0.0, 128
    %1838 = vxpose.xlu0.b32.cont [9/16] 0.0, 128
    %1839 = vxpose.xlu0.b32.cont [10/16] 0.0, 128
    %1840 = vxpose.xlu0.b32.cont [11/16] 0.0, 128
    %1841 = vxpose.xlu0.b32.cont [12/16] 0.0, 128
    %1842 = vxpose.xlu0.b32.cont [13/16] 0.0, 128
    %1843 = vxpose.xlu0.b32.cont [14/16] 0.0, 128
    %1844 = vxpose.xlu0.b32.cont [15/16] 0.0, 128
    %1845 = vxpose.xlu0.b32.end [16/16] 0.0, 128
    %v1846 = vpop.trf.xlu0
    %v1847 = vpop.trf.xlu0
    %v1848 = vpop.trf.xlu0
    %v1849 = vpop.trf.xlu0
    %v1850 = vpop.trf.xlu0
    %v1851 = vpop.trf.xlu0
    %v1852 = vpop.trf.xlu0
    %v1853 = vpop.trf.xlu0
    %v1854 = vpop.trf.xlu0
    %v1855 = vpop.trf.xlu0
    %v1856 = vpop.trf.xlu0
    %v1857 = vpop.trf.xlu0
    %v1858 = vpop.trf.xlu0
    %v1859 = vpop.trf.xlu0
    %v1860 = vpop.trf.xlu0
    %v1861 = vpop.trf.xlu0
    %v1862 = vpack.c.bf16 %v1847, %v1846
    %v1863 = vpack.c.bf16 %v1783, %v1782
    %v1865 = vsel %vm527, %v1862, 0
    %1867 = vmatprep.subr.bf16.mxu0 0
    %1868 = vmatpush1.bf16.msra.mxu0 0
    %1869 = vmatprep.subr.bf16.mxu0 0
    %1870 = vmatpush1.bf16.msra.mxu0 0
    %1871 = vmatprep.subr.bf16.mxu0 0
    %1872 = vmatpush1.bf16.msra.mxu0 0
    %1873 = vmatprep.subr.bf16.mxu0 0
    %1874 = vmatpush1.bf16.msra.mxu0 0
    %1875 = vmatprep.subr.bf16.mxu0 0
    %1876 = vmatpush1.bf16.msra.mxu0 0
    %1877 = vmatprep.subr.bf16.mxu0 0
    %1878 = vmatpush1.bf16.msra.mxu0 0
    %1879 = vmatprep.subr.bf16.mxu0 0
    %1880 = vmatpush1.bf16.msra.mxu0 0
    %1881 = vmatprep.subr.bf16.mxu0 0
    %1882 = vmatpush1.bf16.msra.mxu0 %v1863
    %1883 = vmatprep.subr.bf16.mxu0 0
    %1884 = vmatpush2.bf16.msra.mxu0 0
    %1885 = vmatprep.subr.bf16.mxu0 0
    %1886 = vmatpush2.bf16.msra.mxu0 0
    %1887 = vmatprep.subr.bf16.mxu0 0
    %1888 = vmatpush2.bf16.msra.mxu0 0
    %1889 = vmatprep.subr.bf16.mxu0 0
    %1890 = vmatpush2.bf16.msra.mxu0 0
    %1891 = vmatprep.subr.bf16.mxu0 0
    %1892 = vmatpush2.bf16.msra.mxu0 0
    %1893 = vmatprep.subr.bf16.mxu0 0
    %1894 = vmatpush2.bf16.msra.mxu0 0
    %1895 = vmatprep.subr.bf16.mxu0 0
    %1896 = vmatpush2.bf16.msra.mxu0 0
    %1897 = vmatprep.subr.bf16.mxu0 0
    %1898 = vmatpush2.bf16.msra.mxu0 0
    %1899 = vmatprep.mubr.bf16.mxu0 0
    %1900 = vmatmul.mubr.bf16.gmra.mxu0 %v1865
    %v1901 = vpop.f32.mrf.mxu0
    %v1902 = vadd.f32 0.0, %v1901
    %v1903 = vpop.f32.mrf.mxu0
    %v1904 = vpop.f32.mrf.mxu0
    %v1905 = vadd.f32 0.0, %v1904
    %v1906 = vpop.f32.mrf.mxu0
    %1907 = vdwg.mxu0
    %v1908 = vmul.f32 %v1902, 0.25
    %v1909 = vmul.f32 %v1905, 0.25
    %v1910 = vsel %vm527, %v1908, -inf
    %1911 = vmax.xlane.f32.xlu0 %v1910
    %v1912 = vpop.xlane.xlu0 %1911
    %v1913 = vsel %vm527, %v1909, -inf
    %1914 = vmax.xlane.f32.xlu0 %v1913
    %v1915 = vpop.xlane.xlu0 %1914
    %v1916 = vsub.f32 %v1908, %v1912
    %v1917 = vsub.f32 %v1909, %v1915
    %v1918 = vmul.f32 %v1916, 1.442695
    %v1919 = vpow.pop %v1918
    %v1920 = vmul.f32 %v1917, 1.442695
    %v1921 = vpow.pop %v1920
    %v1922 = vsel %vm527, %v1919, 0.0
    %1923 = vadd.xlane.f32.xlu0 %v1922
    %v1924 = vpop.xlane.xlu0 %1923
    %v1925 = vsel %vm527, %v1921, 0.0
    %1926 = vadd.xlane.f32.xlu0 %v1925
    %v1927 = vpop.xlane.xlu0 %1926
    %v1928 = vrcp.pop %v1924
    %v1929 = vmul.f32 %v1919, %v1928
    %v1930 = vrcp.pop %v1927
    %v1931 = vmul.f32 %v1921, %v1930
    %v1932 = vpack.c.bf16 %v1815, %v1814
    %v1933 = vpack.c.bf16 %v1931, %v1929
    %v1935 = vsel %vm527, %v1932, 0
    %v1938 = vsel %vm527, %v1933, 0
    %1940 = vmatprep.subr.bf16.mxu0 0
    %1941 = vmatpush1.bf16.xpose.msra.mxu0 0
    %1942 = vmatprep.subr.bf16.mxu0 0
    %1943 = vmatpush1.bf16.xpose.msra.mxu0 0
    %1944 = vmatprep.subr.bf16.mxu0 0
    %1945 = vmatpush1.bf16.xpose.msra.mxu0 0
    %1946 = vmatprep.subr.bf16.mxu0 0
    %1947 = vmatpush1.bf16.xpose.msra.mxu0 0
    %1948 = vmatprep.subr.bf16.mxu0 0
    %1949 = vmatpush1.bf16.xpose.msra.mxu0 0
    %1950 = vmatprep.subr.bf16.mxu0 0
    %1951 = vmatpush1.bf16.xpose.msra.mxu0 0
    %1952 = vmatprep.subr.bf16.mxu0 0
    %1953 = vmatpush1.bf16.xpose.msra.mxu0 0
    %1954 = vmatprep.subr.bf16.mxu0 0
    %1955 = vmatpush1.bf16.xpose.msra.mxu0 %v1938
    %1956 = vmatprep.subr.bf16.mxu0 0
    %1957 = vmatpush2.bf16.xpose.msra.mxu0 0
    %1958 = vmatprep.subr.bf16.mxu0 0
    %1959 = vmatpush2.bf16.xpose.msra.mxu0 0
    %1960 = vmatprep.subr.bf16.mxu0 0
    %1961 = vmatpush2.bf16.xpose.msra.mxu0 0
    %1962 = vmatprep.subr.bf16.mxu0 0
    %1963 = vmatpush2.bf16.xpose.msra.mxu0 0
    %1964 = vmatprep.subr.bf16.mxu0 0
    %1965 = vmatpush2.bf16.xpose.msra.mxu0 0
    %1966 = vmatprep.subr.bf16.mxu0 0
    %1967 = vmatpush2.bf16.xpose.msra.mxu0 0
    %1968 = vmatprep.subr.bf16.mxu0 0
    %1969 = vmatpush2.bf16.xpose.msra.mxu0 0
    %1970 = vmatprep.subr.bf16.mxu0 0
    %1971 = vmatpush2.bf16.xpose.msra.mxu0 0
    %1972 = vmatprep.mubr.bf16.mxu0 0
    %1973 = vmatmul.mubr.bf16.gmra.mxu0 %v1935
    %v1974 = vpop.f32.mrf.mxu0
    %v1975 = vadd.f32 0.0, %v1974
    %v1976 = vpop.f32.mrf.mxu0
    %v1977 = vpop.f32.mrf.mxu0
    %v1978 = vadd.f32 0.0, %v1977
    %v1979 = vpop.f32.mrf.mxu0
    %1980 = vdwg.mxu0
    %1981 = vxpose.xlu0.b32.start [1/16] %v1752, 128
    %1982 = vxpose.xlu0.b32.cont [2/16] %v1753, 128
    %1983 = vxpose.xlu0.b32.cont [3/16] 0.0, 128
    %1984 = vxpose.xlu0.b32.cont [4/16] 0.0, 128
    %1985 = vxpose.xlu0.b32.cont [5/16] 0.0, 128
    %1986 = vxpose.xlu0.b32.cont [6/16] 0.0, 128
    %1987 = vxpose.xlu0.b32.cont [7/16] 0.0, 128
    %1988 = vxpose.xlu0.b32.cont [8/16] 0.0, 128
    %1989 = vxpose.xlu0.b32.cont [9/16] 0.0, 128
    %1990 = vxpose.xlu0.b32.cont [10/16] 0.0, 128
    %1991 = vxpose.xlu0.b32.cont [11/16] 0.0, 128
    %1992 = vxpose.xlu0.b32.cont [12/16] 0.0, 128
    %1993 = vxpose.xlu0.b32.cont [13/16] 0.0, 128
    %1994 = vxpose.xlu0.b32.cont [14/16] 0.0, 128
    %1995 = vxpose.xlu0.b32.cont [15/16] 0.0, 128
    %1996 = vxpose.xlu0.b32.end [16/16] 0.0, 128
    %v1997 = vpop.trf.xlu0
    %v1998 = vpop.trf.xlu0
    %v1999 = vpop.trf.xlu0
    %v2000 = vpop.trf.xlu0
    %v2001 = vpop.trf.xlu0
    %v2002 = vpop.trf.xlu0
    %v2003 = vpop.trf.xlu0
    %v2004 = vpop.trf.xlu0
    %v2005 = vpop.trf.xlu0
    %v2006 = vpop.trf.xlu0
    %v2007 = vpop.trf.xlu0
    %v2008 = vpop.trf.xlu0
    %v2009 = vpop.trf.xlu0
    %v2010 = vpop.trf.xlu0
    %v2011 = vpop.trf.xlu0
    %v2012 = vpop.trf.xlu0
    %v2013 = vpack.c.bf16 %v1998, %v1997
    %v2014 = vpack.c.bf16 %v1785, %v1784
    %v2016 = vsel %vm527, %v2013, 0
    %2018 = vmatprep.subr.bf16.mxu0 0
    %2019 = vmatpush1.bf16.msra.mxu0 0
    %2020 = vmatprep.subr.bf16.mxu0 0
    %2021 = vmatpush1.bf16.msra.mxu0 0
    %2022 = vmatprep.subr.bf16.mxu0 0
    %2023 = vmatpush1.bf16.msra.mxu0 0
    %2024 = vmatprep.subr.bf16.mxu0 0
    %2025 = vmatpush1.bf16.msra.mxu0 0
    %2026 = vmatprep.subr.bf16.mxu0 0
    %2027 = vmatpush1.bf16.msra.mxu0 0
    %2028 = vmatprep.subr.bf16.mxu0 0
    %2029 = vmatpush1.bf16.msra.mxu0 0
    %2030 = vmatprep.subr.bf16.mxu0 0
    %2031 = vmatpush1.bf16.msra.mxu0 0
    %2032 = vmatprep.subr.bf16.mxu0 0
    %2033 = vmatpush1.bf16.msra.mxu0 %v2014
    %2034 = vmatprep.subr.bf16.mxu0 0
    %2035 = vmatpush2.bf16.msra.mxu0 0
    %2036 = vmatprep.subr.bf16.mxu0 0
    %2037 = vmatpush2.bf16.msra.mxu0 0
    %2038 = vmatprep.subr.bf16.mxu0 0
    %2039 = vmatpush2.bf16.msra.mxu0 0
    %2040 = vmatprep.subr.bf16.mxu0 0
    %2041 = vmatpush2.bf16.msra.mxu0 0
    %2042 = vmatprep.subr.bf16.mxu0 0
    %2043 = vmatpush2.bf16.msra.mxu0 0
    %2044 = vmatprep.subr.bf16.mxu0 0
    %2045 = vmatpush2.bf16.msra.mxu0 0
    %2046 = vmatprep.subr.bf16.mxu0 0
    %2047 = vmatpush2.bf16.msra.mxu0 0
    %2048 = vmatprep.subr.bf16.mxu0 0
    %2049 = vmatpush2.bf16.msra.mxu0 0
    %2050 = vmatprep.mubr.bf16.mxu0 0
    %2051 = vmatmul.mubr.bf16.gmra.mxu0 %v2016
    %v2052 = vpop.f32.mrf.mxu0
    %v2053 = vadd.f32 0.0, %v2052
    %v2054 = vpop.f32.mrf.mxu0
    %v2055 = vpop.f32.mrf.mxu0
    %v2056 = vadd.f32 0.0, %v2055
    %v2057 = vpop.f32.mrf.mxu0
    %2058 = vdwg.mxu0
    %v2059 = vmul.f32 %v2053, 0.25
    %v2060 = vmul.f32 %v2056, 0.25
    %v2061 = vsel %vm527, %v2059, -inf
    %2062 = vmax.xlane.f32.xlu0 %v2061
    %v2063 = vpop.xlane.xlu0 %2062
    %v2064 = vsel %vm527, %v2060, -inf
    %2065 = vmax.xlane.f32.xlu0 %v2064
    %v2066 = vpop.xlane.xlu0 %2065
    %v2067 = vsub.f32 %v2059, %v2063
    %v2068 = vsub.f32 %v2060, %v2066
    %v2069 = vmul.f32 %v2067, 1.442695
    %v2070 = vpow.pop %v2069
    %v2071 = vmul.f32 %v2068, 1.442695
    %v2072 = vpow.pop %v2071
    %v2073 = vsel %vm527, %v2070, 0.0
    %2074 = vadd.xlane.f32.xlu0 %v2073
    %v2075 = vpop.xlane.xlu0 %2074
    %v2076 = vsel %vm527, %v2072, 0.0
    %2077 = vadd.xlane.f32.xlu0 %v2076
    %v2078 = vpop.xlane.xlu0 %2077
    %v2079 = vrcp.pop %v2075
    %v2080 = vmul.f32 %v2070, %v2079
    %v2081 = vrcp.pop %v2078
    %v2082 = vmul.f32 %v2072, %v2081
    %v2083 = vpack.c.bf16 %v1817, %v1816
    %v2084 = vpack.c.bf16 %v2082, %v2080
    %v2086 = vsel %vm527, %v2083, 0
    %v2089 = vsel %vm527, %v2084, 0
    %2091 = vmatprep.subr.bf16.mxu0 0
    %2092 = vmatpush1.bf16.xpose.msra.mxu0 0
    %2093 = vmatprep.subr.bf16.mxu0 0
    %2094 = vmatpush1.bf16.xpose.msra.mxu0 0
    %2095 = vmatprep.subr.bf16.mxu0 0
    %2096 = vmatpush1.bf16.xpose.msra.mxu0 0
    %2097 = vmatprep.subr.bf16.mxu0 0
    %2098 = vmatpush1.bf16.xpose.msra.mxu0 0
    %2099 = vmatprep.subr.bf16.mxu0 0
    %2100 = vmatpush1.bf16.xpose.msra.mxu0 0
    %2101 = vmatprep.subr.bf16.mxu0 0
    %2102 = vmatpush1.bf16.xpose.msra.mxu0 0
    %2103 = vmatprep.subr.bf16.mxu0 0
    %2104 = vmatpush1.bf16.xpose.msra.mxu0 0
    %2105 = vmatprep.subr.bf16.mxu0 0
    %2106 = vmatpush1.bf16.xpose.msra.mxu0 %v2089
    %2107 = vmatprep.subr.bf16.mxu0 0
    %2108 = vmatpush2.bf16.xpose.msra.mxu0 0
    %2109 = vmatprep.subr.bf16.mxu0 0
    %2110 = vmatpush2.bf16.xpose.msra.mxu0 0
    %2111 = vmatprep.subr.bf16.mxu0 0
    %2112 = vmatpush2.bf16.xpose.msra.mxu0 0
    %2113 = vmatprep.subr.bf16.mxu0 0
    %2114 = vmatpush2.bf16.xpose.msra.mxu0 0
    %2115 = vmatprep.subr.bf16.mxu0 0
    %2116 = vmatpush2.bf16.xpose.msra.mxu0 0
    %2117 = vmatprep.subr.bf16.mxu0 0
    %2118 = vmatpush2.bf16.xpose.msra.mxu0 0
    %2119 = vmatprep.subr.bf16.mxu0 0
    %2120 = vmatpush2.bf16.xpose.msra.mxu0 0
    %2121 = vmatprep.subr.bf16.mxu0 0
    %2122 = vmatpush2.bf16.xpose.msra.mxu0 0
    %2123 = vmatprep.mubr.bf16.mxu0 0
    %2124 = vmatmul.mubr.bf16.gmra.mxu0 %v2086
    %v2125 = vpop.f32.mrf.mxu0
    %v2126 = vadd.f32 0.0, %v2125
    %v2127 = vpop.f32.mrf.mxu0
    %v2128 = vpop.f32.mrf.mxu0
    %v2129 = vadd.f32 0.0, %v2128
    %v2130 = vpop.f32.mrf.mxu0
    %2131 = vdwg.mxu0
    %2132 = vxpose.xlu0.b32.start [1/16] %v1754, 128
    %2133 = vxpose.xlu0.b32.cont [2/16] %v1755, 128
    %2134 = vxpose.xlu0.b32.cont [3/16] 0.0, 128
    %2135 = vxpose.xlu0.b32.cont [4/16] 0.0, 128
    %2136 = vxpose.xlu0.b32.cont [5/16] 0.0, 128
    %2137 = vxpose.xlu0.b32.cont [6/16] 0.0, 128
    %2138 = vxpose.xlu0.b32.cont [7/16] 0.0, 128
    %2139 = vxpose.xlu0.b32.cont [8/16] 0.0, 128
    %2140 = vxpose.xlu0.b32.cont [9/16] 0.0, 128
    %2141 = vxpose.xlu0.b32.cont [10/16] 0.0, 128
    %2142 = vxpose.xlu0.b32.cont [11/16] 0.0, 128
    %2143 = vxpose.xlu0.b32.cont [12/16] 0.0, 128
    %2144 = vxpose.xlu0.b32.cont [13/16] 0.0, 128
    %2145 = vxpose.xlu0.b32.cont [14/16] 0.0, 128
    %2146 = vxpose.xlu0.b32.cont [15/16] 0.0, 128
    %2147 = vxpose.xlu0.b32.end [16/16] 0.0, 128
    %v2148 = vpop.trf.xlu0
    %v2149 = vpop.trf.xlu0
    %v2150 = vpop.trf.xlu0
    %v2151 = vpop.trf.xlu0
    %v2152 = vpop.trf.xlu0
    %v2153 = vpop.trf.xlu0
    %v2154 = vpop.trf.xlu0
    %v2155 = vpop.trf.xlu0
    %v2156 = vpop.trf.xlu0
    %v2157 = vpop.trf.xlu0
    %v2158 = vpop.trf.xlu0
    %v2159 = vpop.trf.xlu0
    %v2160 = vpop.trf.xlu0
    %v2161 = vpop.trf.xlu0
    %v2162 = vpop.trf.xlu0
    %v2163 = vpop.trf.xlu0
    %v2164 = vpack.c.bf16 %v2149, %v2148
    %v2165 = vpack.c.bf16 %v1787, %v1786
    %v2167 = vsel %vm527, %v2164, 0
    %2169 = vmatprep.subr.bf16.mxu0 0
    %2170 = vmatpush1.bf16.msra.mxu0 0
    %2171 = vmatprep.subr.bf16.mxu0 0
    %2172 = vmatpush1.bf16.msra.mxu0 0
    %2173 = vmatprep.subr.bf16.mxu0 0
    %2174 = vmatpush1.bf16.msra.mxu0 0
    %2175 = vmatprep.subr.bf16.mxu0 0
    %2176 = vmatpush1.bf16.msra.mxu0 0
    %2177 = vmatprep.subr.bf16.mxu0 0
    %2178 = vmatpush1.bf16.msra.mxu0 0
    %2179 = vmatprep.subr.bf16.mxu0 0
    %2180 = vmatpush1.bf16.msra.mxu0 0
    %2181 = vmatprep.subr.bf16.mxu0 0
    %2182 = vmatpush1.bf16.msra.mxu0 0
    %2183 = vmatprep.subr.bf16.mxu0 0
    %2184 = vmatpush1.bf16.msra.mxu0 %v2165
    %2185 = vmatprep.subr.bf16.mxu0 0
    %2186 = vmatpush2.bf16.msra.mxu0 0
    %2187 = vmatprep.subr.bf16.mxu0 0
    %2188 = vmatpush2.bf16.msra.mxu0 0
    %2189 = vmatprep.subr.bf16.mxu0 0
    %2190 = vmatpush2.bf16.msra.mxu0 0
    %2191 = vmatprep.subr.bf16.mxu0 0
    %2192 = vmatpush2.bf16.msra.mxu0 0
    %2193 = vmatprep.subr.bf16.mxu0 0
    %2194 = vmatpush2.bf16.msra.mxu0 0
    %2195 = vmatprep.subr.bf16.mxu0 0
    %2196 = vmatpush2.bf16.msra.mxu0 0
    %2197 = vmatprep.subr.bf16.mxu0 0
    %2198 = vmatpush2.bf16.msra.mxu0 0
    %2199 = vmatprep.subr.bf16.mxu0 0
    %2200 = vmatpush2.bf16.msra.mxu0 0
    %2201 = vmatprep.mubr.bf16.mxu0 0
    %2202 = vmatmul.mubr.bf16.gmra.mxu0 %v2167
    %v2203 = vpop.f32.mrf.mxu0
    %v2204 = vadd.f32 0.0, %v2203
    %v2205 = vpop.f32.mrf.mxu0
    %v2206 = vpop.f32.mrf.mxu0
    %v2207 = vadd.f32 0.0, %v2206
    %v2208 = vpop.f32.mrf.mxu0
    %2209 = vdwg.mxu0
    %v2210 = vmul.f32 %v2204, 0.25
    %v2211 = vmul.f32 %v2207, 0.25
    %v2212 = vsel %vm527, %v2210, -inf
    %2213 = vmax.xlane.f32.xlu0 %v2212
    %v2214 = vpop.xlane.xlu0 %2213
    %v2215 = vsel %vm527, %v2211, -inf
    %2216 = vmax.xlane.f32.xlu0 %v2215
    %v2217 = vpop.xlane.xlu0 %2216
    %v2218 = vsub.f32 %v2210, %v2214
    %v2219 = vsub.f32 %v2211, %v2217
    %v2220 = vmul.f32 %v2218, 1.442695
    %v2221 = vpow.pop %v2220
    %v2222 = vmul.f32 %v2219, 1.442695
    %v2223 = vpow.pop %v2222
    %v2224 = vsel %vm527, %v2221, 0.0
    %2225 = vadd.xlane.f32.xlu0 %v2224
    %v2226 = vpop.xlane.xlu0 %2225
    %v2227 = vsel %vm527, %v2223, 0.0
    %2228 = vadd.xlane.f32.xlu0 %v2227
    %v2229 = vpop.xlane.xlu0 %2228
    %v2230 = vrcp.pop %v2226
    %v2231 = vmul.f32 %v2221, %v2230
    %v2232 = vrcp.pop %v2229
    %v2233 = vmul.f32 %v2223, %v2232
    %v2234 = vpack.c.bf16 %v1819, %v1818
    %v2235 = vpack.c.bf16 %v2233, %v2231
    %v2237 = vsel %vm527, %v2234, 0
    %v2240 = vsel %vm527, %v2235, 0
    %2242 = vmatprep.subr.bf16.mxu0 0
    %2243 = vmatpush1.bf16.xpose.msra.mxu0 0
    %2244 = vmatprep.subr.bf16.mxu0 0
    %2245 = vmatpush1.bf16.xpose.msra.mxu0 0
    %2246 = vmatprep.subr.bf16.mxu0 0
    %2247 = vmatpush1.bf16.xpose.msra.mxu0 0
    %2248 = vmatprep.subr.bf16.mxu0 0
    %2249 = vmatpush1.bf16.xpose.msra.mxu0 0
    %2250 = vmatprep.subr.bf16.mxu0 0
    %2251 = vmatpush1.bf16.xpose.msra.mxu0 0
    %2252 = vmatprep.subr.bf16.mxu0 0
    %2253 = vmatpush1.bf16.xpose.msra.mxu0 0
    %2254 = vmatprep.subr.bf16.mxu0 0
    %2255 = vmatpush1.bf16.xpose.msra.mxu0 0
    %2256 = vmatprep.subr.bf16.mxu0 0
    %2257 = vmatpush1.bf16.xpose.msra.mxu0 %v2240
    %2258 = vmatprep.subr.bf16.mxu0 0
    %2259 = vmatpush2.bf16.xpose.msra.mxu0 0
    %2260 = vmatprep.subr.bf16.mxu0 0
    %2261 = vmatpush2.bf16.xpose.msra.mxu0 0
    %2262 = vmatprep.subr.bf16.mxu0 0
    %2263 = vmatpush2.bf16.xpose.msra.mxu0 0
    %2264 = vmatprep.subr.bf16.mxu0 0
    %2265 = vmatpush2.bf16.xpose.msra.mxu0 0
    %2266 = vmatprep.subr.bf16.mxu0 0
    %2267 = vmatpush2.bf16.xpose.msra.mxu0 0
    %2268 = vmatprep.subr.bf16.mxu0 0
    %2269 = vmatpush2.bf16.xpose.msra.mxu0 0
    %2270 = vmatprep.subr.bf16.mxu0 0
    %2271 = vmatpush2.bf16.xpose.msra.mxu0 0
    %2272 = vmatprep.subr.bf16.mxu0 0
    %2273 = vmatpush2.bf16.xpose.msra.mxu0 0
    %2274 = vmatprep.mubr.bf16.mxu0 0
    %2275 = vmatmul.mubr.bf16.gmra.mxu0 %v2237
    %v2276 = vpop.f32.mrf.mxu0
    %v2277 = vadd.f32 0.0, %v2276
    %v2278 = vpop.f32.mrf.mxu0
    %v2279 = vpop.f32.mrf.mxu0
    %v2280 = vadd.f32 0.0, %v2279
    %v2281 = vpop.f32.mrf.mxu0
    %2282 = vdwg.mxu0
    %2283 = vxpose.xlu0.b32.start [1/16] %v1756, 128
    %2284 = vxpose.xlu0.b32.cont [2/16] %v1757, 128
    %2285 = vxpose.xlu0.b32.cont [3/16] 0.0, 128
    %2286 = vxpose.xlu0.b32.cont [4/16] 0.0, 128
    %2287 = vxpose.xlu0.b32.cont [5/16] 0.0, 128
    %2288 = vxpose.xlu0.b32.cont [6/16] 0.0, 128
    %2289 = vxpose.xlu0.b32.cont [7/16] 0.0, 128
    %2290 = vxpose.xlu0.b32.cont [8/16] 0.0, 128
    %2291 = vxpose.xlu0.b32.cont [9/16] 0.0, 128
    %2292 = vxpose.xlu0.b32.cont [10/16] 0.0, 128
    %2293 = vxpose.xlu0.b32.cont [11/16] 0.0, 128
    %2294 = vxpose.xlu0.b32.cont [12/16] 0.0, 128
    %2295 = vxpose.xlu0.b32.cont [13/16] 0.0, 128
    %2296 = vxpose.xlu0.b32.cont [14/16] 0.0, 128
    %2297 = vxpose.xlu0.b32.cont [15/16] 0.0, 128
    %2298 = vxpose.xlu0.b32.end [16/16] 0.0, 128
    %v2299 = vpop.trf.xlu0
    %v2300 = vpop.trf.xlu0
    %v2301 = vpop.trf.xlu0
    %v2302 = vpop.trf.xlu0
    %v2303 = vpop.trf.xlu0
    %v2304 = vpop.trf.xlu0
    %v2305 = vpop.trf.xlu0
    %v2306 = vpop.trf.xlu0
    %v2307 = vpop.trf.xlu0
    %v2308 = vpop.trf.xlu0
    %v2309 = vpop.trf.xlu0
    %v2310 = vpop.trf.xlu0
    %v2311 = vpop.trf.xlu0
    %v2312 = vpop.trf.xlu0
    %v2313 = vpop.trf.xlu0
    %v2314 = vpop.trf.xlu0
    %v2315 = vpack.c.bf16 %v2300, %v2299
    %v2316 = vpack.c.bf16 %v1789, %v1788
    %v2318 = vsel %vm527, %v2315, 0
    %2320 = vmatprep.subr.bf16.mxu0 0
    %2321 = vmatpush1.bf16.msra.mxu0 0
    %2322 = vmatprep.subr.bf16.mxu0 0
    %2323 = vmatpush1.bf16.msra.mxu0 0
    %2324 = vmatprep.subr.bf16.mxu0 0
    %2325 = vmatpush1.bf16.msra.mxu0 0
    %2326 = vmatprep.subr.bf16.mxu0 0
    %2327 = vmatpush1.bf16.msra.mxu0 0
    %2328 = vmatprep.subr.bf16.mxu0 0
    %2329 = vmatpush1.bf16.msra.mxu0 0
    %2330 = vmatprep.subr.bf16.mxu0 0
    %2331 = vmatpush1.bf16.msra.mxu0 0
    %2332 = vmatprep.subr.bf16.mxu0 0
    %2333 = vmatpush1.bf16.msra.mxu0 0
    %2334 = vmatprep.subr.bf16.mxu0 0
    %2335 = vmatpush1.bf16.msra.mxu0 %v2316
    %2336 = vmatprep.subr.bf16.mxu0 0
    %2337 = vmatpush2.bf16.msra.mxu0 0
    %2338 = vmatprep.subr.bf16.mxu0 0
    %2339 = vmatpush2.bf16.msra.mxu0 0
    %2340 = vmatprep.subr.bf16.mxu0 0
    %2341 = vmatpush2.bf16.msra.mxu0 0
    %2342 = vmatprep.subr.bf16.mxu0 0
    %2343 = vmatpush2.bf16.msra.mxu0 0
    %2344 = vmatprep.subr.bf16.mxu0 0
    %2345 = vmatpush2.bf16.msra.mxu0 0
    %2346 = vmatprep.subr.bf16.mxu0 0
    %2347 = vmatpush2.bf16.msra.mxu0 0
    %2348 = vmatprep.subr.bf16.mxu0 0
    %2349 = vmatpush2.bf16.msra.mxu0 0
    %2350 = vmatprep.subr.bf16.mxu0 0
    %2351 = vmatpush2.bf16.msra.mxu0 0
    %2352 = vmatprep.mubr.bf16.mxu0 0
    %2353 = vmatmul.mubr.bf16.gmra.mxu0 %v2318
    %v2354 = vpop.f32.mrf.mxu0
    %v2355 = vadd.f32 0.0, %v2354
    %v2356 = vpop.f32.mrf.mxu0
    %v2357 = vpop.f32.mrf.mxu0
    %v2358 = vadd.f32 0.0, %v2357
    %v2359 = vpop.f32.mrf.mxu0
    %2360 = vdwg.mxu0
    %v2361 = vmul.f32 %v2355, 0.25
    %v2362 = vmul.f32 %v2358, 0.25
    %v2363 = vsel %vm527, %v2361, -inf
    %2364 = vmax.xlane.f32.xlu0 %v2363
    %v2365 = vpop.xlane.xlu0 %2364
    %v2366 = vsel %vm527, %v2362, -inf
    %2367 = vmax.xlane.f32.xlu0 %v2366
    %v2368 = vpop.xlane.xlu0 %2367
    %v2369 = vsub.f32 %v2361, %v2365
    %v2370 = vsub.f32 %v2362, %v2368
    %v2371 = vmul.f32 %v2369, 1.442695
    %v2372 = vpow.pop %v2371
    %v2373 = vmul.f32 %v2370, 1.442695
    %v2374 = vpow.pop %v2373
    %v2375 = vsel %vm527, %v2372, 0.0
    %2376 = vadd.xlane.f32.xlu0 %v2375
    %v2377 = vpop.xlane.xlu0 %2376
    %v2378 = vsel %vm527, %v2374, 0.0
    %2379 = vadd.xlane.f32.xlu0 %v2378
    %v2380 = vpop.xlane.xlu0 %2379
    %v2381 = vrcp.pop %v2377
    %v2382 = vmul.f32 %v2372, %v2381
    %v2383 = vrcp.pop %v2380
    %v2384 = vmul.f32 %v2374, %v2383
    %v2385 = vpack.c.bf16 %v1821, %v1820
    %v2386 = vpack.c.bf16 %v2384, %v2382
    %v2388 = vsel %vm527, %v2385, 0
    %v2391 = vsel %vm527, %v2386, 0
    %2393 = vmatprep.subr.bf16.mxu0 0
    %2394 = vmatpush1.bf16.xpose.msra.mxu0 0
    %2395 = vmatprep.subr.bf16.mxu0 0
    %2396 = vmatpush1.bf16.xpose.msra.mxu0 0
    %2397 = vmatprep.subr.bf16.mxu0 0
    %2398 = vmatpush1.bf16.xpose.msra.mxu0 0
    %2399 = vmatprep.subr.bf16.mxu0 0
    %2400 = vmatpush1.bf16.xpose.msra.mxu0 0
    %2401 = vmatprep.subr.bf16.mxu0 0
    %2402 = vmatpush1.bf16.xpose.msra.mxu0 0
    %2403 = vmatprep.subr.bf16.mxu0 0
    %2404 = vmatpush1.bf16.xpose.msra.mxu0 0
    %2405 = vmatprep.subr.bf16.mxu0 0
    %2406 = vmatpush1.bf16.xpose.msra.mxu0 0
    %2407 = vmatprep.subr.bf16.mxu0 0
    %2408 = vmatpush1.bf16.xpose.msra.mxu0 %v2391
    %2409 = vmatprep.subr.bf16.mxu0 0
    %2410 = vmatpush2.bf16.xpose.msra.mxu0 0
    %2411 = vmatprep.subr.bf16.mxu0 0
    %2412 = vmatpush2.bf16.xpose.msra.mxu0 0
    %2413 = vmatprep.subr.bf16.mxu0 0
    %2414 = vmatpush2.bf16.xpose.msra.mxu0 0
    %2415 = vmatprep.subr.bf16.mxu0 0
    %2416 = vmatpush2.bf16.xpose.msra.mxu0 0
    %2417 = vmatprep.subr.bf16.mxu0 0
    %2418 = vmatpush2.bf16.xpose.msra.mxu0 0
    %2419 = vmatprep.subr.bf16.mxu0 0
    %2420 = vmatpush2.bf16.xpose.msra.mxu0 0
    %2421 = vmatprep.subr.bf16.mxu0 0
    %2422 = vmatpush2.bf16.xpose.msra.mxu0 0
    %2423 = vmatprep.subr.bf16.mxu0 0
    %2424 = vmatpush2.bf16.xpose.msra.mxu0 0
    %2425 = vmatprep.mubr.bf16.mxu0 0
    %2426 = vmatmul.mubr.bf16.gmra.mxu0 %v2388
    %v2427 = vpop.f32.mrf.mxu0
    %v2428 = vadd.f32 0.0, %v2427
    %v2429 = vpop.f32.mrf.mxu0
    %v2430 = vpop.f32.mrf.mxu0
    %v2431 = vadd.f32 0.0, %v2430
    %v2432 = vpop.f32.mrf.mxu0
    %2433 = vdwg.mxu0
    %2434 = vxpose.xlu0.b32.start [1/16] %v1758, 128
    %2435 = vxpose.xlu0.b32.cont [2/16] %v1759, 128
    %2436 = vxpose.xlu0.b32.cont [3/16] 0.0, 128
    %2437 = vxpose.xlu0.b32.cont [4/16] 0.0, 128
    %2438 = vxpose.xlu0.b32.cont [5/16] 0.0, 128
    %2439 = vxpose.xlu0.b32.cont [6/16] 0.0, 128
    %2440 = vxpose.xlu0.b32.cont [7/16] 0.0, 128
    %2441 = vxpose.xlu0.b32.cont [8/16] 0.0, 128
    %2442 = vxpose.xlu0.b32.cont [9/16] 0.0, 128
    %2443 = vxpose.xlu0.b32.cont [10/16] 0.0, 128
    %2444 = vxpose.xlu0.b32.cont [11/16] 0.0, 128
    %2445 = vxpose.xlu0.b32.cont [12/16] 0.0, 128
    %2446 = vxpose.xlu0.b32.cont [13/16] 0.0, 128
    %2447 = vxpose.xlu0.b32.cont [14/16] 0.0, 128
    %2448 = vxpose.xlu0.b32.cont [15/16] 0.0, 128
    %2449 = vxpose.xlu0.b32.end [16/16] 0.0, 128
    %v2450 = vpop.trf.xlu0
    %v2451 = vpop.trf.xlu0
    %v2452 = vpop.trf.xlu0
    %v2453 = vpop.trf.xlu0
    %v2454 = vpop.trf.xlu0
    %v2455 = vpop.trf.xlu0
    %v2456 = vpop.trf.xlu0
    %v2457 = vpop.trf.xlu0
    %v2458 = vpop.trf.xlu0
    %v2459 = vpop.trf.xlu0
    %v2460 = vpop.trf.xlu0
    %v2461 = vpop.trf.xlu0
    %v2462 = vpop.trf.xlu0
    %v2463 = vpop.trf.xlu0
    %v2464 = vpop.trf.xlu0
    %v2465 = vpop.trf.xlu0
    %v2466 = vpack.c.bf16 %v2451, %v2450
    %v2467 = vpack.c.bf16 %v1791, %v1790
    %v2469 = vsel %vm527, %v2466, 0
    %2471 = vmatprep.subr.bf16.mxu0 0
    %2472 = vmatpush1.bf16.msra.mxu0 0
    %2473 = vmatprep.subr.bf16.mxu0 0
    %2474 = vmatpush1.bf16.msra.mxu0 0
    %2475 = vmatprep.subr.bf16.mxu0 0
    %2476 = vmatpush1.bf16.msra.mxu0 0
    %2477 = vmatprep.subr.bf16.mxu0 0
    %2478 = vmatpush1.bf16.msra.mxu0 0
    %2479 = vmatprep.subr.bf16.mxu0 0
    %2480 = vmatpush1.bf16.msra.mxu0 0
    %2481 = vmatprep.subr.bf16.mxu0 0
    %2482 = vmatpush1.bf16.msra.mxu0 0
    %2483 = vmatprep.subr.bf16.mxu0 0
    %2484 = vmatpush1.bf16.msra.mxu0 0
    %2485 = vmatprep.subr.bf16.mxu0 0
    %2486 = vmatpush1.bf16.msra.mxu0 %v2467
    %2487 = vmatprep.subr.bf16.mxu0 0
    %2488 = vmatpush2.bf16.msra.mxu0 0
    %2489 = vmatprep.subr.bf16.mxu0 0
    %2490 = vmatpush2.bf16.msra.mxu0 0
    %2491 = vmatprep.subr.bf16.mxu0 0
    %2492 = vmatpush2.bf16.msra.mxu0 0
    %2493 = vmatprep.subr.bf16.mxu0 0
    %2494 = vmatpush2.bf16.msra.mxu0 0
    %2495 = vmatprep.subr.bf16.mxu0 0
    %2496 = vmatpush2.bf16.msra.mxu0 0
    %2497 = vmatprep.subr.bf16.mxu0 0
    %2498 = vmatpush2.bf16.msra.mxu0 0
    %2499 = vmatprep.subr.bf16.mxu0 0
    %2500 = vmatpush2.bf16.msra.mxu0 0
    %2501 = vmatprep.subr.bf16.mxu0 0
    %2502 = vmatpush2.bf16.msra.mxu0 0
    %2503 = vmatprep.mubr.bf16.mxu0 0
    %2504 = vmatmul.mubr.bf16.gmra.mxu0 %v2469
    %v2505 = vpop.f32.mrf.mxu0
    %v2506 = vadd.f32 0.0, %v2505
    %v2507 = vpop.f32.mrf.mxu0
    %v2508 = vpop.f32.mrf.mxu0
    %v2509 = vadd.f32 0.0, %v2508
    %v2510 = vpop.f32.mrf.mxu0
    %2511 = vdwg.mxu0
    %v2512 = vmul.f32 %v2506, 0.25
    %v2513 = vmul.f32 %v2509, 0.25
    %v2514 = vsel %vm527, %v2512, -inf
    %2515 = vmax.xlane.f32.xlu0 %v2514
    %v2516 = vpop.xlane.xlu0 %2515
    %v2517 = vsel %vm527, %v2513, -inf
    %2518 = vmax.xlane.f32.xlu0 %v2517
    %v2519 = vpop.xlane.xlu0 %2518
    %v2520 = vsub.f32 %v2512, %v2516
    %v2521 = vsub.f32 %v2513, %v2519
    %v2522 = vmul.f32 %v2520, 1.442695
    %v2523 = vpow.pop %v2522
    %v2524 = vmul.f32 %v2521, 1.442695
    %v2525 = vpow.pop %v2524
    %v2526 = vsel %vm527, %v2523, 0.0
    %2527 = vadd.xlane.f32.xlu0 %v2526
    %v2528 = vpop.xlane.xlu0 %2527
    %v2529 = vsel %vm527, %v2525, 0.0
    %2530 = vadd.xlane.f32.xlu0 %v2529
    %v2531 = vpop.xlane.xlu0 %2530
    %v2532 = vrcp.pop %v2528
    %v2533 = vmul.f32 %v2523, %v2532
    %v2534 = vrcp.pop %v2531
    %v2535 = vmul.f32 %v2525, %v2534
    %v2536 = vpack.c.bf16 %v1823, %v1822
    %v2537 = vpack.c.bf16 %v2535, %v2533
    %v2539 = vsel %vm527, %v2536, 0
    %v2542 = vsel %vm527, %v2537, 0
    %2544 = vmatprep.subr.bf16.mxu0 0
    %2545 = vmatpush1.bf16.xpose.msra.mxu0 0
    %2546 = vmatprep.subr.bf16.mxu0 0
    %2547 = vmatpush1.bf16.xpose.msra.mxu0 0
    %2548 = vmatprep.subr.bf16.mxu0 0
    %2549 = vmatpush1.bf16.xpose.msra.mxu0 0
    %2550 = vmatprep.subr.bf16.mxu0 0
    %2551 = vmatpush1.bf16.xpose.msra.mxu0 0
    %2552 = vmatprep.subr.bf16.mxu0 0
    %2553 = vmatpush1.bf16.xpose.msra.mxu0 0
    %2554 = vmatprep.subr.bf16.mxu0 0
    %2555 = vmatpush1.bf16.xpose.msra.mxu0 0
    %2556 = vmatprep.subr.bf16.mxu0 0
    %2557 = vmatpush1.bf16.xpose.msra.mxu0 0
    %2558 = vmatprep.subr.bf16.mxu0 0
    %2559 = vmatpush1.bf16.xpose.msra.mxu0 %v2542
    %2560 = vmatprep.subr.bf16.mxu0 0
    %2561 = vmatpush2.bf16.xpose.msra.mxu0 0
    %2562 = vmatprep.subr.bf16.mxu0 0
    %2563 = vmatpush2.bf16.xpose.msra.mxu0 0
    %2564 = vmatprep.subr.bf16.mxu0 0
    %2565 = vmatpush2.bf16.xpose.msra.mxu0 0
    %2566 = vmatprep.subr.bf16.mxu0 0
    %2567 = vmatpush2.bf16.xpose.msra.mxu0 0
    %2568 = vmatprep.subr.bf16.mxu0 0
    %2569 = vmatpush2.bf16.xpose.msra.mxu0 0
    %2570 = vmatprep.subr.bf16.mxu0 0
    %2571 = vmatpush2.bf16.xpose.msra.mxu0 0
    %2572 = vmatprep.subr.bf16.mxu0 0
    %2573 = vmatpush2.bf16.xpose.msra.mxu0 0
    %2574 = vmatprep.subr.bf16.mxu0 0
    %2575 = vmatpush2.bf16.xpose.msra.mxu0 0
    %2576 = vmatprep.mubr.bf16.mxu0 0
    %2577 = vmatmul.mubr.bf16.gmra.mxu0 %v2539
    %v2578 = vpop.f32.mrf.mxu0
    %v2579 = vadd.f32 0.0, %v2578
    %v2580 = vpop.f32.mrf.mxu0
    %v2581 = vpop.f32.mrf.mxu0
    %v2582 = vadd.f32 0.0, %v2581
    %v2583 = vpop.f32.mrf.mxu0
    %2584 = vdwg.mxu0
    %2585 = vxpose.xlu0.b32.start [1/16] %v1760, 128
    %2586 = vxpose.xlu0.b32.cont [2/16] %v1761, 128
    %2587 = vxpose.xlu0.b32.cont [3/16] 0.0, 128
    %2588 = vxpose.xlu0.b32.cont [4/16] 0.0, 128
    %2589 = vxpose.xlu0.b32.cont [5/16] 0.0, 128
    %2590 = vxpose.xlu0.b32.cont [6/16] 0.0, 128
    %2591 = vxpose.xlu0.b32.cont [7/16] 0.0, 128
    %2592 = vxpose.xlu0.b32.cont [8/16] 0.0, 128
    %2593 = vxpose.xlu0.b32.cont [9/16] 0.0, 128
    %2594 = vxpose.xlu0.b32.cont [10/16] 0.0, 128
    %2595 = vxpose.xlu0.b32.cont [11/16] 0.0, 128
    %2596 = vxpose.xlu0.b32.cont [12/16] 0.0, 128
    %2597 = vxpose.xlu0.b32.cont [13/16] 0.0, 128
    %2598 = vxpose.xlu0.b32.cont [14/16] 0.0, 128
    %2599 = vxpose.xlu0.b32.cont [15/16] 0.0, 128
    %2600 = vxpose.xlu0.b32.end [16/16] 0.0, 128
    %v2601 = vpop.trf.xlu0
    %v2602 = vpop.trf.xlu0
    %v2603 = vpop.trf.xlu0
    %v2604 = vpop.trf.xlu0
    %v2605 = vpop.trf.xlu0
    %v2606 = vpop.trf.xlu0
    %v2607 = vpop.trf.xlu0
    %v2608 = vpop.trf.xlu0
    %v2609 = vpop.trf.xlu0
    %v2610 = vpop.trf.xlu0
    %v2611 = vpop.trf.xlu0
    %v2612 = vpop.trf.xlu0
    %v2613 = vpop.trf.xlu0
    %v2614 = vpop.trf.xlu0
    %v2615 = vpop.trf.xlu0
    %v2616 = vpop.trf.xlu0
    %v2617 = vpack.c.bf16 %v2602, %v2601
    %v2618 = vpack.c.bf16 %v1793, %v1792
    %v2620 = vsel %vm527, %v2617, 0
    %2622 = vmatprep.subr.bf16.mxu0 0
    %2623 = vmatpush1.bf16.msra.mxu0 0
    %2624 = vmatprep.subr.bf16.mxu0 0
    %2625 = vmatpush1.bf16.msra.mxu0 0
    %2626 = vmatprep.subr.bf16.mxu0 0
    %2627 = vmatpush1.bf16.msra.mxu0 0
    %2628 = vmatprep.subr.bf16.mxu0 0
    %2629 = vmatpush1.bf16.msra.mxu0 0
    %2630 = vmatprep.subr.bf16.mxu0 0
    %2631 = vmatpush1.bf16.msra.mxu0 0
    %2632 = vmatprep.subr.bf16.mxu0 0
    %2633 = vmatpush1.bf16.msra.mxu0 0
    %2634 = vmatprep.subr.bf16.mxu0 0
    %2635 = vmatpush1.bf16.msra.mxu0 0
    %2636 = vmatprep.subr.bf16.mxu0 0
    %2637 = vmatpush1.bf16.msra.mxu0 %v2618
    %2638 = vmatprep.subr.bf16.mxu0 0
    %2639 = vmatpush2.bf16.msra.mxu0 0
    %2640 = vmatprep.subr.bf16.mxu0 0
    %2641 = vmatpush2.bf16.msra.mxu0 0
    %2642 = vmatprep.subr.bf16.mxu0 0
    %2643 = vmatpush2.bf16.msra.mxu0 0
    %2644 = vmatprep.subr.bf16.mxu0 0
    %2645 = vmatpush2.bf16.msra.mxu0 0
    %2646 = vmatprep.subr.bf16.mxu0 0
    %2647 = vmatpush2.bf16.msra.mxu0 0
    %2648 = vmatprep.subr.bf16.mxu0 0
    %2649 = vmatpush2.bf16.msra.mxu0 0
    %2650 = vmatprep.subr.bf16.mxu0 0
    %2651 = vmatpush2.bf16.msra.mxu0 0
    %2652 = vmatprep.subr.bf16.mxu0 0
    %2653 = vmatpush2.bf16.msra.mxu0 0
    %2654 = vmatprep.mubr.bf16.mxu0 0
    %2655 = vmatmul.mubr.bf16.gmra.mxu0 %v2620
    %v2656 = vpop.f32.mrf.mxu0
    %v2657 = vadd.f32 0.0, %v2656
    %v2658 = vpop.f32.mrf.mxu0
    %v2659 = vpop.f32.mrf.mxu0
    %v2660 = vadd.f32 0.0, %v2659
    %v2661 = vpop.f32.mrf.mxu0
    %2662 = vdwg.mxu0
    %v2663 = vmul.f32 %v2657, 0.25
    %v2664 = vmul.f32 %v2660, 0.25
    %v2665 = vsel %vm527, %v2663, -inf
    %2666 = vmax.xlane.f32.xlu0 %v2665
    %v2667 = vpop.xlane.xlu0 %2666
    %v2668 = vsel %vm527, %v2664, -inf
    %2669 = vmax.xlane.f32.xlu0 %v2668
    %v2670 = vpop.xlane.xlu0 %2669
    %v2671 = vsub.f32 %v2663, %v2667
    %v2672 = vsub.f32 %v2664, %v2670
    %v2673 = vmul.f32 %v2671, 1.442695
    %v2674 = vpow.pop %v2673
    %v2675 = vmul.f32 %v2672, 1.442695
    %v2676 = vpow.pop %v2675
    %v2677 = vsel %vm527, %v2674, 0.0
    %2678 = vadd.xlane.f32.xlu0 %v2677
    %v2679 = vpop.xlane.xlu0 %2678
    %v2680 = vsel %vm527, %v2676, 0.0
    %2681 = vadd.xlane.f32.xlu0 %v2680
    %v2682 = vpop.xlane.xlu0 %2681
    %v2683 = vrcp.pop %v2679
    %v2684 = vmul.f32 %v2674, %v2683
    %v2685 = vrcp.pop %v2682
    %v2686 = vmul.f32 %v2676, %v2685
    %v2687 = vpack.c.bf16 %v1825, %v1824
    %v2688 = vpack.c.bf16 %v2686, %v2684
    %v2690 = vsel %vm527, %v2687, 0
    %v2693 = vsel %vm527, %v2688, 0
    %2695 = vmatprep.subr.bf16.mxu0 0
    %2696 = vmatpush1.bf16.xpose.msra.mxu0 0
    %2697 = vmatprep.subr.bf16.mxu0 0
    %2698 = vmatpush1.bf16.xpose.msra.mxu0 0
    %2699 = vmatprep.subr.bf16.mxu0 0
    %2700 = vmatpush1.bf16.xpose.msra.mxu0 0
    %2701 = vmatprep.subr.bf16.mxu0 0
    %2702 = vmatpush1.bf16.xpose.msra.mxu0 0
    %2703 = vmatprep.subr.bf16.mxu0 0
    %2704 = vmatpush1.bf16.xpose.msra.mxu0 0
    %2705 = vmatprep.subr.bf16.mxu0 0
    %2706 = vmatpush1.bf16.xpose.msra.mxu0 0
    %2707 = vmatprep.subr.bf16.mxu0 0
    %2708 = vmatpush1.bf16.xpose.msra.mxu0 0
    %2709 = vmatprep.subr.bf16.mxu0 0
    %2710 = vmatpush1.bf16.xpose.msra.mxu0 %v2693
    %2711 = vmatprep.subr.bf16.mxu0 0
    %2712 = vmatpush2.bf16.xpose.msra.mxu0 0
    %2713 = vmatprep.subr.bf16.mxu0 0
    %2714 = vmatpush2.bf16.xpose.msra.mxu0 0
    %2715 = vmatprep.subr.bf16.mxu0 0
    %2716 = vmatpush2.bf16.xpose.msra.mxu0 0
    %2717 = vmatprep.subr.bf16.mxu0 0
    %2718 = vmatpush2.bf16.xpose.msra.mxu0 0
    %2719 = vmatprep.subr.bf16.mxu0 0
    %2720 = vmatpush2.bf16.xpose.msra.mxu0 0
    %2721 = vmatprep.subr.bf16.mxu0 0
    %2722 = vmatpush2.bf16.xpose.msra.mxu0 0
    %2723 = vmatprep.subr.bf16.mxu0 0
    %2724 = vmatpush2.bf16.xpose.msra.mxu0 0
    %2725 = vmatprep.subr.bf16.mxu0 0
    %2726 = vmatpush2.bf16.xpose.msra.mxu0 0
    %2727 = vmatprep.mubr.bf16.mxu0 0
    %2728 = vmatmul.mubr.bf16.gmra.mxu0 %v2690
    %v2729 = vpop.f32.mrf.mxu0
    %v2730 = vadd.f32 0.0, %v2729
    %v2731 = vpop.f32.mrf.mxu0
    %v2732 = vpop.f32.mrf.mxu0
    %v2733 = vadd.f32 0.0, %v2732
    %v2734 = vpop.f32.mrf.mxu0
    %2735 = vdwg.mxu0
    %2736 = vxpose.xlu0.b32.start [1/16] %v1762, 128
    %2737 = vxpose.xlu0.b32.cont [2/16] %v1763, 128
    %2738 = vxpose.xlu0.b32.cont [3/16] 0.0, 128
    %2739 = vxpose.xlu0.b32.cont [4/16] 0.0, 128
    %2740 = vxpose.xlu0.b32.cont [5/16] 0.0, 128
    %2741 = vxpose.xlu0.b32.cont [6/16] 0.0, 128
    %2742 = vxpose.xlu0.b32.cont [7/16] 0.0, 128
    %2743 = vxpose.xlu0.b32.cont [8/16] 0.0, 128
    %2744 = vxpose.xlu0.b32.cont [9/16] 0.0, 128
    %2745 = vxpose.xlu0.b32.cont [10/16] 0.0, 128
    %2746 = vxpose.xlu0.b32.cont [11/16] 0.0, 128
    %2747 = vxpose.xlu0.b32.cont [12/16] 0.0, 128
    %2748 = vxpose.xlu0.b32.cont [13/16] 0.0, 128
    %2749 = vxpose.xlu0.b32.cont [14/16] 0.0, 128
    %2750 = vxpose.xlu0.b32.cont [15/16] 0.0, 128
    %2751 = vxpose.xlu0.b32.end [16/16] 0.0, 128
    %v2752 = vpop.trf.xlu0
    %v2753 = vpop.trf.xlu0
    %v2754 = vpop.trf.xlu0
    %v2755 = vpop.trf.xlu0
    %v2756 = vpop.trf.xlu0
    %v2757 = vpop.trf.xlu0
    %v2758 = vpop.trf.xlu0
    %v2759 = vpop.trf.xlu0
    %v2760 = vpop.trf.xlu0
    %v2761 = vpop.trf.xlu0
    %v2762 = vpop.trf.xlu0
    %v2763 = vpop.trf.xlu0
    %v2764 = vpop.trf.xlu0
    %v2765 = vpop.trf.xlu0
    %v2766 = vpop.trf.xlu0
    %v2767 = vpop.trf.xlu0
    %v2768 = vpack.c.bf16 %v2753, %v2752
    %v2769 = vpack.c.bf16 %v1795, %v1794
    %v2771 = vsel %vm527, %v2768, 0
    %2773 = vmatprep.subr.bf16.mxu0 0
    %2774 = vmatpush1.bf16.msra.mxu0 0
    %2775 = vmatprep.subr.bf16.mxu0 0
    %2776 = vmatpush1.bf16.msra.mxu0 0
    %2777 = vmatprep.subr.bf16.mxu0 0
    %2778 = vmatpush1.bf16.msra.mxu0 0
    %2779 = vmatprep.subr.bf16.mxu0 0
    %2780 = vmatpush1.bf16.msra.mxu0 0
    %2781 = vmatprep.subr.bf16.mxu0 0
    %2782 = vmatpush1.bf16.msra.mxu0 0
    %2783 = vmatprep.subr.bf16.mxu0 0
    %2784 = vmatpush1.bf16.msra.mxu0 0
    %2785 = vmatprep.subr.bf16.mxu0 0
    %2786 = vmatpush1.bf16.msra.mxu0 0
    %2787 = vmatprep.subr.bf16.mxu0 0
    %2788 = vmatpush1.bf16.msra.mxu0 %v2769
    %2789 = vmatprep.subr.bf16.mxu0 0
    %2790 = vmatpush2.bf16.msra.mxu0 0
    %2791 = vmatprep.subr.bf16.mxu0 0
    %2792 = vmatpush2.bf16.msra.mxu0 0
    %2793 = vmatprep.subr.bf16.mxu0 0
    %2794 = vmatpush2.bf16.msra.mxu0 0
    %2795 = vmatprep.subr.bf16.mxu0 0
    %2796 = vmatpush2.bf16.msra.mxu0 0
    %2797 = vmatprep.subr.bf16.mxu0 0
    %2798 = vmatpush2.bf16.msra.mxu0 0
    %2799 = vmatprep.subr.bf16.mxu0 0
    %2800 = vmatpush2.bf16.msra.mxu0 0
    %2801 = vmatprep.subr.bf16.mxu0 0
    %2802 = vmatpush2.bf16.msra.mxu0 0
    %2803 = vmatprep.subr.bf16.mxu0 0
    %2804 = vmatpush2.bf16.msra.mxu0 0
    %2805 = vmatprep.mubr.bf16.mxu0 0
    %2806 = vmatmul.mubr.bf16.gmra.mxu0 %v2771
    %v2807 = vpop.f32.mrf.mxu0
    %v2808 = vadd.f32 0.0, %v2807
    %v2809 = vpop.f32.mrf.mxu0
    %v2810 = vpop.f32.mrf.mxu0
    %v2811 = vadd.f32 0.0, %v2810
    %v2812 = vpop.f32.mrf.mxu0
    %2813 = vdwg.mxu0
    %v2814 = vmul.f32 %v2808, 0.25
    %v2815 = vmul.f32 %v2811, 0.25
    %v2816 = vsel %vm527, %v2814, -inf
    %2817 = vmax.xlane.f32.xlu0 %v2816
    %v2818 = vpop.xlane.xlu0 %2817
    %v2819 = vsel %vm527, %v2815, -inf
    %2820 = vmax.xlane.f32.xlu0 %v2819
    %v2821 = vpop.xlane.xlu0 %2820
    %v2822 = vsub.f32 %v2814, %v2818
    %v2823 = vsub.f32 %v2815, %v2821
    %v2824 = vmul.f32 %v2822, 1.442695
    %v2825 = vpow.pop %v2824
    %v2826 = vmul.f32 %v2823, 1.442695
    %v2827 = vpow.pop %v2826
    %v2828 = vsel %vm527, %v2825, 0.0
    %2829 = vadd.xlane.f32.xlu0 %v2828
    %v2830 = vpop.xlane.xlu0 %2829
    %v2831 = vsel %vm527, %v2827, 0.0
    %2832 = vadd.xlane.f32.xlu0 %v2831
    %v2833 = vpop.xlane.xlu0 %2832
    %v2834 = vrcp.pop %v2830
    %v2835 = vmul.f32 %v2825, %v2834
    %v2836 = vrcp.pop %v2833
    %v2837 = vmul.f32 %v2827, %v2836
    %v2838 = vpack.c.bf16 %v1827, %v1826
    %v2839 = vpack.c.bf16 %v2837, %v2835
    %v2841 = vsel %vm527, %v2838, 0
    %v2844 = vsel %vm527, %v2839, 0
    %2846 = vmatprep.subr.bf16.mxu0 0
    %2847 = vmatpush1.bf16.xpose.msra.mxu0 0
    %2848 = vmatprep.subr.bf16.mxu0 0
    %2849 = vmatpush1.bf16.xpose.msra.mxu0 0
    %2850 = vmatprep.subr.bf16.mxu0 0
    %2851 = vmatpush1.bf16.xpose.msra.mxu0 0
    %2852 = vmatprep.subr.bf16.mxu0 0
    %2853 = vmatpush1.bf16.xpose.msra.mxu0 0
    %2854 = vmatprep.subr.bf16.mxu0 0
    %2855 = vmatpush1.bf16.xpose.msra.mxu0 0
    %2856 = vmatprep.subr.bf16.mxu0 0
    %2857 = vmatpush1.bf16.xpose.msra.mxu0 0
    %2858 = vmatprep.subr.bf16.mxu0 0
    %2859 = vmatpush1.bf16.xpose.msra.mxu0 0
    %2860 = vmatprep.subr.bf16.mxu0 0
    %2861 = vmatpush1.bf16.xpose.msra.mxu0 %v2844
    %2862 = vmatprep.subr.bf16.mxu0 0
    %2863 = vmatpush2.bf16.xpose.msra.mxu0 0
    %2864 = vmatprep.subr.bf16.mxu0 0
    %2865 = vmatpush2.bf16.xpose.msra.mxu0 0
    %2866 = vmatprep.subr.bf16.mxu0 0
    %2867 = vmatpush2.bf16.xpose.msra.mxu0 0
    %2868 = vmatprep.subr.bf16.mxu0 0
    %2869 = vmatpush2.bf16.xpose.msra.mxu0 0
    %2870 = vmatprep.subr.bf16.mxu0 0
    %2871 = vmatpush2.bf16.xpose.msra.mxu0 0
    %2872 = vmatprep.subr.bf16.mxu0 0
    %2873 = vmatpush2.bf16.xpose.msra.mxu0 0
    %2874 = vmatprep.subr.bf16.mxu0 0
    %2875 = vmatpush2.bf16.xpose.msra.mxu0 0
    %2876 = vmatprep.subr.bf16.mxu0 0
    %2877 = vmatpush2.bf16.xpose.msra.mxu0 0
    %2878 = vmatprep.mubr.bf16.mxu0 0
    %2879 = vmatmul.mubr.bf16.gmra.mxu0 %v2841
    %v2880 = vpop.f32.mrf.mxu0
    %v2881 = vadd.f32 0.0, %v2880
    %v2882 = vpop.f32.mrf.mxu0
    %v2883 = vpop.f32.mrf.mxu0
    %v2884 = vadd.f32 0.0, %v2883
    %v2885 = vpop.f32.mrf.mxu0
    %2886 = vdwg.mxu0
    %2887 = vxpose.xlu0.b32.start [1/16] %v1764, 128
    %2888 = vxpose.xlu0.b32.cont [2/16] %v1765, 128
    %2889 = vxpose.xlu0.b32.cont [3/16] 0.0, 128
    %2890 = vxpose.xlu0.b32.cont [4/16] 0.0, 128
    %2891 = vxpose.xlu0.b32.cont [5/16] 0.0, 128
    %2892 = vxpose.xlu0.b32.cont [6/16] 0.0, 128
    %2893 = vxpose.xlu0.b32.cont [7/16] 0.0, 128
    %2894 = vxpose.xlu0.b32.cont [8/16] 0.0, 128
    %2895 = vxpose.xlu0.b32.cont [9/16] 0.0, 128
    %2896 = vxpose.xlu0.b32.cont [10/16] 0.0, 128
    %2897 = vxpose.xlu0.b32.cont [11/16] 0.0, 128
    %2898 = vxpose.xlu0.b32.cont [12/16] 0.0, 128
    %2899 = vxpose.xlu0.b32.cont [13/16] 0.0, 128
    %2900 = vxpose.xlu0.b32.cont [14/16] 0.0, 128
    %2901 = vxpose.xlu0.b32.cont [15/16] 0.0, 128
    %2902 = vxpose.xlu0.b32.end [16/16] 0.0, 128
    %v2903 = vpop.trf.xlu0
    %v2904 = vpop.trf.xlu0
    %v2905 = vpop.trf.xlu0
    %v2906 = vpop.trf.xlu0
    %v2907 = vpop.trf.xlu0
    %v2908 = vpop.trf.xlu0
    %v2909 = vpop.trf.xlu0
    %v2910 = vpop.trf.xlu0
    %v2911 = vpop.trf.xlu0
    %v2912 = vpop.trf.xlu0
    %v2913 = vpop.trf.xlu0
    %v2914 = vpop.trf.xlu0
    %v2915 = vpop.trf.xlu0
    %v2916 = vpop.trf.xlu0
    %v2917 = vpop.trf.xlu0
    %v2918 = vpop.trf.xlu0
    %v2919 = vpack.c.bf16 %v2904, %v2903
    %v2920 = vpack.c.bf16 %v1797, %v1796
    %v2922 = vsel %vm527, %v2919, 0
    %2924 = vmatprep.subr.bf16.mxu0 0
    %2925 = vmatpush1.bf16.msra.mxu0 0
    %2926 = vmatprep.subr.bf16.mxu0 0
    %2927 = vmatpush1.bf16.msra.mxu0 0
    %2928 = vmatprep.subr.bf16.mxu0 0
    %2929 = vmatpush1.bf16.msra.mxu0 0
    %2930 = vmatprep.subr.bf16.mxu0 0
    %2931 = vmatpush1.bf16.msra.mxu0 0
    %2932 = vmatprep.subr.bf16.mxu0 0
    %2933 = vmatpush1.bf16.msra.mxu0 0
    %2934 = vmatprep.subr.bf16.mxu0 0
    %2935 = vmatpush1.bf16.msra.mxu0 0
    %2936 = vmatprep.subr.bf16.mxu0 0
    %2937 = vmatpush1.bf16.msra.mxu0 0
    %2938 = vmatprep.subr.bf16.mxu0 0
    %2939 = vmatpush1.bf16.msra.mxu0 %v2920
    %2940 = vmatprep.subr.bf16.mxu0 0
    %2941 = vmatpush2.bf16.msra.mxu0 0
    %2942 = vmatprep.subr.bf16.mxu0 0
    %2943 = vmatpush2.bf16.msra.mxu0 0
    %2944 = vmatprep.subr.bf16.mxu0 0
    %2945 = vmatpush2.bf16.msra.mxu0 0
    %2946 = vmatprep.subr.bf16.mxu0 0
    %2947 = vmatpush2.bf16.msra.mxu0 0
    %2948 = vmatprep.subr.bf16.mxu0 0
    %2949 = vmatpush2.bf16.msra.mxu0 0
    %2950 = vmatprep.subr.bf16.mxu0 0
    %2951 = vmatpush2.bf16.msra.mxu0 0
    %2952 = vmatprep.subr.bf16.mxu0 0
    %2953 = vmatpush2.bf16.msra.mxu0 0
    %2954 = vmatprep.subr.bf16.mxu0 0
    %2955 = vmatpush2.bf16.msra.mxu0 0
    %2956 = vmatprep.mubr.bf16.mxu0 0
    %2957 = vmatmul.mubr.bf16.gmra.mxu0 %v2922
    %v2958 = vpop.f32.mrf.mxu0
    %v2959 = vadd.f32 0.0, %v2958
    %v2960 = vpop.f32.mrf.mxu0
    %v2961 = vpop.f32.mrf.mxu0
    %v2962 = vadd.f32 0.0, %v2961
    %v2963 = vpop.f32.mrf.mxu0
    %2964 = vdwg.mxu0
    %v2965 = vmul.f32 %v2959, 0.25
    %v2966 = vmul.f32 %v2962, 0.25
    %v2967 = vsel %vm527, %v2965, -inf
    %2968 = vmax.xlane.f32.xlu0 %v2967
    %v2969 = vpop.xlane.xlu0 %2968
    %v2970 = vsel %vm527, %v2966, -inf
    %2971 = vmax.xlane.f32.xlu0 %v2970
    %v2972 = vpop.xlane.xlu0 %2971
    %v2973 = vsub.f32 %v2965, %v2969
    %v2974 = vsub.f32 %v2966, %v2972
    %v2975 = vmul.f32 %v2973, 1.442695
    %v2976 = vpow.pop %v2975
    %v2977 = vmul.f32 %v2974, 1.442695
    %v2978 = vpow.pop %v2977
    %v2979 = vsel %vm527, %v2976, 0.0
    %2980 = vadd.xlane.f32.xlu0 %v2979
    %v2981 = vpop.xlane.xlu0 %2980
    %v2982 = vsel %vm527, %v2978, 0.0
    %2983 = vadd.xlane.f32.xlu0 %v2982
    %v2984 = vpop.xlane.xlu0 %2983
    %v2985 = vrcp.pop %v2981
    %v2986 = vmul.f32 %v2976, %v2985
    %v2987 = vrcp.pop %v2984
    %v2988 = vmul.f32 %v2978, %v2987
    %v2989 = vpack.c.bf16 %v1829, %v1828
    %v2990 = vpack.c.bf16 %v2988, %v2986
    %v2992 = vsel %vm527, %v2989, 0
    %v2995 = vsel %vm527, %v2990, 0
    %2997 = vmatprep.subr.bf16.mxu0 0
    %2998 = vmatpush1.bf16.xpose.msra.mxu0 0
    %2999 = vmatprep.subr.bf16.mxu0 0
    %3000 = vmatpush1.bf16.xpose.msra.mxu0 0
    %3001 = vmatprep.subr.bf16.mxu0 0
    %3002 = vmatpush1.bf16.xpose.msra.mxu0 0
    %3003 = vmatprep.subr.bf16.mxu0 0
    %3004 = vmatpush1.bf16.xpose.msra.mxu0 0
    %3005 = vmatprep.subr.bf16.mxu0 0
    %3006 = vmatpush1.bf16.xpose.msra.mxu0 0
    %3007 = vmatprep.subr.bf16.mxu0 0
    %3008 = vmatpush1.bf16.xpose.msra.mxu0 0
    %3009 = vmatprep.subr.bf16.mxu0 0
    %3010 = vmatpush1.bf16.xpose.msra.mxu0 0
    %3011 = vmatprep.subr.bf16.mxu0 0
    %3012 = vmatpush1.bf16.xpose.msra.mxu0 %v2995
    %3013 = vmatprep.subr.bf16.mxu0 0
    %3014 = vmatpush2.bf16.xpose.msra.mxu0 0
    %3015 = vmatprep.subr.bf16.mxu0 0
    %3016 = vmatpush2.bf16.xpose.msra.mxu0 0
    %3017 = vmatprep.subr.bf16.mxu0 0
    %3018 = vmatpush2.bf16.xpose.msra.mxu0 0
    %3019 = vmatprep.subr.bf16.mxu0 0
    %3020 = vmatpush2.bf16.xpose.msra.mxu0 0
    %3021 = vmatprep.subr.bf16.mxu0 0
    %3022 = vmatpush2.bf16.xpose.msra.mxu0 0
    %3023 = vmatprep.subr.bf16.mxu0 0
    %3024 = vmatpush2.bf16.xpose.msra.mxu0 0
    %3025 = vmatprep.subr.bf16.mxu0 0
    %3026 = vmatpush2.bf16.xpose.msra.mxu0 0
    %3027 = vmatprep.subr.bf16.mxu0 0
    %3028 = vmatpush2.bf16.xpose.msra.mxu0 0
    %3029 = vmatprep.mubr.bf16.mxu0 0
    %3030 = vmatmul.mubr.bf16.gmra.mxu0 %v2992
    %v3031 = vpop.f32.mrf.mxu0
    %v3032 = vadd.f32 0.0, %v3031
    %v3033 = vpop.f32.mrf.mxu0
    %v3034 = vpop.f32.mrf.mxu0
    %v3035 = vadd.f32 0.0, %v3034
    %v3036 = vpop.f32.mrf.mxu0
    %3037 = vdwg.mxu0
    %3038 = vxpose.xlu0.b32.start [1/16] %v1975, 128
    %3039 = vxpose.xlu0.b32.cont [2/16] %v1978, 128
    %3040 = vxpose.xlu0.b32.cont [3/16] %v2126, 128
    %3041 = vxpose.xlu0.b32.cont [4/16] %v2129, 128
    %3042 = vxpose.xlu0.b32.cont [5/16] %v2277, 128
    %3043 = vxpose.xlu0.b32.cont [6/16] %v2280, 128
    %3044 = vxpose.xlu0.b32.cont [7/16] %v2428, 128
    %3045 = vxpose.xlu0.b32.cont [8/16] %v2431, 128
    %3046 = vxpose.xlu0.b32.cont [9/16] %v2579, 128
    %3047 = vxpose.xlu0.b32.cont [10/16] %v2582, 128
    %3048 = vxpose.xlu0.b32.cont [11/16] %v2730, 128
    %3049 = vxpose.xlu0.b32.cont [12/16] %v2733, 128
    %3050 = vxpose.xlu0.b32.cont [13/16] %v2881, 128
    %3051 = vxpose.xlu0.b32.cont [14/16] %v2884, 128
    %3052 = vxpose.xlu0.b32.cont [15/16] %v3032, 128
    %3053 = vxpose.xlu0.b32.end [16/16] %v3035, 128
    %v3054 = vpop.trf.xlu0
    %v3055 = vpop.trf.xlu0
    %v3056 = vpop.trf.xlu0
    %v3057 = vpop.trf.xlu0
    %v3058 = vpop.trf.xlu0
    %v3059 = vpop.trf.xlu0
    %v3060 = vpop.trf.xlu0
    %v3061 = vpop.trf.xlu0
    %v3062 = vpop.trf.xlu0
    %v3063 = vpop.trf.xlu0
    %v3064 = vpop.trf.xlu0
    %v3065 = vpop.trf.xlu0
    %v3066 = vpop.trf.xlu0
    %v3067 = vpop.trf.xlu0
    %v3068 = vpop.trf.xlu0
    %v3069 = vpop.trf.xlu0
    %v3070 = vpack.c.bf16 %v1719, %v1718
    %v3071 = vpack.c.bf16 %v3055, %v3054
    %v3072 = vld [vmem:[#allocation7] sm:$0xf]
    %v3073 = vld [vmem:[#allocation7 + $0x4] sm:$0xf]
    %v3074 = vld [vmem:[#allocation7 + $0x8] sm:$0xf]
    %v3075 = vld [vmem:[#allocation7 + $0xc] sm:$0xf]
    %v3076 = vld [vmem:[#allocation7 + $0x10] sm:$0xf]
    %v3077 = vld [vmem:[#allocation7 + $0x14] sm:$0xf]
    %v3078 = vld [vmem:[#allocation7 + $0x18] sm:$0xf]
    %v3079 = vld [vmem:[#allocation7 + $0x1c] sm:$0xf]
    %v3080 = vld [vmem:[#allocation7 + $0x20] sm:$0xf]
    %v3081 = vld [vmem:[#allocation7 + $0x24] sm:$0xf]
    %v3082 = vld [vmem:[#allocation7 + $0x28] sm:$0xf]
    %v3083 = vld [vmem:[#allocation7 + $0x2c] sm:$0xf]
    %v3084 = vld [vmem:[#allocation7 + $0x30] sm:$0xf]
    %v3085 = vld [vmem:[#allocation7 + $0x34] sm:$0xf]
    %v3086 = vld [vmem:[#allocation7 + $0x38] sm:$0xf]
    %v3087 = vld [vmem:[#allocation7 + $0x3c] sm:$0xf]
    %v3089 = vlaneseq
    %v3090 = vshrl.u32 %v3089, 7
    %v3091 = vsub.s32 0, %v3090
    %v3092 = vrot.slane %v106, %v3091
    %v3110 = vunpack.c.l.b16 %v3072
    %v3111 = vunpack.c.l.b16 %v3073
    %v3112 = vunpack.c.l.b16 %v3074
    %v3113 = vunpack.c.l.b16 %v3075
    %v3114 = vunpack.c.l.b16 %v3076
    %v3115 = vunpack.c.l.b16 %v3077
    %v3116 = vunpack.c.l.b16 %v3078
    %v3117 = vunpack.c.l.b16 %v3079
    %v3118 = vunpack.c.l.b16 %v3080
    %v3119 = vunpack.c.l.b16 %v3081
    %v3120 = vunpack.c.l.b16 %v3082
    %v3121 = vunpack.c.l.b16 %v3083
    %v3122 = vunpack.c.l.b16 %v3084
    %v3123 = vunpack.c.l.b16 %v3085
    %v3124 = vunpack.c.l.b16 %v3086
    %v3125 = vunpack.c.l.b16 %v3087
    %v3126 = vpack.c.b16 %v3111, %v3110
    %v3127 = vpack.c.b16 %v3113, %v3112
    %v3128 = vpack.c.b16 %v3115, %v3114
    %v3129 = vpack.c.b16 %v3117, %v3116
    %v3130 = vpack.c.b16 %v3119, %v3118
    %v3131 = vpack.c.b16 %v3121, %v3120
    %v3132 = vpack.c.b16 %v3123, %v3122
    %v3133 = vpack.c.b16 %v3125, %v3124
    %3142 = vmatprep.subr.bf16.mxu0 0
    %3143 = vmatpush1.bf16.msra.mxu0 %v3133
    %3144 = vmatprep.subr.bf16.mxu0 0
    %3145 = vmatpush1.bf16.msra.mxu0 %v3132
    %3146 = vmatprep.subr.bf16.mxu0 0
    %3147 = vmatpush1.bf16.msra.mxu0 %v3131
    %3148 = vmatprep.subr.bf16.mxu0 0
    %3149 = vmatpush1.bf16.msra.mxu0 %v3130
    %3150 = vmatprep.subr.bf16.mxu0 0
    %3151 = vmatpush1.bf16.msra.mxu0 %v3129
    %3152 = vmatprep.subr.bf16.mxu0 0
    %3153 = vmatpush1.bf16.msra.mxu0 %v3128
    %3154 = vmatprep.subr.bf16.mxu0 0
    %3155 = vmatpush1.bf16.msra.mxu0 %v3127
    %3156 = vmatprep.subr.bf16.mxu0 0
    %3157 = vmatpush1.bf16.msra.mxu0 %v3126
    %3158 = vmatprep.subr.bf16.mxu0 0
    %3159 = vmatpush2.bf16.msra.mxu0 0
    %3160 = vmatprep.subr.bf16.mxu0 0
    %3161 = vmatpush2.bf16.msra.mxu0 0
    %3162 = vmatprep.subr.bf16.mxu0 0
    %3163 = vmatpush2.bf16.msra.mxu0 0
    %3164 = vmatprep.subr.bf16.mxu0 0
    %3165 = vmatpush2.bf16.msra.mxu0 0
    %3166 = vmatprep.subr.bf16.mxu0 0
    %3167 = vmatpush2.bf16.msra.mxu0 0
    %3168 = vmatprep.subr.bf16.mxu0 0
    %3169 = vmatpush2.bf16.msra.mxu0 0
    %3170 = vmatprep.subr.bf16.mxu0 0
    %3171 = vmatpush2.bf16.msra.mxu0 0
    %3172 = vmatprep.subr.bf16.mxu0 0
    %3173 = vmatpush2.bf16.msra.mxu0 0
    %3174 = vmatprep.mubr.bf16.mxu0 0
    %3175 = vmatmul.mubr.bf16.gmra.mxu0 %v3070
    %v3176 = vpop.f32.mrf.mxu0
    %v3177 = vadd.f32 %v3092, %v3176
    %v3178 = vpop.f32.mrf.mxu0
    %v3179 = vpop.f32.mrf.mxu0
    %v3180 = vadd.f32 %v3092, %v3179
    %v3181 = vpop.f32.mrf.mxu0
    %3182 = vmatprep.mubr.bf16.mxu0 0
    %3183 = vmatmul.mubr.bf16.gmra.mxu0 %v3071
    %v3184 = vpop.f32.mrf.mxu0
    %v3185 = vadd.f32 %v3092, %v3184
    %v3186 = vpop.f32.mrf.mxu0
    %v3187 = vpop.f32.mrf.mxu0
    %v3188 = vadd.f32 %v3092, %v3187
    %v3189 = vpop.f32.mrf.mxu0
    %3190 = vdwg.mxu0
    %v3191 = vadd.f32 %v113, %v3177
    %v3192 = vadd.f32 %v114, %v3180
    %v3193 = vadd.f32 %v115, %v3185
    %v3194 = vadd.f32 %v116, %v3188
    %3195 = vadd.xlane.f32.xlu0 %v3191
    %v3196 = vpop.xlane.xlu0 %3195
    %3197 = vadd.xlane.f32.xlu0 %v3192
    %v3198 = vpop.xlane.xlu0 %3197
    %3199 = vadd.xlane.f32.xlu0 %v3193
    %v3200 = vpop.xlane.xlu0 %3199
    %3201 = vadd.xlane.f32.xlu0 %v3194
    %v3202 = vpop.xlane.xlu0 %3201
    %v3203 = vrcp.pop 128.0
    %v3204 = vmul.f32 %v3196, %v3203
    %v3205 = vmul.f32 %v3198, %v3203
    %v3206 = vmul.f32 %v3200, %v3203
    %v3207 = vmul.f32 %v3202, %v3203
    %v3208 = vsub.f32 %v3191, %v3204
    %v3209 = vsub.f32 %v3192, %v3205
    %v3210 = vsub.f32 %v3193, %v3206
    %v3211 = vsub.f32 %v3194, %v3207
    %v3212 = vmul.f32 %v3208, %v3208
    %v3213 = vmul.f32 %v3209, %v3209
    %v3214 = vmul.f32 %v3210, %v3210
    %v3215 = vmul.f32 %v3211, %v3211
    %3216 = vadd.xlane.f32.xlu0 %v3212
    %v3217 = vpop.xlane.xlu0 %3216
    %3218 = vadd.xlane.f32.xlu0 %v3213
    %v3219 = vpop.xlane.xlu0 %3218
    %3220 = vadd.xlane.f32.xlu0 %v3214
    %v3221 = vpop.xlane.xlu0 %3220
    %3222 = vadd.xlane.f32.xlu0 %v3215
    %v3223 = vpop.xlane.xlu0 %3222
    %v3224 = vmul.f32 %v3217, %v3203
    %v3225 = vmul.f32 %v3219, %v3203
    %v3226 = vmul.f32 %v3221, %v3203
    %v3227 = vmul.f32 %v3223, %v3203
    %v3228 = vadd.f32 %v3224, 1e-05
    %v3229 = vadd.f32 %v3225, 1e-05
    %v3230 = vadd.f32 %v3226, 1e-05
    %v3231 = vadd.f32 %v3227, 1e-05
    %v3232 = vrsqrt.pop %v3228
    %v3233 = vrsqrt.pop %v3229
    %v3234 = vrsqrt.pop %v3230
    %v3235 = vrsqrt.pop %v3231
    %v3236 = vmul.f32 %v3208, %v3232
    %v3237 = vmul.f32 %v3209, %v3233
    %v3238 = vmul.f32 %v3210, %v3234
    %v3239 = vmul.f32 %v3211, %v3235
    %v3241 = vlaneseq
    %v3242 = vshrl.u32 %v3241, 7
    %v3243 = vsub.s32 0, %v3242
    %v3244 = vrot.slane %v107, %v3243
    %v3246 = vmul.f32 %v3236, %v3244
    %v3247 = vmul.f32 %v3237, %v3244
    %v3248 = vmul.f32 %v3238, %v3244
    %v3249 = vmul.f32 %v3239, %v3244
    %v3251 = vlaneseq
    %v3252 = vshrl.u32 %v3251, 7
    %v3253 = vsub.s32 0, %v3252
    %v3254 = vrot.slane %v108, %v3253
    %v3256 = vadd.f32 %v3246, %v3254
    %v3257 = vadd.f32 %v3247, %v3254
    %v3258 = vadd.f32 %v3248, %v3254
    %v3259 = vadd.f32 %v3249, %v3254
    %v3260 = vpack.c.bf16 %v3257, %v3256
    %v3261 = vpack.c.bf16 %v3259, %v3258
    %v3262 = vld [vmem:[#allocation8] sm:$0xff]
    %v3263 = vld [vmem:[#allocation8 + $0x8] sm:$0xff]
    %v3264 = vld [vmem:[#allocation8 + $0x10] sm:$0xff]
    %v3265 = vld [vmem:[#allocation8 + $0x18] sm:$0xff]
    %v3266 = vld [vmem:[#allocation8 + $0x20] sm:$0xff]
    %v3267 = vld [vmem:[#allocation8 + $0x28] sm:$0xff]
    %v3268 = vld [vmem:[#allocation8 + $0x30] sm:$0xff]
    %v3269 = vld [vmem:[#allocation8 + $0x38] sm:$0xff]
    %v3270 = vld [vmem:[#allocation8 + $0x40] sm:$0xff]
    %v3271 = vld [vmem:[#allocation8 + $0x48] sm:$0xff]
    %v3272 = vld [vmem:[#allocation8 + $0x50] sm:$0xff]
    %v3273 = vld [vmem:[#allocation8 + $0x58] sm:$0xff]
    %v3274 = vld [vmem:[#allocation8 + $0x60] sm:$0xff]
    %v3275 = vld [vmem:[#allocation8 + $0x68] sm:$0xff]
    %v3276 = vld [vmem:[#allocation8 + $0x70] sm:$0xff]
    %v3277 = vld [vmem:[#allocation8 + $0x78] sm:$0xff]
    %v3279 = vlaneseq
    %v3280 = vshrl.u32 %v3279, 7
    %v3281 = vsub.s32 0, %v3280
    %v3282 = vrot.slane %v109, %v3281
    %v3283 = vlaneseq
    %v3284 = vshrl.u32 %v3283, 7
    %v3285 = vsub.s32 1, %v3284
    %v3286 = vrot.slane %v109, %v3285
    %v3305 = vunpack.c.l.b16 %v3262
    %v3306 = vunpack.c.h.b16 %v3262
    %v3307 = vunpack.c.l.b16 %v3263
    %v3308 = vunpack.c.h.b16 %v3263
    %v3309 = vunpack.c.l.b16 %v3264
    %v3310 = vunpack.c.h.b16 %v3264
    %v3311 = vunpack.c.l.b16 %v3265
    %v3312 = vunpack.c.h.b16 %v3265
    %v3313 = vunpack.c.l.b16 %v3266
    %v3314 = vunpack.c.h.b16 %v3266
    %v3315 = vunpack.c.l.b16 %v3267
    %v3316 = vunpack.c.h.b16 %v3267
    %v3317 = vunpack.c.l.b16 %v3268
    %v3318 = vunpack.c.h.b16 %v3268
    %v3319 = vunpack.c.l.b16 %v3269
    %v3320 = vunpack.c.h.b16 %v3269
    %v3321 = vunpack.c.l.b16 %v3270
    %v3322 = vunpack.c.h.b16 %v3270
    %v3323 = vunpack.c.l.b16 %v3271
    %v3324 = vunpack.c.h.b16 %v3271
    %v3325 = vunpack.c.l.b16 %v3272
    %v3326 = vunpack.c.h.b16 %v3272
    %v3327 = vunpack.c.l.b16 %v3273
    %v3328 = vunpack.c.h.b16 %v3273
    %v3329 = vunpack.c.l.b16 %v3274
    %v3330 = vunpack.c.h.b16 %v3274
    %v3331 = vunpack.c.l.b16 %v3275
    %v3332 = vunpack.c.h.b16 %v3275
    %v3333 = vunpack.c.l.b16 %v3276
    %v3334 = vunpack.c.h.b16 %v3276
    %v3335 = vunpack.c.l.b16 %v3277
    %v3336 = vunpack.c.h.b16 %v3277
    %v3337 = vpack.c.b16 %v3307, %v3305
    %v3338 = vpack.c.b16 %v3308, %v3306
    %v3339 = vpack.c.b16 %v3311, %v3309
    %v3340 = vpack.c.b16 %v3312, %v3310
    %v3341 = vpack.c.b16 %v3315, %v3313
    %v3342 = vpack.c.b16 %v3316, %v3314
    %v3343 = vpack.c.b16 %v3319, %v3317
    %v3344 = vpack.c.b16 %v3320, %v3318
    %v3345 = vpack.c.b16 %v3323, %v3321
    %v3346 = vpack.c.b16 %v3324, %v3322
    %v3347 = vpack.c.b16 %v3327, %v3325
    %v3348 = vpack.c.b16 %v3328, %v3326
    %v3349 = vpack.c.b16 %v3331, %v3329
    %v3350 = vpack.c.b16 %v3332, %v3330
    %v3351 = vpack.c.b16 %v3335, %v3333
    %v3352 = vpack.c.b16 %v3336, %v3334
    %3369 = vmatprep.subr.bf16.mxu0 %v3352
    %3370 = vmatpush1.bf16.msra.mxu0 %v3351
    %3371 = vmatprep.subr.bf16.mxu0 %v3350
    %3372 = vmatpush1.bf16.msra.mxu0 %v3349
    %3373 = vmatprep.subr.bf16.mxu0 %v3348
    %3374 = vmatpush1.bf16.msra.mxu0 %v3347
    %3375 = vmatprep.subr.bf16.mxu0 %v3346
    %3376 = vmatpush1.bf16.msra.mxu0 %v3345
    %3377 = vmatprep.subr.bf16.mxu0 %v3344
    %3378 = vmatpush1.bf16.msra.mxu0 %v3343
    %3379 = vmatprep.subr.bf16.mxu0 %v3342
    %3380 = vmatpush1.bf16.msra.mxu0 %v3341
    %3381 = vmatprep.subr.bf16.mxu0 %v3340
    %3382 = vmatpush1.bf16.msra.mxu0 %v3339
    %3383 = vmatprep.subr.bf16.mxu0 %v3338
    %3384 = vmatpush1.bf16.msra.mxu0 %v3337
    %3385 = vmatprep.subr.bf16.mxu0 0
    %3386 = vmatpush2.bf16.msra.mxu0 0
    %3387 = vmatprep.subr.bf16.mxu0 0
    %3388 = vmatpush2.bf16.msra.mxu0 0
    %3389 = vmatprep.subr.bf16.mxu0 0
    %3390 = vmatpush2.bf16.msra.mxu0 0
    %3391 = vmatprep.subr.bf16.mxu0 0
    %3392 = vmatpush2.bf16.msra.mxu0 0
    %3393 = vmatprep.subr.bf16.mxu0 0
    %3394 = vmatpush2.bf16.msra.mxu0 0
    %3395 = vmatprep.subr.bf16.mxu0 0
    %3396 = vmatpush2.bf16.msra.mxu0 0
    %3397 = vmatprep.subr.bf16.mxu0 0
    %3398 = vmatpush2.bf16.msra.mxu0 0
    %3399 = vmatprep.subr.bf16.mxu0 0
    %3400 = vmatpush2.bf16.msra.mxu0 0
    %3401 = vmatprep.mubr.bf16.mxu0 0
    %3402 = vmatmul.mubr.bf16.gmra.mxu0 %v3260
    %v3403 = vpop.f32.mrf.mxu0
    %v3404 = vadd.f32 %v3282, %v3403
    %v3405 = vpop.f32.mrf.mxu0
    %v3406 = vadd.f32 %v3286, %v3405
    %v3407 = vpop.f32.mrf.mxu0
    %v3408 = vadd.f32 %v3282, %v3407
    %v3409 = vpop.f32.mrf.mxu0
    %v3410 = vadd.f32 %v3286, %v3409
    %3411 = vmatprep.mubr.bf16.mxu0 0
    %3412 = vmatmul.mubr.bf16.gmra.mxu0 %v3261
    %v3413 = vpop.f32.mrf.mxu0
    %v3414 = vadd.f32 %v3282, %v3413
    %v3415 = vpop.f32.mrf.mxu0
    %v3416 = vadd.f32 %v3286, %v3415
    %v3417 = vpop.f32.mrf.mxu0
    %v3418 = vadd.f32 %v3282, %v3417
    %v3419 = vpop.f32.mrf.mxu0
    %v3420 = vadd.f32 %v3286, %v3419
    %3421 = vdwg.mxu0
    %v3422 = vmul.f32 %v3404, 0.5
    %v3423 = vmul.f32 %v3406, 0.5
    %v3424 = vmul.f32 %v3408, 0.5
    %v3425 = vmul.f32 %v3410, 0.5
    %v3426 = vmul.f32 %v3414, 0.5
    %v3427 = vmul.f32 %v3416, 0.5
    %v3428 = vmul.f32 %v3418, 0.5
    %v3429 = vmul.f32 %v3420, 0.5
    %v3430 = vmul.f32 %v3404, 0.044715
    %v3431 = vmul.f32 %v3406, 0.044715
    %v3432 = vmul.f32 %v3408, 0.044715
    %v3433 = vmul.f32 %v3410, 0.044715
    %v3434 = vmul.f32 %v3414, 0.044715
    %v3435 = vmul.f32 %v3416, 0.044715
    %v3436 = vmul.f32 %v3418, 0.044715
    %v3437 = vmul.f32 %v3420, 0.044715
    %v3438 = vmul.f32 %v3430, %v3404
    %v3439 = vmul.f32 %v3431, %v3406
    %v3440 = vmul.f32 %v3432, %v3408
    %v3441 = vmul.f32 %v3433, %v3410
    %v3442 = vmul.f32 %v3434, %v3414
    %v3443 = vmul.f32 %v3435, %v3416
    %v3444 = vmul.f32 %v3436, %v3418
    %v3445 = vmul.f32 %v3437, %v3420
    %v3446 = vmul.f32 %v3438, %v3404
    %v3447 = vmul.f32 %v3439, %v3406
    %v3448 = vmul.f32 %v3440, %v3408
    %v3449 = vmul.f32 %v3441, %v3410
    %v3450 = vmul.f32 %v3442, %v3414
    %v3451 = vmul.f32 %v3443, %v3416
    %v3452 = vmul.f32 %v3444, %v3418
    %v3453 = vmul.f32 %v3445, %v3420
    %v3454 = vadd.f32 %v3404, %v3446
    %v3455 = vadd.f32 %v3406, %v3447
    %v3456 = vadd.f32 %v3408, %v3448
    %v3457 = vadd.f32 %v3410, %v3449
    %v3458 = vadd.f32 %v3414, %v3450
    %v3459 = vadd.f32 %v3416, %v3451
    %v3460 = vadd.f32 %v3418, %v3452
    %v3461 = vadd.f32 %v3420, %v3453
    %v3462 = vmul.f32 %v3454, 0.7978846
    %v3463 = vmul.f32 %v3455, 0.7978846
    %v3464 = vmul.f32 %v3456, 0.7978846
    %v3465 = vmul.f32 %v3457, 0.7978846
    %v3466 = vmul.f32 %v3458, 0.7978846
    %v3467 = vmul.f32 %v3459, 0.7978846
    %v3468 = vmul.f32 %v3460, 0.7978846
    %v3469 = vmul.f32 %v3461, 0.7978846
    %v3470 = vtanh.pop %v3462
    %v3471 = vtanh.pop %v3463
    %v3472 = vtanh.pop %v3464
    %v3473 = vtanh.pop %v3465
    %v3474 = vtanh.pop %v3466
    %v3475 = vtanh.pop %v3467
    %v3476 = vtanh.pop %v3468
    %v3477 = vtanh.pop %v3469
    %v3478 = vadd.f32 %v3470, 1.0
    %v3479 = vadd.f32 %v3471, 1.0
    %v3480 = vadd.f32 %v3472, 1.0
    %v3481 = vadd.f32 %v3473, 1.0
    %v3482 = vadd.f32 %v3474, 1.0
    %v3483 = vadd.f32 %v3475, 1.0
    %v3484 = vadd.f32 %v3476, 1.0
    %v3485 = vadd.f32 %v3477, 1.0
    %v3486 = vmul.f32 %v3422, %v3478
    %v3487 = vmul.f32 %v3423, %v3479
    %v3488 = vmul.f32 %v3424, %v3480
    %v3489 = vmul.f32 %v3425, %v3481
    %v3490 = vmul.f32 %v3426, %v3482
    %v3491 = vmul.f32 %v3427, %v3483
    %v3492 = vmul.f32 %v3428, %v3484
    %v3493 = vmul.f32 %v3429, %v3485
    %v3494 = vpack.c.bf16 %v3488, %v3486
    %v3495 = vpack.c.bf16 %v3489, %v3487
    %v3496 = vpack.c.bf16 %v3492, %v3490
    %v3497 = vpack.c.bf16 %v3493, %v3491
    %v3498 = vld [vmem:[#allocation10] sm:$0xf]
    %v3499 = vld [vmem:[#allocation10 + $0x4] sm:$0xf]
    %v3500 = vld [vmem:[#allocation10 + $0x8] sm:$0xf]
    %v3501 = vld [vmem:[#allocation10 + $0xc] sm:$0xf]
    %v3502 = vld [vmem:[#allocation10 + $0x10] sm:$0xf]
    %v3503 = vld [vmem:[#allocation10 + $0x14] sm:$0xf]
    %v3504 = vld [vmem:[#allocation10 + $0x18] sm:$0xf]
    %v3505 = vld [vmem:[#allocation10 + $0x1c] sm:$0xf]
    %v3506 = vld [vmem:[#allocation10 + $0x20] sm:$0xf]
    %v3507 = vld [vmem:[#allocation10 + $0x24] sm:$0xf]
    %v3508 = vld [vmem:[#allocation10 + $0x28] sm:$0xf]
    %v3509 = vld [vmem:[#allocation10 + $0x2c] sm:$0xf]
    %v3510 = vld [vmem:[#allocation10 + $0x30] sm:$0xf]
    %v3511 = vld [vmem:[#allocation10 + $0x34] sm:$0xf]
    %v3512 = vld [vmem:[#allocation10 + $0x38] sm:$0xf]
    %v3513 = vld [vmem:[#allocation10 + $0x3c] sm:$0xf]
    %v3514 = vld [vmem:[#allocation10 + $0x40] sm:$0xf]
    %v3515 = vld [vmem:[#allocation10 + $0x44] sm:$0xf]
    %v3516 = vld [vmem:[#allocation10 + $0x48] sm:$0xf]
    %v3517 = vld [vmem:[#allocation10 + $0x4c] sm:$0xf]
    %v3518 = vld [vmem:[#allocation10 + $0x50] sm:$0xf]
    %v3519 = vld [vmem:[#allocation10 + $0x54] sm:$0xf]
    %v3520 = vld [vmem:[#allocation10 + $0x58] sm:$0xf]
    %v3521 = vld [vmem:[#allocation10 + $0x5c] sm:$0xf]
    %v3522 = vld [vmem:[#allocation10 + $0x60] sm:$0xf]
    %v3523 = vld [vmem:[#allocation10 + $0x64] sm:$0xf]
    %v3524 = vld [vmem:[#allocation10 + $0x68] sm:$0xf]
    %v3525 = vld [vmem:[#allocation10 + $0x6c] sm:$0xf]
    %v3526 = vld [vmem:[#allocation10 + $0x70] sm:$0xf]
    %v3527 = vld [vmem:[#allocation10 + $0x74] sm:$0xf]
    %v3528 = vld [vmem:[#allocation10 + $0x78] sm:$0xf]
    %v3529 = vld [vmem:[#allocation10 + $0x7c] sm:$0xf]
    %v3531 = vlaneseq
    %v3532 = vshrl.u32 %v3531, 7
    %v3533 = vsub.s32 0, %v3532
    %v3534 = vrot.slane %v110, %v3533
    %v3568 = vunpack.c.l.b16 %v3498
    %v3569 = vunpack.c.l.b16 %v3499
    %v3570 = vunpack.c.l.b16 %v3500
    %v3571 = vunpack.c.l.b16 %v3501
    %v3572 = vunpack.c.l.b16 %v3502
    %v3573 = vunpack.c.l.b16 %v3503
    %v3574 = vunpack.c.l.b16 %v3504
    %v3575 = vunpack.c.l.b16 %v3505
    %v3576 = vunpack.c.l.b16 %v3506
    %v3577 = vunpack.c.l.b16 %v3507
    %v3578 = vunpack.c.l.b16 %v3508
    %v3579 = vunpack.c.l.b16 %v3509
    %v3580 = vunpack.c.l.b16 %v3510
    %v3581 = vunpack.c.l.b16 %v3511
    %v3582 = vunpack.c.l.b16 %v3512
    %v3583 = vunpack.c.l.b16 %v3513
    %v3584 = vunpack.c.l.b16 %v3514
    %v3585 = vunpack.c.l.b16 %v3515
    %v3586 = vunpack.c.l.b16 %v3516
    %v3587 = vunpack.c.l.b16 %v3517
    %v3588 = vunpack.c.l.b16 %v3518
    %v3589 = vunpack.c.l.b16 %v3519
    %v3590 = vunpack.c.l.b16 %v3520
    %v3591 = vunpack.c.l.b16 %v3521
    %v3592 = vunpack.c.l.b16 %v3522
    %v3593 = vunpack.c.l.b16 %v3523
    %v3594 = vunpack.c.l.b16 %v3524
    %v3595 = vunpack.c.l.b16 %v3525
    %v3596 = vunpack.c.l.b16 %v3526
    %v3597 = vunpack.c.l.b16 %v3527
    %v3598 = vunpack.c.l.b16 %v3528
    %v3599 = vunpack.c.l.b16 %v3529
    %v3600 = vpack.c.b16 %v3569, %v3568
    %v3601 = vpack.c.b16 %v3571, %v3570
    %v3602 = vpack.c.b16 %v3573, %v3572
    %v3603 = vpack.c.b16 %v3575, %v3574
    %v3604 = vpack.c.b16 %v3577, %v3576
    %v3605 = vpack.c.b16 %v3579, %v3578
    %v3606 = vpack.c.b16 %v3581, %v3580
    %v3607 = vpack.c.b16 %v3583, %v3582
    %v3608 = vpack.c.b16 %v3585, %v3584
    %v3609 = vpack.c.b16 %v3587, %v3586
    %v3610 = vpack.c.b16 %v3589, %v3588
    %v3611 = vpack.c.b16 %v3591, %v3590
    %v3612 = vpack.c.b16 %v3593, %v3592
    %v3613 = vpack.c.b16 %v3595, %v3594
    %v3614 = vpack.c.b16 %v3597, %v3596
    %v3615 = vpack.c.b16 %v3599, %v3598
    %3632 = vmatprep.subr.bf16.mxu0 0
    %3633 = vmatpush1.bf16.msra.mxu0 %v3607
    %3634 = vmatprep.subr.bf16.mxu0 0
    %3635 = vmatpush1.bf16.msra.mxu0 %v3606
    %3636 = vmatprep.subr.bf16.mxu0 0
    %3637 = vmatpush1.bf16.msra.mxu0 %v3605
    %3638 = vmatprep.subr.bf16.mxu0 0
    %3639 = vmatpush1.bf16.msra.mxu0 %v3604
    %3640 = vmatprep.subr.bf16.mxu0 0
    %3641 = vmatpush1.bf16.msra.mxu0 %v3603
    %3642 = vmatprep.subr.bf16.mxu0 0
    %3643 = vmatpush1.bf16.msra.mxu0 %v3602
    %3644 = vmatprep.subr.bf16.mxu0 0
    %3645 = vmatpush1.bf16.msra.mxu0 %v3601
    %3646 = vmatprep.subr.bf16.mxu0 0
    %3647 = vmatpush1.bf16.msra.mxu0 %v3600
    %3648 = vmatprep.subr.bf16.mxu0 0
    %3649 = vmatpush2.bf16.msra.mxu0 %v3615
    %3650 = vmatprep.subr.bf16.mxu0 0
    %3651 = vmatpush2.bf16.msra.mxu0 %v3614
    %3652 = vmatprep.subr.bf16.mxu0 0
    %3653 = vmatpush2.bf16.msra.mxu0 %v3613
    %3654 = vmatprep.subr.bf16.mxu0 0
    %3655 = vmatpush2.bf16.msra.mxu0 %v3612
    %3656 = vmatprep.subr.bf16.mxu0 0
    %3657 = vmatpush2.bf16.msra.mxu0 %v3611
    %3658 = vmatprep.subr.bf16.mxu0 0
    %3659 = vmatpush2.bf16.msra.mxu0 %v3610
    %3660 = vmatprep.subr.bf16.mxu0 0
    %3661 = vmatpush2.bf16.msra.mxu0 %v3609
    %3662 = vmatprep.subr.bf16.mxu0 0
    %3663 = vmatpush2.bf16.msra.mxu0 %v3608
    %3664 = vmatprep.mubr.bf16.mxu0 %v3495
    %3665 = vmatmul.mubr.bf16.gmra.mxu0 %v3494
    %v3666 = vpop.f32.mrf.mxu0
    %v3667 = vadd.f32 %v3534, %v3666
    %v3668 = vpop.f32.mrf.mxu0
    %v3669 = vpop.f32.mrf.mxu0
    %v3670 = vadd.f32 %v3534, %v3669
    %v3671 = vpop.f32.mrf.mxu0
    %3672 = vmatprep.mubr.bf16.mxu0 %v3497
    %3673 = vmatmul.mubr.bf16.gmra.mxu0 %v3496
    %v3674 = vpop.f32.mrf.mxu0
    %v3675 = vadd.f32 %v3534, %v3674
    %v3676 = vpop.f32.mrf.mxu0
    %v3677 = vpop.f32.mrf.mxu0
    %v3678 = vadd.f32 %v3534, %v3677
    %v3679 = vpop.f32.mrf.mxu0
    %3680 = vdwg.mxu0
    %v3681 = vadd.f32 %v3256, %v3667
    %v3682 = vadd.f32 %v3257, %v3670
    %v3683 = vadd.f32 %v3258, %v3675
    %v3684 = vadd.f32 %v3259, %v3678
    %3685 = vadd.xlane.f32.xlu0 %v3681
    %v3686 = vpop.xlane.xlu0 %3685
    %3687 = vadd.xlane.f32.xlu0 %v3682
    %v3688 = vpop.xlane.xlu0 %3687
    %3689 = vadd.xlane.f32.xlu0 %v3683
    %v3690 = vpop.xlane.xlu0 %3689
    %3691 = vadd.xlane.f32.xlu0 %v3684
    %v3692 = vpop.xlane.xlu0 %3691
    %v3693 = vmul.f32 %v3686, %v3203
    %v3694 = vmul.f32 %v3688, %v3203
    %v3695 = vmul.f32 %v3690, %v3203
    %v3696 = vmul.f32 %v3692, %v3203
    %v3697 = vsub.f32 %v3681, %v3693
    %v3698 = vsub.f32 %v3682, %v3694
    %v3699 = vsub.f32 %v3683, %v3695
    %v3700 = vsub.f32 %v3684, %v3696
    %v3701 = vmul.f32 %v3697, %v3697
    %v3702 = vmul.f32 %v3698, %v3698
    %v3703 = vmul.f32 %v3699, %v3699
    %v3704 = vmul.f32 %v3700, %v3700
    %3705 = vadd.xlane.f32.xlu0 %v3701
    %v3706 = vpop.xlane.xlu0 %3705
    %3707 = vadd.xlane.f32.xlu0 %v3702
    %v3708 = vpop.xlane.xlu0 %3707
    %3709 = vadd.xlane.f32.xlu0 %v3703
    %v3710 = vpop.xlane.xlu0 %3709
    %3711 = vadd.xlane.f32.xlu0 %v3704
    %v3712 = vpop.xlane.xlu0 %3711
    %v3713 = vmul.f32 %v3706, %v3203
    %v3714 = vmul.f32 %v3708, %v3203
    %v3715 = vmul.f32 %v3710, %v3203
    %v3716 = vmul.f32 %v3712, %v3203
    %v3717 = vadd.f32 %v3713, 1e-05
    %v3718 = vadd.f32 %v3714, 1e-05
    %v3719 = vadd.f32 %v3715, 1e-05
    %v3720 = vadd.f32 %v3716, 1e-05
    %v3721 = vrsqrt.pop %v3717
    %v3722 = vrsqrt.pop %v3718
    %v3723 = vrsqrt.pop %v3719
    %v3724 = vrsqrt.pop %v3720
    %v3725 = vmul.f32 %v3697, %v3721
    %v3726 = vmul.f32 %v3698, %v3722
    %v3727 = vmul.f32 %v3699, %v3723
    %v3728 = vmul.f32 %v3700, %v3724
    %v3730 = vlaneseq
    %v3731 = vshrl.u32 %v3730, 7
    %v3732 = vsub.s32 0, %v3731
    %v3733 = vrot.slane %v111, %v3732
    %v3735 = vmul.f32 %v3725, %v3733
    %v3736 = vmul.f32 %v3726, %v3733
    %v3737 = vmul.f32 %v3727, %v3733
    %v3738 = vmul.f32 %v3728, %v3733
    %v3740 = vlaneseq
    %v3741 = vshrl.u32 %v3740, 7
    %v3742 = vsub.s32 0, %v3741
    %v3743 = vrot.slane %v112, %v3742
    %v3745 = vadd.f32 %v3735, %v3743
    %v3746 = vadd.f32 %v3736, %v3743
    %v3747 = vadd.f32 %v3737, %v3743
    %v3748 = vadd.f32 %v3738, %v3743
    %3749 = vst [vmem:[#allocation13] sm:$0xff] %v3745
    %3750 = vst [vmem:[#allocation13 + $0x8] sm:$0xff] %v3746
    %3751 = vst [vmem:[#allocation13 + $0x10] sm:$0xff] %v3747
    %3752 = vst [vmem:[#allocation13 + $0x18] sm:$0xff] %v3748
    // Predicated region
    $region50: #{tpu_custom_call.1} parent=1 // pred_check
      _
    $region51: #{tpu_custom_call.1} parent=1 // pred_check_branch
      %3754 = sbr.rel (0) target = $region53
    $region52: #{tpu_custom_call.1} parent=1 // pred_region
      %s3756 = ssub.s32 512, 512
      %3757 = vsyncadd [#allocation4], %s3756
      %s3758 = sshll.u32 [#allocation13], 4
      %s3759 = int_to_ptr.vmem [resolvable:$true] %s3758
      %3764 = dma.vmem_to_hbm [thread:$0]  %s3759, 512, %s6, [#allocation4], 128, 128, 8
    $region53: #{tpu_custom_call.1} parent=1 // pred_fallthru
      _
    // Predicated region
    $region54: #{tpu_custom_call.1} parent=1 // pred_check
      _
    $region55: #{tpu_custom_call.1} parent=1 // pred_check_branch
      %3766 = sbr.rel (0) target = $region57
    $region56: #{tpu_custom_call.1} parent=1 // pred_region
      %3767 = dma.done [#allocation4], 512
    $region57: #{tpu_custom_call.1} parent=1 // pred_fallthru
      _
    %3768 = vsyncpa [#allocation3], 1
    %3769 = vsyncpa [#allocation6], 1
    %3770 = vsyncpa [#allocation9], 1
    %3771 = vsyncpa [#allocation12], 1
    %3772 = vsyncpa [#allocation4], 1

</llo_original>
